<compile_context>
chip_gen: v5e
topology: v5e:2x2
jax: 0.10.0
libtpu: 0.0.40
codegen_flags: <defaults>
</compile_context>

<pallas_src>
import functools

import jax
import jax.numpy as jnp
from jax.experimental import pallas as pl
from jax.experimental.pallas import tpu as pltpu

GN_GROUPS = 4
GN_EPS = 1e-5


# ----------------------------- kernel helpers --------------------------------

def _gn_silu(acc, bias, gamma, beta, gm, hw, eps):
    """GroupNorm (conv bias folded in) + SiLU on a channel-major (C, HW) f32 tile."""
    s = jnp.sum(acc, axis=1, keepdims=True)               # (C, 1)
    sq = jnp.sum(acc * acc, axis=1, keepdims=True)        # (C, 1)
    # fold the conv bias analytically into the statistics (no full-tile add)
    s_b = s + hw * bias
    sq_b = sq + 2.0 * bias * s + hw * (bias * bias)
    stats = jnp.concatenate([s_b, sq_b], axis=1)           # (C, 2)
    # gm is a (C, C) block matrix with 1/(HW*cg) inside each group block:
    # one tiny matmul broadcasts per-group mean / E[x^2] back to each channel.
    gstats = jnp.dot(gm, stats, preferred_element_type=jnp.float32)
    mean = gstats[:, 0:1]
    var = jnp.maximum(gstats[:, 1:2] - mean * mean, 0.0)   # clamp f32 cancellation
    inv = jax.lax.rsqrt(var + eps)
    scale = gamma * inv
    shift = beta + (bias - mean) * scale
    y = acc * scale + shift
    return y * jax.nn.sigmoid(y)                            # SiLU


def _stage_kernel(xcols_ref, w1_ref, w2_ref, gm_ref, col_ref, vec_ref, o_ref,
                  *, Ho, Wo, eps):
    # xcols_ref: (1, 6, Cin, (Ho+1)*Wo) bf16 -- 6 phase/column slabs of the
    #            zero-padded input; every stride-2 tap window is a contiguous
    #            lane slice of one slab (row offset handled by the slice).
    # w1_ref   : (9, 2*Cout, Cin) bf16  (main conv | residual conv stacked on M)
    # w2_ref   : (9, Cout, Cout) bf16
    # gm_ref   : (Cout, Cout) f32 group-averaging matrix
    # col_ref  : (1, Ho*Wo) int32 flattened column index (p % Wo)
    # vec_ref  : (Cout, 7) f32  columns = [b1, g1, be1, b2, g2, be2, br]
    # o_ref    : (1, Cout, Ho*Wo) bf16  -- lane-dense NCHW output
    P = Ho * Wo
    Cout = o_ref.shape[1]
    two_cout = w1_ref.shape[1]

    # ---- stride-2 conv (main + residual fused), per-tap accumulated MXU dots
    acc1 = jnp.zeros((two_cout, P), jnp.float32)
    for dy in range(3):
        off = (dy // 2) * Wo                         # row offset in the slab
        for dx in range(3):
            src = (dy % 2) * 3 + dx                  # which slab
            win = xcols_ref[0, src, :, off:off + P]  # (Cin, P) bf16, static slice
            acc1 = acc1 + jnp.dot(w1_ref[dy * 3 + dx], win,
                                  preferred_element_type=jnp.float32)

    main = acc1[:Cout, :]
    res = acc1[Cout:, :]

    gm = gm_ref[...]
    b1, g1, be1 = vec_ref[:, 0:1], vec_ref[:, 1:2], vec_ref[:, 2:3]
    b2, g2, be2 = vec_ref[:, 3:4], vec_ref[:, 4:5], vec_ref[:, 5:6]
    br = vec_ref[:, 6:7]

    y1 = _gn_silu(main, b1, g1, be1, gm, P, eps)
    y1b = y1.astype(jnp.bfloat16)

    # ---- stride-1 3x3 conv (pad=1) on the resident tile: masked lane shifts.
    # Zero padding is implicit: every shifted position whose source falls
    # outside the image (including roll wrap-around) is masked to zero.
    pidx = jax.lax.broadcasted_iota(jnp.int32, (1, P), 1)   # flattened position
    pcol = col_ref[...]                                     # column index p % Wo

    acc2 = jnp.zeros((Cout, P), jnp.float32)
    for dy in range(3):
        for dx in range(3):
            s = (dy - 1) * Wo + (dx - 1)
            v = y1b if s == 0 else jnp.roll(y1b, -s, axis=1)
            conds = []
            if dy == 0:
                conds.append(pidx >= Wo)                    # source row >= 0
            elif dy == 2:
                conds.append(pidx < (Ho - 1) * Wo)          # source row < Ho
            if dx == 0:
                conds.append(pcol >= 1)                     # source col >= 0
            elif dx == 2:
                conds.append(pcol <= Wo - 2)                # source col < Wo
            if conds:
                m = conds[0]
                for c in conds[1:]:
                    m = m & c
                v = jnp.where(m, v, jnp.zeros_like(v))
            acc2 = acc2 + jnp.dot(w2_ref[dy * 3 + dx], v,
                                  preferred_element_type=jnp.float32)

    y2 = _gn_silu(acc2, b2, g2, be2, gm, P, eps)

    # residual add (residual conv bias folded in here) + bf16 lane-dense store
    o_ref[0] = (y2 + res + br).astype(o_ref.dtype)


# ------------------------------ stage wrapper --------------------------------

def _group_mean_matrix(cout, hw, groups):
    cg = cout // groups
    blk = jnp.kron(jnp.eye(groups, dtype=jnp.float32),
                   jnp.ones((cg, cg), jnp.float32))
    return blk / jnp.float32(hw * cg)


def stage_forward(x_nchw, p, groups=GN_GROUPS, eps=GN_EPS):
    """x_nchw: (N, Cin, H, W) f32/bf16.  Returns (N, Cout, Ho, Wo) bf16."""
    N, Cin, H, W = x_nchw.shape
    Cout = p["w1"].shape[-1]
    assert H % 2 == 0 and W % 2 == 0
    assert Cout % groups == 0
    Ho, Wo = H // 2, W // 2
    Hp = Ho + 1
    P = Ho * Wo
    PW = Hp * Wo

    # 6 phase/column slabs of the padded input (~1.5x the raw input bytes):
    # slab (py, dx) holds x_pad[:, :, py::2, dx%2::2][..., dx//2 : dx//2+Wo]
    # flattened, so every stride-2 tap window is a contiguous lane slice.
    xb = x_nchw.astype(jnp.bfloat16)
    xpad = jnp.pad(xb, ((0, 0), (0, 0), (1, 1), (1, 1)))
    slabs = []
    for py in (0, 1):
        for dx in range(3):
            px, ox0 = dx % 2, dx // 2
            ph = xpad[:, :, py::2, px::2]                  # (N, Cin, Hp, Wp)
            slabs.append(ph[:, :, :, ox0:ox0 + Wo].reshape(N, Cin, PW))
    xcols = jnp.stack(slabs, axis=1)                        # (N, 6, Cin, PW)

    # per-tap, channel-major weights: (9, Cout_out, Cin_in)
    w1 = jnp.transpose(p["w1"], (0, 1, 3, 2)).reshape(9, Cout, Cin)
    wr = jnp.transpose(p["wr"], (0, 1, 3, 2)).reshape(9, Cout, Cin)
    w1r = jnp.concatenate([w1, wr], axis=1).astype(jnp.bfloat16)   # (9, 2Cout, Cin)
    w2 = jnp.transpose(p["w2"], (0, 1, 3, 2)).reshape(9, Cout, Cout)
    w2 = w2.astype(jnp.bfloat16)

    gm = _group_mean_matrix(Cout, P, groups)
    colidx = (jnp.arange(P, dtype=jnp.int32) % Wo).reshape(1, P)
    vecs = jnp.stack([p["b1"], p["g1"], p["be1"],
                      p["b2"], p["g2"], p["be2"], p["br"]],
                     axis=1).astype(jnp.float32)            # (Cout, 7)

    kern = functools.partial(_stage_kernel, Ho=Ho, Wo=Wo, eps=eps)
    out = pl.pallas_call(
        kern,
        out_shape=jax.ShapeDtypeStruct((N, Cout, P), jnp.bfloat16),
        grid=(N,),
        in_specs=[
            pl.BlockSpec((1, 6, Cin, PW), lambda n: (n, 0, 0, 0)),
            pl.BlockSpec((9, 2 * Cout, Cin), lambda n: (0, 0, 0)),
            pl.BlockSpec((9, Cout, Cout), lambda n: (0, 0, 0)),
            pl.BlockSpec((Cout, Cout), lambda n: (0, 0)),
            pl.BlockSpec((1, P), lambda n: (0, 0)),
            pl.BlockSpec((Cout, 7), lambda n: (0, 0)),
        ],
        out_specs=pl.BlockSpec((1, Cout, P), lambda n: (n, 0, 0)),
        compiler_params=pltpu.CompilerParams(
            dimension_semantics=("parallel",),
            vmem_limit_bytes=48 * 1024 * 1024),
    )(xcols, w1r, w2, gm, colidx, vecs)

    return out.reshape(N, Cout, Ho, Wo)                     # free NCHW reshape


# ----------------------------- Extractor forward -----------------------------

def extractor_forward(x_nchw, params):
    x = x_nchw
    features = []
    for p in params:
        x = stage_forward(x, p)       # bf16 NCHW feature, feeds the next stage
        features.append(x)
    return features


# ----------------------- deterministic parameter setup -----------------------

def init_params(key, channels):
    params = []
    for i in range(len(channels) - 1):
        cin, cout = channels[i], channels[i + 1]
        ks = jax.random.split(jax.random.fold_in(key, i), 10)

        def w_init(k, ci, co):
            bound = 1.0 / jnp.sqrt(ci * 9.0)
            return jax.random.uniform(k, (3, 3, ci, co), jnp.float32,
                                      -bound, bound)

        params.append(dict(
            w1=w_init(ks[0], cin, cout),
            b1=0.1 * jax.random.normal(ks[1], (cout,), jnp.float32),
            g1=1.0 + 0.05 * jax.random.normal(ks[2], (cout,), jnp.float32),
            be1=0.05 * jax.random.normal(ks[3], (cout,), jnp.float32),
            w2=w_init(ks[4], cout, cout),
            b2=0.1 * jax.random.normal(ks[5], (cout,), jnp.float32),
            g2=1.0 + 0.05 * jax.random.normal(ks[6], (cout,), jnp.float32),
            be2=0.05 * jax.random.normal(ks[7], (cout,), jnp.float32),
            wr=w_init(ks[8], cin, cout),
            br=0.1 * jax.random.normal(ks[9], (cout,), jnp.float32),
        ))
    return params


# ------------------------------ pure-JAX reference ---------------------------

def _conv_ref(x, w, b, stride):
    y = jax.lax.conv_general_dilated(
        x, w, (stride, stride), ((1, 1), (1, 1)),
        dimension_numbers=("NCHW", "HWIO", "NCHW"))
    return y + b[None, :, None, None]


def _gn_ref(x, gamma, beta, groups=GN_GROUPS, eps=GN_EPS):
    N, C, H, W = x.shape
    xg = x.reshape(N, groups, C // groups, H, W)
    mean = xg.mean(axis=(2, 3, 4), keepdims=True)
    var = jnp.mean((xg - mean) ** 2, axis=(2, 3, 4), keepdims=True)
    xn = ((xg - mean) * jax.lax.rsqrt(var + eps)).reshape(N, C, H, W)
    return xn * gamma[None, :, None, None] + beta[None, :, None, None]


def _silu(x):
    return x * jax.nn.sigmoid(x)


def extractor_ref(x_nchw, params):
    x = x_nchw
    feats = []
    for p in params:
        y = _silu(_gn_ref(_conv_ref(x, p["w1"], p["b1"], 2), p["g1"], p["be1"]))
        y = _silu(_gn_ref(_conv_ref(y, p["w2"], p["b2"], 1), p["g2"], p["be2"]))
        y = y + _conv_ref(x, p["wr"], p["br"], 2)
        x = y
        feats.append(y)
    return feats


# ------------------------------------ main -----------------------------------

if __name__ == "__main__":
    channels = [4, 8, 16]           # 2 extractor stages
    N, H, W = 2, 16, 16
    key = jax.random.PRNGKey(0)
    kx, kp = jax.random.split(key)

    x = jax.random.normal(kx, (N, channels[0], H, W), jnp.float32)  # NCHW
    params = init_params(kp, channels)

    fwd = jax.jit(extractor_forward)
    feats = fwd(x, params)
    feats = [jax.block_until_ready(f) for f in feats]

    feats_ref = extractor_ref(x, params)
    # Tolerance relaxed vs a pure-f32 implementation: conv operands and the
    # inter-stage feature maps are bf16 (f32 accumulation, f32 GN statistics).
    for f, fr in zip(feats, feats_ref):
        assert f.shape == fr.shape, (f.shape, fr.shape)
        f32 = f.astype(jnp.float32)
        err = float(jnp.max(jnp.abs(f32 - fr)))
        assert jnp.allclose(f32, fr, rtol=1e-1, atol=1e-1), err

    print("KERNEL_OK")
</pallas_src>

<mosaic_0001>
module attributes {stable_mosaic.version = 11 : i64} {
  func.func @_stage_kernel(%arg0: i32, %arg1: memref<1x6x4x72xbf16, #tpu.memory_space<vmem>>, %arg2: memref<9x16x4xbf16, #tpu.memory_space<vmem>>, %arg3: memref<9x8x8xbf16, #tpu.memory_space<vmem>>, %arg4: memref<8x8xf32, #tpu.memory_space<vmem>>, %arg5: memref<1x64xi32, #tpu.memory_space<vmem>>, %arg6: memref<8x7xf32, #tpu.memory_space<vmem>>, %arg7: memref<1x8x64xbf16, #tpu.memory_space<vmem>>) attributes {dimension_semantics = [#tpu.dimension_semantics<parallel>], iteration_bounds = array<i64: 2>, scalar_prefetch = 0 : i64, scratch_operands = 0 : i64, tpu.core_type = #tpu.core_type<tc>, window_params = [{transform_indices = @transform_0, window_bounds = array<i64: 1, 6, 4, 72>}, {pipeline_mode = #tpu.pipeline_mode<synchronous>, transform_indices = @transform_1, window_bounds = array<i64: 9, 16, 4>}, {pipeline_mode = #tpu.pipeline_mode<synchronous>, transform_indices = @transform_2, window_bounds = array<i64: 9, 8, 8>}, {pipeline_mode = #tpu.pipeline_mode<synchronous>, transform_indices = @transform_3, window_bounds = array<i64: 8, 8>}, {pipeline_mode = #tpu.pipeline_mode<synchronous>, transform_indices = @transform_4, window_bounds = array<i64: 1, 64>}, {pipeline_mode = #tpu.pipeline_mode<synchronous>, transform_indices = @transform_5, window_bounds = array<i64: 8, 7>}, {transform_indices = @transform_6, window_bounds = array<i64: 1, 8, 64>}]} {
    %cst = arith.constant 0.000000e+00 : f32
    %0 = vector.broadcast %cst : f32 to vector<16x64xf32>
    %c0 = arith.constant 0 : index
    %c0_0 = arith.constant 0 : index
    %c0_1 = arith.constant 0 : index
    %c0_2 = arith.constant 0 : index
    %1 = vector.load %arg1[%c0, %c0_0, %c0_1, %c0_2] : memref<1x6x4x72xbf16, #tpu.memory_space<vmem>>, vector<1x1x4x64xbf16>
    %2 = vector.shape_cast %1 : vector<1x1x4x64xbf16> to vector<4x64xbf16>
    %c0_3 = arith.constant 0 : index
    %c0_4 = arith.constant 0 : index
    %c0_5 = arith.constant 0 : index
    %3 = vector.load %arg2[%c0_3, %c0_4, %c0_5] : memref<9x16x4xbf16, #tpu.memory_space<vmem>>, vector<1x16x4xbf16>
    %4 = vector.shape_cast %3 : vector<1x16x4xbf16> to vector<16x4xbf16>
    %cst_6 = arith.constant dense<0.000000e+00> : vector<16x64xf32>
    %5 = tpu.matmul %4, %2, %cst_6 {dimension_numbers = #tpu.dot_dimension_numbers<[1], [0], [0], [1], [0, 0, 1, 1], [], []>} : vector<16x4xbf16>, vector<4x64xbf16>, vector<16x64xf32> -> vector<16x64xf32>
    %6 = arith.addf %0, %5 : vector<16x64xf32>
    %c0_7 = arith.constant 0 : index
    %c1 = arith.constant 1 : index
    %c0_8 = arith.constant 0 : index
    %c0_9 = arith.constant 0 : index
    %7 = vector.load %arg1[%c0_7, %c1, %c0_8, %c0_9] : memref<1x6x4x72xbf16, #tpu.memory_space<vmem>>, vector<1x1x4x64xbf16>
    %8 = vector.shape_cast %7 : vector<1x1x4x64xbf16> to vector<4x64xbf16>
    %c1_10 = arith.constant 1 : index
    %c0_11 = arith.constant 0 : index
    %c0_12 = arith.constant 0 : index
    %9 = vector.load %arg2[%c1_10, %c0_11, %c0_12] : memref<9x16x4xbf16, #tpu.memory_space<vmem>>, vector<1x16x4xbf16>
    %10 = vector.shape_cast %9 : vector<1x16x4xbf16> to vector<16x4xbf16>
    %cst_13 = arith.constant dense<0.000000e+00> : vector<16x64xf32>
    %11 = tpu.matmul %10, %8, %cst_13 {dimension_numbers = #tpu.dot_dimension_numbers<[1], [0], [0], [1], [0, 0, 1, 1], [], []>} : vector<16x4xbf16>, vector<4x64xbf16>, vector<16x64xf32> -> vector<16x64xf32>
    %12 = arith.addf %6, %11 : vector<16x64xf32>
    %c0_14 = arith.constant 0 : index
    %c2 = arith.constant 2 : index
    %c0_15 = arith.constant 0 : index
    %c0_16 = arith.constant 0 : index
    %13 = vector.load %arg1[%c0_14, %c2, %c0_15, %c0_16] : memref<1x6x4x72xbf16, #tpu.memory_space<vmem>>, vector<1x1x4x64xbf16>
    %14 = vector.shape_cast %13 : vector<1x1x4x64xbf16> to vector<4x64xbf16>
    %c2_17 = arith.constant 2 : index
    %c0_18 = arith.constant 0 : index
    %c0_19 = arith.constant 0 : index
    %15 = vector.load %arg2[%c2_17, %c0_18, %c0_19] : memref<9x16x4xbf16, #tpu.memory_space<vmem>>, vector<1x16x4xbf16>
    %16 = vector.shape_cast %15 : vector<1x16x4xbf16> to vector<16x4xbf16>
    %cst_20 = arith.constant dense<0.000000e+00> : vector<16x64xf32>
    %17 = tpu.matmul %16, %14, %cst_20 {dimension_numbers = #tpu.dot_dimension_numbers<[1], [0], [0], [1], [0, 0, 1, 1], [], []>} : vector<16x4xbf16>, vector<4x64xbf16>, vector<16x64xf32> -> vector<16x64xf32>
    %18 = arith.addf %12, %17 : vector<16x64xf32>
    %c0_21 = arith.constant 0 : index
    %c3 = arith.constant 3 : index
    %c0_22 = arith.constant 0 : index
    %c0_23 = arith.constant 0 : index
    %19 = vector.load %arg1[%c0_21, %c3, %c0_22, %c0_23] : memref<1x6x4x72xbf16, #tpu.memory_space<vmem>>, vector<1x1x4x64xbf16>
    %20 = vector.shape_cast %19 : vector<1x1x4x64xbf16> to vector<4x64xbf16>
    %c3_24 = arith.constant 3 : index
    %c0_25 = arith.constant 0 : index
    %c0_26 = arith.constant 0 : index
    %21 = vector.load %arg2[%c3_24, %c0_25, %c0_26] : memref<9x16x4xbf16, #tpu.memory_space<vmem>>, vector<1x16x4xbf16>
    %22 = vector.shape_cast %21 : vector<1x16x4xbf16> to vector<16x4xbf16>
    %cst_27 = arith.constant dense<0.000000e+00> : vector<16x64xf32>
    %23 = tpu.matmul %22, %20, %cst_27 {dimension_numbers = #tpu.dot_dimension_numbers<[1], [0], [0], [1], [0, 0, 1, 1], [], []>} : vector<16x4xbf16>, vector<4x64xbf16>, vector<16x64xf32> -> vector<16x64xf32>
    %24 = arith.addf %18, %23 : vector<16x64xf32>
    %c0_28 = arith.constant 0 : index
    %c4 = arith.constant 4 : index
    %c0_29 = arith.constant 0 : index
    %c0_30 = arith.constant 0 : index
    %25 = vector.load %arg1[%c0_28, %c4, %c0_29, %c0_30] : memref<1x6x4x72xbf16, #tpu.memory_space<vmem>>, vector<1x1x4x64xbf16>
    %26 = vector.shape_cast %25 : vector<1x1x4x64xbf16> to vector<4x64xbf16>
    %c4_31 = arith.constant 4 : index
    %c0_32 = arith.constant 0 : index
    %c0_33 = arith.constant 0 : index
    %27 = vector.load %arg2[%c4_31, %c0_32, %c0_33] : memref<9x16x4xbf16, #tpu.memory_space<vmem>>, vector<1x16x4xbf16>
    %28 = vector.shape_cast %27 : vector<1x16x4xbf16> to vector<16x4xbf16>
    %cst_34 = arith.constant dense<0.000000e+00> : vector<16x64xf32>
    %29 = tpu.matmul %28, %26, %cst_34 {dimension_numbers = #tpu.dot_dimension_numbers<[1], [0], [0], [1], [0, 0, 1, 1], [], []>} : vector<16x4xbf16>, vector<4x64xbf16>, vector<16x64xf32> -> vector<16x64xf32>
    %30 = arith.addf %24, %29 : vector<16x64xf32>
    %c0_35 = arith.constant 0 : index
    %c5 = arith.constant 5 : index
    %c0_36 = arith.constant 0 : index
    %c0_37 = arith.constant 0 : index
    %31 = vector.load %arg1[%c0_35, %c5, %c0_36, %c0_37] : memref<1x6x4x72xbf16, #tpu.memory_space<vmem>>, vector<1x1x4x64xbf16>
    %32 = vector.shape_cast %31 : vector<1x1x4x64xbf16> to vector<4x64xbf16>
    %c5_38 = arith.constant 5 : index
    %c0_39 = arith.constant 0 : index
    %c0_40 = arith.constant 0 : index
    %33 = vector.load %arg2[%c5_38, %c0_39, %c0_40] : memref<9x16x4xbf16, #tpu.memory_space<vmem>>, vector<1x16x4xbf16>
    %34 = vector.shape_cast %33 : vector<1x16x4xbf16> to vector<16x4xbf16>
    %cst_41 = arith.constant dense<0.000000e+00> : vector<16x64xf32>
    %35 = tpu.matmul %34, %32, %cst_41 {dimension_numbers = #tpu.dot_dimension_numbers<[1], [0], [0], [1], [0, 0, 1, 1], [], []>} : vector<16x4xbf16>, vector<4x64xbf16>, vector<16x64xf32> -> vector<16x64xf32>
    %36 = arith.addf %30, %35 : vector<16x64xf32>
    %c0_42 = arith.constant 0 : index
    %c0_43 = arith.constant 0 : index
    %c0_44 = arith.constant 0 : index
    %c8 = arith.constant 8 : index
    %37 = vector.load %arg1[%c0_42, %c0_43, %c0_44, %c8] : memref<1x6x4x72xbf16, #tpu.memory_space<vmem>>, vector<1x1x4x64xbf16>
    %38 = vector.shape_cast %37 : vector<1x1x4x64xbf16> to vector<4x64xbf16>
    %c6 = arith.constant 6 : index
    %c0_45 = arith.constant 0 : index
    %c0_46 = arith.constant 0 : index
    %39 = vector.load %arg2[%c6, %c0_45, %c0_46] : memref<9x16x4xbf16, #tpu.memory_space<vmem>>, vector<1x16x4xbf16>
    %40 = vector.shape_cast %39 : vector<1x16x4xbf16> to vector<16x4xbf16>
    %cst_47 = arith.constant dense<0.000000e+00> : vector<16x64xf32>
    %41 = tpu.matmul %40, %38, %cst_47 {dimension_numbers = #tpu.dot_dimension_numbers<[1], [0], [0], [1], [0, 0, 1, 1], [], []>} : vector<16x4xbf16>, vector<4x64xbf16>, vector<16x64xf32> -> vector<16x64xf32>
    %42 = arith.addf %36, %41 : vector<16x64xf32>
    %c0_48 = arith.constant 0 : index
    %c1_49 = arith.constant 1 : index
    %c0_50 = arith.constant 0 : index
    %c8_51 = arith.constant 8 : index
    %43 = vector.load %arg1[%c0_48, %c1_49, %c0_50, %c8_51] : memref<1x6x4x72xbf16, #tpu.memory_space<vmem>>, vector<1x1x4x64xbf16>
    %44 = vector.shape_cast %43 : vector<1x1x4x64xbf16> to vector<4x64xbf16>
    %c7 = arith.constant 7 : index
    %c0_52 = arith.constant 0 : index
    %c0_53 = arith.constant 0 : index
    %45 = vector.load %arg2[%c7, %c0_52, %c0_53] : memref<9x16x4xbf16, #tpu.memory_space<vmem>>, vector<1x16x4xbf16>
    %46 = vector.shape_cast %45 : vector<1x16x4xbf16> to vector<16x4xbf16>
    %cst_54 = arith.constant dense<0.000000e+00> : vector<16x64xf32>
    %47 = tpu.matmul %46, %44, %cst_54 {dimension_numbers = #tpu.dot_dimension_numbers<[1], [0], [0], [1], [0, 0, 1, 1], [], []>} : vector<16x4xbf16>, vector<4x64xbf16>, vector<16x64xf32> -> vector<16x64xf32>
    %48 = arith.addf %42, %47 : vector<16x64xf32>
    %c0_55 = arith.constant 0 : index
    %c2_56 = arith.constant 2 : index
    %c0_57 = arith.constant 0 : index
    %c8_58 = arith.constant 8 : index
    %49 = vector.load %arg1[%c0_55, %c2_56, %c0_57, %c8_58] : memref<1x6x4x72xbf16, #tpu.memory_space<vmem>>, vector<1x1x4x64xbf16>
    %50 = vector.shape_cast %49 : vector<1x1x4x64xbf16> to vector<4x64xbf16>
    %c8_59 = arith.constant 8 : index
    %c0_60 = arith.constant 0 : index
    %c0_61 = arith.constant 0 : index
    %51 = vector.load %arg2[%c8_59, %c0_60, %c0_61] : memref<9x16x4xbf16, #tpu.memory_space<vmem>>, vector<1x16x4xbf16>
    %52 = vector.shape_cast %51 : vector<1x16x4xbf16> to vector<16x4xbf16>
    %cst_62 = arith.constant dense<0.000000e+00> : vector<16x64xf32>
    %53 = tpu.matmul %52, %50, %cst_62 {dimension_numbers = #tpu.dot_dimension_numbers<[1], [0], [0], [1], [0, 0, 1, 1], [], []>} : vector<16x4xbf16>, vector<4x64xbf16>, vector<16x64xf32> -> vector<16x64xf32>
    %54 = arith.addf %48, %53 : vector<16x64xf32>
    %55 = vector.extract_strided_slice %54 {offsets = [0, 0], sizes = [8, 64], strides = [1, 1]} : vector<16x64xf32> to vector<8x64xf32>
    %56 = vector.extract_strided_slice %54 {offsets = [8, 0], sizes = [8, 64], strides = [1, 1]} : vector<16x64xf32> to vector<8x64xf32>
    %c0_63 = arith.constant 0 : index
    %c0_64 = arith.constant 0 : index
    %57 = vector.load %arg4[%c0_63, %c0_64] : memref<8x8xf32, #tpu.memory_space<vmem>>, vector<8x8xf32>
    %c0_65 = arith.constant 0 : index
    %c0_66 = arith.constant 0 : index
    %58 = vector.load %arg6[%c0_65, %c0_66] : memref<8x7xf32, #tpu.memory_space<vmem>>, vector<8x1xf32>
    %c0_67 = arith.constant 0 : index
    %c1_68 = arith.constant 1 : index
    %59 = vector.load %arg6[%c0_67, %c1_68] : memref<8x7xf32, #tpu.memory_space<vmem>>, vector<8x1xf32>
    %c0_69 = arith.constant 0 : index
    %c2_70 = arith.constant 2 : index
    %60 = vector.load %arg6[%c0_69, %c2_70] : memref<8x7xf32, #tpu.memory_space<vmem>>, vector<8x1xf32>
    %c0_71 = arith.constant 0 : index
    %c3_72 = arith.constant 3 : index
    %61 = vector.load %arg6[%c0_71, %c3_72] : memref<8x7xf32, #tpu.memory_space<vmem>>, vector<8x1xf32>
    %c0_73 = arith.constant 0 : index
    %c4_74 = arith.constant 4 : index
    %62 = vector.load %arg6[%c0_73, %c4_74] : memref<8x7xf32, #tpu.memory_space<vmem>>, vector<8x1xf32>
    %c0_75 = arith.constant 0 : index
    %c5_76 = arith.constant 5 : index
    %63 = vector.load %arg6[%c0_75, %c5_76] : memref<8x7xf32, #tpu.memory_space<vmem>>, vector<8x1xf32>
    %c0_77 = arith.constant 0 : index
    %c6_78 = arith.constant 6 : index
    %64 = vector.load %arg6[%c0_77, %c6_78] : memref<8x7xf32, #tpu.memory_space<vmem>>, vector<8x1xf32>
    %cst_79 = arith.constant dense<0.000000e+00> : vector<8xf32>
    %65 = vector.multi_reduction <add>, %55, %cst_79 [1] : vector<8x64xf32> to vector<8xf32>
    %66 = vector.shape_cast %65 : vector<8xf32> to vector<8x1xf32>
    %67 = arith.mulf %55, %55 : vector<8x64xf32>
    %cst_80 = arith.constant dense<0.000000e+00> : vector<8xf32>
    %68 = vector.multi_reduction <add>, %67, %cst_80 [1] : vector<8x64xf32> to vector<8xf32>
    %69 = vector.shape_cast %68 : vector<8xf32> to vector<8x1xf32>
    %cst_81 = arith.constant 6.400000e+01 : f32
    %70 = vector.broadcast %cst_81 : f32 to vector<8x1xf32>
    %71 = arith.mulf %70, %58 : vector<8x1xf32>
    %72 = arith.addf %66, %71 : vector<8x1xf32>
    %cst_82 = arith.constant 2.000000e+00 : f32
    %73 = vector.broadcast %cst_82 : f32 to vector<8x1xf32>
    %74 = arith.mulf %73, %58 : vector<8x1xf32>
    %75 = arith.mulf %74, %66 : vector<8x1xf32>
    %76 = arith.addf %69, %75 : vector<8x1xf32>
    %77 = arith.mulf %58, %58 : vector<8x1xf32>
    %cst_83 = arith.constant 6.400000e+01 : f32
    %78 = vector.broadcast %cst_83 : f32 to vector<8x1xf32>
    %79 = arith.mulf %78, %77 : vector<8x1xf32>
    %80 = arith.addf %76, %79 : vector<8x1xf32>
    %81 = tpu.concatenate %72, %80 in 1 : vector<8x1xf32>, vector<8x1xf32> -> vector<8x2xf32>
    %cst_84 = arith.constant dense<0.000000e+00> : vector<8x2xf32>
    %82 = tpu.matmul %57, %81, %cst_84 {dimension_numbers = #tpu.dot_dimension_numbers<[1], [0], [0], [1], [0, 0, 1, 1], [], []>} : vector<8x8xf32>, vector<8x2xf32>, vector<8x2xf32> -> vector<8x2xf32>
    %83 = vector.extract_strided_slice %82 {offsets = [0, 0], sizes = [8, 1], strides = [1, 1]} : vector<8x2xf32> to vector<8x1xf32>
    %84 = vector.extract_strided_slice %82 {offsets = [0, 1], sizes = [8, 1], strides = [1, 1]} : vector<8x2xf32> to vector<8x1xf32>
    %85 = arith.mulf %83, %83 : vector<8x1xf32>
    %86 = arith.subf %84, %85 : vector<8x1xf32>
    %cst_85 = arith.constant 0.000000e+00 : f32
    %87 = vector.broadcast %cst_85 : f32 to vector<8x1xf32>
    %88 = arith.maximumf %86, %87 : vector<8x1xf32>
    %cst_86 = arith.constant 9.99999974E-6 : f32
    %89 = vector.broadcast %cst_86 : f32 to vector<8x1xf32>
    %90 = arith.addf %88, %89 : vector<8x1xf32>
    %91 = math.rsqrt %90 : vector<8x1xf32>
    %92 = arith.mulf %59, %91 : vector<8x1xf32>
    %93 = arith.subf %58, %83 : vector<8x1xf32>
    %94 = arith.mulf %93, %92 : vector<8x1xf32>
    %95 = arith.addf %60, %94 : vector<8x1xf32>
    %96 = vector.broadcast %92 : vector<8x1xf32> to vector<8x64xf32>
    %97 = arith.mulf %55, %96 : vector<8x64xf32>
    %98 = vector.broadcast %95 : vector<8x1xf32> to vector<8x64xf32>
    %99 = arith.addf %97, %98 : vector<8x64xf32>
    %100 = arith.negf %99 : vector<8x64xf32>
    %101 = math.exp %100 : vector<8x64xf32>
    %cst_87 = arith.constant 1.000000e+00 : f32
    %102 = vector.broadcast %cst_87 : f32 to vector<8x64xf32>
    %103 = arith.addf %102, %101 : vector<8x64xf32>
    %104 = arith.divf %102, %103 : vector<8x64xf32>
    %105 = arith.mulf %99, %104 : vector<8x64xf32>
    %106 = arith.truncf %105 : vector<8x64xf32> to vector<8x64xbf16>
    %107 = tpu.iota {dimensions = array<i32: 1>} : vector<1x64xi32>
    %c0_88 = arith.constant 0 : index
    %c0_89 = arith.constant 0 : index
    %108 = vector.load %arg5[%c0_88, %c0_89] : memref<1x64xi32, #tpu.memory_space<vmem>>, vector<1x64xi32>
    %cst_90 = arith.constant 0.000000e+00 : f32
    %109 = vector.broadcast %cst_90 : f32 to vector<8x64xf32>
    %110 = vector.extract_strided_slice %106 {offsets = [0, 55], sizes = [8, 9], strides = [1, 1]} : vector<8x64xbf16> to vector<8x9xbf16>
    %111 = vector.extract_strided_slice %106 {offsets = [0, 0], sizes = [8, 55], strides = [1, 1]} : vector<8x64xbf16> to vector<8x55xbf16>
    %112 = tpu.concatenate %110, %111 in 1 : vector<8x9xbf16>, vector<8x55xbf16> -> vector<8x64xbf16>
    %c8_i32 = arith.constant 8 : i32
    %113 = vector.broadcast %c8_i32 : i32 to vector<1x64xi32>
    %114 = arith.cmpi sge, %107, %113 : vector<1x64xi32>
    %c1_i32 = arith.constant 1 : i32
    %115 = vector.broadcast %c1_i32 : i32 to vector<1x64xi32>
    %116 = arith.cmpi sge, %108, %115 : vector<1x64xi32>
    %117 = arith.andi %114, %116 : vector<1x64xi1>
    %cst_91 = arith.constant 0.000000e+00 : bf16
    %118 = vector.broadcast %cst_91 : bf16 to vector<8x64xbf16>
    %119 = vector.shape_cast %117 : vector<1x64xi1> to vector<1x64xi1>
    %120 = vector.broadcast %119 : vector<1x64xi1> to vector<8x64xi1>
    %121 = arith.select %120, %112, %118 : vector<8x64xi1>, vector<8x64xbf16>
    %c0_92 = arith.constant 0 : index
    %c0_93 = arith.constant 0 : index
    %c0_94 = arith.constant 0 : index
    %122 = vector.load %arg3[%c0_92, %c0_93, %c0_94] : memref<9x8x8xbf16, #tpu.memory_space<vmem>>, vector<1x8x8xbf16>
    %123 = vector.shape_cast %122 : vector<1x8x8xbf16> to vector<8x8xbf16>
    %cst_95 = arith.constant dense<0.000000e+00> : vector<8x64xf32>
    %124 = tpu.matmul %123, %121, %cst_95 {dimension_numbers = #tpu.dot_dimension_numbers<[1], [0], [0], [1], [0, 0, 1, 1], [], []>} : vector<8x8xbf16>, vector<8x64xbf16>, vector<8x64xf32> -> vector<8x64xf32>
    %125 = arith.addf %109, %124 : vector<8x64xf32>
    %126 = vector.extract_strided_slice %106 {offsets = [0, 56], sizes = [8, 8], strides = [1, 1]} : vector<8x64xbf16> to vector<8x8xbf16>
    %127 = vector.extract_strided_slice %106 {offsets = [0, 0], sizes = [8, 56], strides = [1, 1]} : vector<8x64xbf16> to vector<8x56xbf16>
    %128 = tpu.concatenate %126, %127 in 1 : vector<8x8xbf16>, vector<8x56xbf16> -> vector<8x64xbf16>
    %c8_i32_96 = arith.constant 8 : i32
    %129 = vector.broadcast %c8_i32_96 : i32 to vector<1x64xi32>
    %130 = arith.cmpi sge, %107, %129 : vector<1x64xi32>
    %cst_97 = arith.constant 0.000000e+00 : bf16
    %131 = vector.broadcast %cst_97 : bf16 to vector<8x64xbf16>
    %132 = vector.shape_cast %130 : vector<1x64xi1> to vector<1x64xi1>
    %133 = vector.broadcast %132 : vector<1x64xi1> to vector<8x64xi1>
    %134 = arith.select %133, %128, %131 : vector<8x64xi1>, vector<8x64xbf16>
    %c1_98 = arith.constant 1 : index
    %c0_99 = arith.constant 0 : index
    %c0_100 = arith.constant 0 : index
    %135 = vector.load %arg3[%c1_98, %c0_99, %c0_100] : memref<9x8x8xbf16, #tpu.memory_space<vmem>>, vector<1x8x8xbf16>
    %136 = vector.shape_cast %135 : vector<1x8x8xbf16> to vector<8x8xbf16>
    %cst_101 = arith.constant dense<0.000000e+00> : vector<8x64xf32>
    %137 = tpu.matmul %136, %134, %cst_101 {dimension_numbers = #tpu.dot_dimension_numbers<[1], [0], [0], [1], [0, 0, 1, 1], [], []>} : vector<8x8xbf16>, vector<8x64xbf16>, vector<8x64xf32> -> vector<8x64xf32>
    %138 = arith.addf %125, %137 : vector<8x64xf32>
    %139 = vector.extract_strided_slice %106 {offsets = [0, 57], sizes = [8, 7], strides = [1, 1]} : vector<8x64xbf16> to vector<8x7xbf16>
    %140 = vector.extract_strided_slice %106 {offsets = [0, 0], sizes = [8, 57], strides = [1, 1]} : vector<8x64xbf16> to vector<8x57xbf16>
    %141 = tpu.concatenate %139, %140 in 1 : vector<8x7xbf16>, vector<8x57xbf16> -> vector<8x64xbf16>
    %c8_i32_102 = arith.constant 8 : i32
    %142 = vector.broadcast %c8_i32_102 : i32 to vector<1x64xi32>
    %143 = arith.cmpi sge, %107, %142 : vector<1x64xi32>
    %c6_i32 = arith.constant 6 : i32
    %144 = vector.broadcast %c6_i32 : i32 to vector<1x64xi32>
    %145 = arith.cmpi sle, %108, %144 : vector<1x64xi32>
    %146 = arith.andi %143, %145 : vector<1x64xi1>
    %cst_103 = arith.constant 0.000000e+00 : bf16
    %147 = vector.broadcast %cst_103 : bf16 to vector<8x64xbf16>
    %148 = vector.shape_cast %146 : vector<1x64xi1> to vector<1x64xi1>
    %149 = vector.broadcast %148 : vector<1x64xi1> to vector<8x64xi1>
    %150 = arith.select %149, %141, %147 : vector<8x64xi1>, vector<8x64xbf16>
    %c2_104 = arith.constant 2 : index
    %c0_105 = arith.constant 0 : index
    %c0_106 = arith.constant 0 : index
    %151 = vector.load %arg3[%c2_104, %c0_105, %c0_106] : memref<9x8x8xbf16, #tpu.memory_space<vmem>>, vector<1x8x8xbf16>
    %152 = vector.shape_cast %151 : vector<1x8x8xbf16> to vector<8x8xbf16>
    %cst_107 = arith.constant dense<0.000000e+00> : vector<8x64xf32>
    %153 = tpu.matmul %152, %150, %cst_107 {dimension_numbers = #tpu.dot_dimension_numbers<[1], [0], [0], [1], [0, 0, 1, 1], [], []>} : vector<8x8xbf16>, vector<8x64xbf16>, vector<8x64xf32> -> vector<8x64xf32>
    %154 = arith.addf %138, %153 : vector<8x64xf32>
    %155 = vector.extract_strided_slice %106 {offsets = [0, 63], sizes = [8, 1], strides = [1, 1]} : vector<8x64xbf16> to vector<8x1xbf16>
    %156 = vector.extract_strided_slice %106 {offsets = [0, 0], sizes = [8, 63], strides = [1, 1]} : vector<8x64xbf16> to vector<8x63xbf16>
    %157 = tpu.concatenate %155, %156 in 1 : vector<8x1xbf16>, vector<8x63xbf16> -> vector<8x64xbf16>
    %c1_i32_108 = arith.constant 1 : i32
    %158 = vector.broadcast %c1_i32_108 : i32 to vector<1x64xi32>
    %159 = arith.cmpi sge, %108, %158 : vector<1x64xi32>
    %cst_109 = arith.constant 0.000000e+00 : bf16
    %160 = vector.broadcast %cst_109 : bf16 to vector<8x64xbf16>
    %161 = vector.shape_cast %159 : vector<1x64xi1> to vector<1x64xi1>
    %162 = vector.broadcast %161 : vector<1x64xi1> to vector<8x64xi1>
    %163 = arith.select %162, %157, %160 : vector<8x64xi1>, vector<8x64xbf16>
    %c3_110 = arith.constant 3 : index
    %c0_111 = arith.constant 0 : index
    %c0_112 = arith.constant 0 : index
    %164 = vector.load %arg3[%c3_110, %c0_111, %c0_112] : memref<9x8x8xbf16, #tpu.memory_space<vmem>>, vector<1x8x8xbf16>
    %165 = vector.shape_cast %164 : vector<1x8x8xbf16> to vector<8x8xbf16>
    %cst_113 = arith.constant dense<0.000000e+00> : vector<8x64xf32>
    %166 = tpu.matmul %165, %163, %cst_113 {dimension_numbers = #tpu.dot_dimension_numbers<[1], [0], [0], [1], [0, 0, 1, 1], [], []>} : vector<8x8xbf16>, vector<8x64xbf16>, vector<8x64xf32> -> vector<8x64xf32>
    %167 = arith.addf %154, %166 : vector<8x64xf32>
    %c4_114 = arith.constant 4 : index
    %c0_115 = arith.constant 0 : index
    %c0_116 = arith.constant 0 : index
    %168 = vector.load %arg3[%c4_114, %c0_115, %c0_116] : memref<9x8x8xbf16, #tpu.memory_space<vmem>>, vector<1x8x8xbf16>
    %169 = vector.shape_cast %168 : vector<1x8x8xbf16> to vector<8x8xbf16>
    %cst_117 = arith.constant dense<0.000000e+00> : vector<8x64xf32>
    %170 = tpu.matmul %169, %106, %cst_117 {dimension_numbers = #tpu.dot_dimension_numbers<[1], [0], [0], [1], [0, 0, 1, 1], [], []>} : vector<8x8xbf16>, vector<8x64xbf16>, vector<8x64xf32> -> vector<8x64xf32>
    %171 = arith.addf %167, %170 : vector<8x64xf32>
    %172 = vector.extract_strided_slice %106 {offsets = [0, 1], sizes = [8, 63], strides = [1, 1]} : vector<8x64xbf16> to vector<8x63xbf16>
    %173 = vector.extract_strided_slice %106 {offsets = [0, 0], sizes = [8, 1], strides = [1, 1]} : vector<8x64xbf16> to vector<8x1xbf16>
    %174 = tpu.concatenate %172, %173 in 1 : vector<8x63xbf16>, vector<8x1xbf16> -> vector<8x64xbf16>
    %c6_i32_118 = arith.constant 6 : i32
    %175 = vector.broadcast %c6_i32_118 : i32 to vector<1x64xi32>
    %176 = arith.cmpi sle, %108, %175 : vector<1x64xi32>
    %cst_119 = arith.constant 0.000000e+00 : bf16
    %177 = vector.broadcast %cst_119 : bf16 to vector<8x64xbf16>
    %178 = vector.shape_cast %176 : vector<1x64xi1> to vector<1x64xi1>
    %179 = vector.broadcast %178 : vector<1x64xi1> to vector<8x64xi1>
    %180 = arith.select %179, %174, %177 : vector<8x64xi1>, vector<8x64xbf16>
    %c5_120 = arith.constant 5 : index
    %c0_121 = arith.constant 0 : index
    %c0_122 = arith.constant 0 : index
    %181 = vector.load %arg3[%c5_120, %c0_121, %c0_122] : memref<9x8x8xbf16, #tpu.memory_space<vmem>>, vector<1x8x8xbf16>
    %182 = vector.shape_cast %181 : vector<1x8x8xbf16> to vector<8x8xbf16>
    %cst_123 = arith.constant dense<0.000000e+00> : vector<8x64xf32>
    %183 = tpu.matmul %182, %180, %cst_123 {dimension_numbers = #tpu.dot_dimension_numbers<[1], [0], [0], [1], [0, 0, 1, 1], [], []>} : vector<8x8xbf16>, vector<8x64xbf16>, vector<8x64xf32> -> vector<8x64xf32>
    %184 = arith.addf %171, %183 : vector<8x64xf32>
    %185 = vector.extract_strided_slice %106 {offsets = [0, 7], sizes = [8, 57], strides = [1, 1]} : vector<8x64xbf16> to vector<8x57xbf16>
    %186 = vector.extract_strided_slice %106 {offsets = [0, 0], sizes = [8, 7], strides = [1, 1]} : vector<8x64xbf16> to vector<8x7xbf16>
    %187 = tpu.concatenate %185, %186 in 1 : vector<8x57xbf16>, vector<8x7xbf16> -> vector<8x64xbf16>
    %c56_i32 = arith.constant 56 : i32
    %188 = vector.broadcast %c56_i32 : i32 to vector<1x64xi32>
    %189 = arith.cmpi slt, %107, %188 : vector<1x64xi32>
    %c1_i32_124 = arith.constant 1 : i32
    %190 = vector.broadcast %c1_i32_124 : i32 to vector<1x64xi32>
    %191 = arith.cmpi sge, %108, %190 : vector<1x64xi32>
    %192 = arith.andi %189, %191 : vector<1x64xi1>
    %cst_125 = arith.constant 0.000000e+00 : bf16
    %193 = vector.broadcast %cst_125 : bf16 to vector<8x64xbf16>
    %194 = vector.shape_cast %192 : vector<1x64xi1> to vector<1x64xi1>
    %195 = vector.broadcast %194 : vector<1x64xi1> to vector<8x64xi1>
    %196 = arith.select %195, %187, %193 : vector<8x64xi1>, vector<8x64xbf16>
    %c6_126 = arith.constant 6 : index
    %c0_127 = arith.constant 0 : index
    %c0_128 = arith.constant 0 : index
    %197 = vector.load %arg3[%c6_126, %c0_127, %c0_128] : memref<9x8x8xbf16, #tpu.memory_space<vmem>>, vector<1x8x8xbf16>
    %198 = vector.shape_cast %197 : vector<1x8x8xbf16> to vector<8x8xbf16>
    %cst_129 = arith.constant dense<0.000000e+00> : vector<8x64xf32>
    %199 = tpu.matmul %198, %196, %cst_129 {dimension_numbers = #tpu.dot_dimension_numbers<[1], [0], [0], [1], [0, 0, 1, 1], [], []>} : vector<8x8xbf16>, vector<8x64xbf16>, vector<8x64xf32> -> vector<8x64xf32>
    %200 = arith.addf %184, %199 : vector<8x64xf32>
    %201 = vector.extract_strided_slice %106 {offsets = [0, 8], sizes = [8, 56], strides = [1, 1]} : vector<8x64xbf16> to vector<8x56xbf16>
    %202 = vector.extract_strided_slice %106 {offsets = [0, 0], sizes = [8, 8], strides = [1, 1]} : vector<8x64xbf16> to vector<8x8xbf16>
    %203 = tpu.concatenate %201, %202 in 1 : vector<8x56xbf16>, vector<8x8xbf16> -> vector<8x64xbf16>
    %c56_i32_130 = arith.constant 56 : i32
    %204 = vector.broadcast %c56_i32_130 : i32 to vector<1x64xi32>
    %205 = arith.cmpi slt, %107, %204 : vector<1x64xi32>
    %cst_131 = arith.constant 0.000000e+00 : bf16
    %206 = vector.broadcast %cst_131 : bf16 to vector<8x64xbf16>
    %207 = vector.shape_cast %205 : vector<1x64xi1> to vector<1x64xi1>
    %208 = vector.broadcast %207 : vector<1x64xi1> to vector<8x64xi1>
    %209 = arith.select %208, %203, %206 : vector<8x64xi1>, vector<8x64xbf16>
    %c7_132 = arith.constant 7 : index
    %c0_133 = arith.constant 0 : index
    %c0_134 = arith.constant 0 : index
    %210 = vector.load %arg3[%c7_132, %c0_133, %c0_134] : memref<9x8x8xbf16, #tpu.memory_space<vmem>>, vector<1x8x8xbf16>
    %211 = vector.shape_cast %210 : vector<1x8x8xbf16> to vector<8x8xbf16>
    %cst_135 = arith.constant dense<0.000000e+00> : vector<8x64xf32>
    %212 = tpu.matmul %211, %209, %cst_135 {dimension_numbers = #tpu.dot_dimension_numbers<[1], [0], [0], [1], [0, 0, 1, 1], [], []>} : vector<8x8xbf16>, vector<8x64xbf16>, vector<8x64xf32> -> vector<8x64xf32>
    %213 = arith.addf %200, %212 : vector<8x64xf32>
    %214 = vector.extract_strided_slice %106 {offsets = [0, 9], sizes = [8, 55], strides = [1, 1]} : vector<8x64xbf16> to vector<8x55xbf16>
    %215 = vector.extract_strided_slice %106 {offsets = [0, 0], sizes = [8, 9], strides = [1, 1]} : vector<8x64xbf16> to vector<8x9xbf16>
    %216 = tpu.concatenate %214, %215 in 1 : vector<8x55xbf16>, vector<8x9xbf16> -> vector<8x64xbf16>
    %c56_i32_136 = arith.constant 56 : i32
    %217 = vector.broadcast %c56_i32_136 : i32 to vector<1x64xi32>
    %218 = arith.cmpi slt, %107, %217 : vector<1x64xi32>
    %c6_i32_137 = arith.constant 6 : i32
    %219 = vector.broadcast %c6_i32_137 : i32 to vector<1x64xi32>
    %220 = arith.cmpi sle, %108, %219 : vector<1x64xi32>
    %221 = arith.andi %218, %220 : vector<1x64xi1>
    %cst_138 = arith.constant 0.000000e+00 : bf16
    %222 = vector.broadcast %cst_138 : bf16 to vector<8x64xbf16>
    %223 = vector.shape_cast %221 : vector<1x64xi1> to vector<1x64xi1>
    %224 = vector.broadcast %223 : vector<1x64xi1> to vector<8x64xi1>
    %225 = arith.select %224, %216, %222 : vector<8x64xi1>, vector<8x64xbf16>
    %c8_139 = arith.constant 8 : index
    %c0_140 = arith.constant 0 : index
    %c0_141 = arith.constant 0 : index
    %226 = vector.load %arg3[%c8_139, %c0_140, %c0_141] : memref<9x8x8xbf16, #tpu.memory_space<vmem>>, vector<1x8x8xbf16>
    %227 = vector.shape_cast %226 : vector<1x8x8xbf16> to vector<8x8xbf16>
    %cst_142 = arith.constant dense<0.000000e+00> : vector<8x64xf32>
    %228 = tpu.matmul %227, %225, %cst_142 {dimension_numbers = #tpu.dot_dimension_numbers<[1], [0], [0], [1], [0, 0, 1, 1], [], []>} : vector<8x8xbf16>, vector<8x64xbf16>, vector<8x64xf32> -> vector<8x64xf32>
    %229 = arith.addf %213, %228 : vector<8x64xf32>
    %cst_143 = arith.constant dense<0.000000e+00> : vector<8xf32>
    %230 = vector.multi_reduction <add>, %229, %cst_143 [1] : vector<8x64xf32> to vector<8xf32>
    %231 = vector.shape_cast %230 : vector<8xf32> to vector<8x1xf32>
    %232 = arith.mulf %229, %229 : vector<8x64xf32>
    %cst_144 = arith.constant dense<0.000000e+00> : vector<8xf32>
    %233 = vector.multi_reduction <add>, %232, %cst_144 [1] : vector<8x64xf32> to vector<8xf32>
    %234 = vector.shape_cast %233 : vector<8xf32> to vector<8x1xf32>
    %cst_145 = arith.constant 6.400000e+01 : f32
    %235 = vector.broadcast %cst_145 : f32 to vector<8x1xf32>
    %236 = arith.mulf %235, %61 : vector<8x1xf32>
    %237 = arith.addf %231, %236 : vector<8x1xf32>
    %cst_146 = arith.constant 2.000000e+00 : f32
    %238 = vector.broadcast %cst_146 : f32 to vector<8x1xf32>
    %239 = arith.mulf %238, %61 : vector<8x1xf32>
    %240 = arith.mulf %239, %231 : vector<8x1xf32>
    %241 = arith.addf %234, %240 : vector<8x1xf32>
    %242 = arith.mulf %61, %61 : vector<8x1xf32>
    %cst_147 = arith.constant 6.400000e+01 : f32
    %243 = vector.broadcast %cst_147 : f32 to vector<8x1xf32>
    %244 = arith.mulf %243, %242 : vector<8x1xf32>
    %245 = arith.addf %241, %244 : vector<8x1xf32>
    %246 = tpu.concatenate %237, %245 in 1 : vector<8x1xf32>, vector<8x1xf32> -> vector<8x2xf32>
    %cst_148 = arith.constant dense<0.000000e+00> : vector<8x2xf32>
    %247 = tpu.matmul %57, %246, %cst_148 {dimension_numbers = #tpu.dot_dimension_numbers<[1], [0], [0], [1], [0, 0, 1, 1], [], []>} : vector<8x8xf32>, vector<8x2xf32>, vector<8x2xf32> -> vector<8x2xf32>
    %248 = vector.extract_strided_slice %247 {offsets = [0, 0], sizes = [8, 1], strides = [1, 1]} : vector<8x2xf32> to vector<8x1xf32>
    %249 = vector.extract_strided_slice %247 {offsets = [0, 1], sizes = [8, 1], strides = [1, 1]} : vector<8x2xf32> to vector<8x1xf32>
    %250 = arith.mulf %248, %248 : vector<8x1xf32>
    %251 = arith.subf %249, %250 : vector<8x1xf32>
    %cst_149 = arith.constant 0.000000e+00 : f32
    %252 = vector.broadcast %cst_149 : f32 to vector<8x1xf32>
    %253 = arith.maximumf %251, %252 : vector<8x1xf32>
    %cst_150 = arith.constant 9.99999974E-6 : f32
    %254 = vector.broadcast %cst_150 : f32 to vector<8x1xf32>
    %255 = arith.addf %253, %254 : vector<8x1xf32>
    %256 = math.rsqrt %255 : vector<8x1xf32>
    %257 = arith.mulf %62, %256 : vector<8x1xf32>
    %258 = arith.subf %61, %248 : vector<8x1xf32>
    %259 = arith.mulf %258, %257 : vector<8x1xf32>
    %260 = arith.addf %63, %259 : vector<8x1xf32>
    %261 = vector.broadcast %257 : vector<8x1xf32> to vector<8x64xf32>
    %262 = arith.mulf %229, %261 : vector<8x64xf32>
    %263 = vector.broadcast %260 : vector<8x1xf32> to vector<8x64xf32>
    %264 = arith.addf %262, %263 : vector<8x64xf32>
    %265 = arith.negf %264 : vector<8x64xf32>
    %266 = math.exp %265 : vector<8x64xf32>
    %cst_151 = arith.constant 1.000000e+00 : f32
    %267 = vector.broadcast %cst_151 : f32 to vector<8x64xf32>
    %268 = arith.addf %267, %266 : vector<8x64xf32>
    %269 = arith.divf %267, %268 : vector<8x64xf32>
    %270 = arith.mulf %264, %269 : vector<8x64xf32>
    %271 = arith.addf %270, %56 : vector<8x64xf32>
    %272 = vector.broadcast %64 : vector<8x1xf32> to vector<8x64xf32>
    %273 = arith.addf %271, %272 : vector<8x64xf32>
    %274 = arith.truncf %273 : vector<8x64xf32> to vector<8x64xbf16>
    %c0_152 = arith.constant 0 : index
    %c0_153 = arith.constant 0 : index
    %c0_154 = arith.constant 0 : index
    %275 = vector.load %arg7[%c0_152, %c0_153, %c0_154] : memref<1x8x64xbf16, #tpu.memory_space<vmem>>, vector<1x8x64xbf16>
    %276 = vector.shape_cast %275 : vector<1x8x64xbf16> to vector<8x64xbf16>
    %277 = vector.shape_cast %274 : vector<8x64xbf16> to vector<1x8x64xbf16>
    tpu.vector_store %arg7[%c0_152, %c0_153, %c0_154], %277 {strides = array<i32>} : memref<1x8x64xbf16, #tpu.memory_space<vmem>>, vector<1x8x64xbf16>,
    return
  }
  func.func @transform_0(%arg0: i32) -> (i32, i32, i32, i32) {
    %c0_i32 = arith.constant 0 : i32
    %c0_i32_0 = arith.constant 0 : i32
    %c0_i32_1 = arith.constant 0 : i32
    %c0_i32_2 = arith.constant 0 : i32
    return %arg0, %c0_i32, %c0_i32_0, %c0_i32_1 : i32, i32, i32, i32
  }
  func.func @transform_1(%arg0: i32) -> (i32, i32, i32) {
    %c0_i32 = arith.constant 0 : i32
    %c0_i32_0 = arith.constant 0 : i32
    %c0_i32_1 = arith.constant 0 : i32
    %c0_i32_2 = arith.constant 0 : i32
    return %c0_i32, %c0_i32_0, %c0_i32_1 : i32, i32, i32
  }
  func.func @transform_2(%arg0: i32) -> (i32, i32, i32) {
    %c0_i32 = arith.constant 0 : i32
    %c0_i32_0 = arith.constant 0 : i32
    %c0_i32_1 = arith.constant 0 : i32
    %c0_i32_2 = arith.constant 0 : i32
    return %c0_i32, %c0_i32_0, %c0_i32_1 : i32, i32, i32
  }
  func.func @transform_3(%arg0: i32) -> (i32, i32) {
    %c0_i32 = arith.constant 0 : i32
    %c0_i32_0 = arith.constant 0 : i32
    %c0_i32_1 = arith.constant 0 : i32
    return %c0_i32, %c0_i32_0 : i32, i32
  }
  func.func @transform_4(%arg0: i32) -> (i32, i32) {
    %c0_i32 = arith.constant 0 : i32
    %c0_i32_0 = arith.constant 0 : i32
    %c0_i32_1 = arith.constant 0 : i32
    return %c0_i32, %c0_i32_0 : i32, i32
  }
  func.func @transform_5(%arg0: i32) -> (i32, i32) {
    %c0_i32 = arith.constant 0 : i32
    %c0_i32_0 = arith.constant 0 : i32
    %c0_i32_1 = arith.constant 0 : i32
    return %c0_i32, %c0_i32_0 : i32, i32
  }
  func.func @transform_6(%arg0: i32) -> (i32, i32, i32) {
    %c0_i32 = arith.constant 0 : i32
    %c0_i32_0 = arith.constant 0 : i32
    %c0_i32_1 = arith.constant 0 : i32
    return %arg0, %c0_i32, %c0_i32_0 : i32, i32, i32
  }
}

module attributes {stable_mosaic.version = 11 : i64} {
  func.func @_stage_kernel(%arg0: i32, %arg1: memref<1x6x8x20xbf16, #tpu.memory_space<vmem>>, %arg2: memref<9x32x8xbf16, #tpu.memory_space<vmem>>, %arg3: memref<9x16x16xbf16, #tpu.memory_space<vmem>>, %arg4: memref<16x16xf32, #tpu.memory_space<vmem>>, %arg5: memref<1x16xi32, #tpu.memory_space<vmem>>, %arg6: memref<16x7xf32, #tpu.memory_space<vmem>>, %arg7: memref<1x16x16xbf16, #tpu.memory_space<vmem>>) attributes {dimension_semantics = [#tpu.dimension_semantics<parallel>], iteration_bounds = array<i64: 2>, scalar_prefetch = 0 : i64, scratch_operands = 0 : i64, tpu.core_type = #tpu.core_type<tc>, window_params = [{transform_indices = @transform_0, window_bounds = array<i64: 1, 6, 8, 20>}, {pipeline_mode = #tpu.pipeline_mode<synchronous>, transform_indices = @transform_1, window_bounds = array<i64: 9, 32, 8>}, {pipeline_mode = #tpu.pipeline_mode<synchronous>, transform_indices = @transform_2, window_bounds = array<i64: 9, 16, 16>}, {pipeline_mode = #tpu.pipeline_mode<synchronous>, transform_indices = @transform_3, window_bounds = array<i64: 16, 16>}, {pipeline_mode = #tpu.pipeline_mode<synchronous>, transform_indices = @transform_4, window_bounds = array<i64: 1, 16>}, {pipeline_mode = #tpu.pipeline_mode<synchronous>, transform_indices = @transform_5, window_bounds = array<i64: 16, 7>}, {transform_indices = @transform_6, window_bounds = array<i64: 1, 16, 16>}]} {
    %cst = arith.constant 0.000000e+00 : f32
    %0 = vector.broadcast %cst : f32 to vector<32x16xf32>
    %c0 = arith.constant 0 : index
    %c0_0 = arith.constant 0 : index
    %c0_1 = arith.constant 0 : index
    %c0_2 = arith.constant 0 : index
    %1 = vector.load %arg1[%c0, %c0_0, %c0_1, %c0_2] : memref<1x6x8x20xbf16, #tpu.memory_space<vmem>>, vector<1x1x8x16xbf16>
    %2 = vector.shape_cast %1 : vector<1x1x8x16xbf16> to vector<8x16xbf16>
    %c0_3 = arith.constant 0 : index
    %c0_4 = arith.constant 0 : index
    %c0_5 = arith.constant 0 : index
    %3 = vector.load %arg2[%c0_3, %c0_4, %c0_5] : memref<9x32x8xbf16, #tpu.memory_space<vmem>>, vector<1x32x8xbf16>
    %4 = vector.shape_cast %3 : vector<1x32x8xbf16> to vector<32x8xbf16>
    %cst_6 = arith.constant dense<0.000000e+00> : vector<32x16xf32>
    %5 = tpu.matmul %4, %2, %cst_6 {dimension_numbers = #tpu.dot_dimension_numbers<[1], [0], [0], [1], [0, 0, 1, 1], [], []>} : vector<32x8xbf16>, vector<8x16xbf16>, vector<32x16xf32> -> vector<32x16xf32>
    %6 = arith.addf %0, %5 : vector<32x16xf32>
    %c0_7 = arith.constant 0 : index
    %c1 = arith.constant 1 : index
    %c0_8 = arith.constant 0 : index
    %c0_9 = arith.constant 0 : index
    %7 = vector.load %arg1[%c0_7, %c1, %c0_8, %c0_9] : memref<1x6x8x20xbf16, #tpu.memory_space<vmem>>, vector<1x1x8x16xbf16>
    %8 = vector.shape_cast %7 : vector<1x1x8x16xbf16> to vector<8x16xbf16>
    %c1_10 = arith.constant 1 : index
    %c0_11 = arith.constant 0 : index
    %c0_12 = arith.constant 0 : index
    %9 = vector.load %arg2[%c1_10, %c0_11, %c0_12] : memref<9x32x8xbf16, #tpu.memory_space<vmem>>, vector<1x32x8xbf16>
    %10 = vector.shape_cast %9 : vector<1x32x8xbf16> to vector<32x8xbf16>
    %cst_13 = arith.constant dense<0.000000e+00> : vector<32x16xf32>
    %11 = tpu.matmul %10, %8, %cst_13 {dimension_numbers = #tpu.dot_dimension_numbers<[1], [0], [0], [1], [0, 0, 1, 1], [], []>} : vector<32x8xbf16>, vector<8x16xbf16>, vector<32x16xf32> -> vector<32x16xf32>
    %12 = arith.addf %6, %11 : vector<32x16xf32>
    %c0_14 = arith.constant 0 : index
    %c2 = arith.constant 2 : index
    %c0_15 = arith.constant 0 : index
    %c0_16 = arith.constant 0 : index
    %13 = vector.load %arg1[%c0_14, %c2, %c0_15, %c0_16] : memref<1x6x8x20xbf16, #tpu.memory_space<vmem>>, vector<1x1x8x16xbf16>
    %14 = vector.shape_cast %13 : vector<1x1x8x16xbf16> to vector<8x16xbf16>
    %c2_17 = arith.constant 2 : index
    %c0_18 = arith.constant 0 : index
    %c0_19 = arith.constant 0 : index
    %15 = vector.load %arg2[%c2_17, %c0_18, %c0_19] : memref<9x32x8xbf16, #tpu.memory_space<vmem>>, vector<1x32x8xbf16>
    %16 = vector.shape_cast %15 : vector<1x32x8xbf16> to vector<32x8xbf16>
    %cst_20 = arith.constant dense<0.000000e+00> : vector<32x16xf32>
    %17 = tpu.matmul %16, %14, %cst_20 {dimension_numbers = #tpu.dot_dimension_numbers<[1], [0], [0], [1], [0, 0, 1, 1], [], []>} : vector<32x8xbf16>, vector<8x16xbf16>, vector<32x16xf32> -> vector<32x16xf32>
    %18 = arith.addf %12, %17 : vector<32x16xf32>
    %c0_21 = arith.constant 0 : index
    %c3 = arith.constant 3 : index
    %c0_22 = arith.constant 0 : index
    %c0_23 = arith.constant 0 : index
    %19 = vector.load %arg1[%c0_21, %c3, %c0_22, %c0_23] : memref<1x6x8x20xbf16, #tpu.memory_space<vmem>>, vector<1x1x8x16xbf16>
    %20 = vector.shape_cast %19 : vector<1x1x8x16xbf16> to vector<8x16xbf16>
    %c3_24 = arith.constant 3 : index
    %c0_25 = arith.constant 0 : index
    %c0_26 = arith.constant 0 : index
    %21 = vector.load %arg2[%c3_24, %c0_25, %c0_26] : memref<9x32x8xbf16, #tpu.memory_space<vmem>>, vector<1x32x8xbf16>
    %22 = vector.shape_cast %21 : vector<1x32x8xbf16> to vector<32x8xbf16>
    %cst_27 = arith.constant dense<0.000000e+00> : vector<32x16xf32>
    %23 = tpu.matmul %22, %20, %cst_27 {dimension_numbers = #tpu.dot_dimension_numbers<[1], [0], [0], [1], [0, 0, 1, 1], [], []>} : vector<32x8xbf16>, vector<8x16xbf16>, vector<32x16xf32> -> vector<32x16xf32>
    %24 = arith.addf %18, %23 : vector<32x16xf32>
    %c0_28 = arith.constant 0 : index
    %c4 = arith.constant 4 : index
    %c0_29 = arith.constant 0 : index
    %c0_30 = arith.constant 0 : index
    %25 = vector.load %arg1[%c0_28, %c4, %c0_29, %c0_30] : memref<1x6x8x20xbf16, #tpu.memory_space<vmem>>, vector<1x1x8x16xbf16>
    %26 = vector.shape_cast %25 : vector<1x1x8x16xbf16> to vector<8x16xbf16>
    %c4_31 = arith.constant 4 : index
    %c0_32 = arith.constant 0 : index
    %c0_33 = arith.constant 0 : index
    %27 = vector.load %arg2[%c4_31, %c0_32, %c0_33] : memref<9x32x8xbf16, #tpu.memory_space<vmem>>, vector<1x32x8xbf16>
    %28 = vector.shape_cast %27 : vector<1x32x8xbf16> to vector<32x8xbf16>
    %cst_34 = arith.constant dense<0.000000e+00> : vector<32x16xf32>
    %29 = tpu.matmul %28, %26, %cst_34 {dimension_numbers = #tpu.dot_dimension_numbers<[1], [0], [0], [1], [0, 0, 1, 1], [], []>} : vector<32x8xbf16>, vector<8x16xbf16>, vector<32x16xf32> -> vector<32x16xf32>
    %30 = arith.addf %24, %29 : vector<32x16xf32>
    %c0_35 = arith.constant 0 : index
    %c5 = arith.constant 5 : index
    %c0_36 = arith.constant 0 : index
    %c0_37 = arith.constant 0 : index
    %31 = vector.load %arg1[%c0_35, %c5, %c0_36, %c0_37] : memref<1x6x8x20xbf16, #tpu.memory_space<vmem>>, vector<1x1x8x16xbf16>
    %32 = vector.shape_cast %31 : vector<1x1x8x16xbf16> to vector<8x16xbf16>
    %c5_38 = arith.constant 5 : index
    %c0_39 = arith.constant 0 : index
    %c0_40 = arith.constant 0 : index
    %33 = vector.load %arg2[%c5_38, %c0_39, %c0_40] : memref<9x32x8xbf16, #tpu.memory_space<vmem>>, vector<1x32x8xbf16>
    %34 = vector.shape_cast %33 : vector<1x32x8xbf16> to vector<32x8xbf16>
    %cst_41 = arith.constant dense<0.000000e+00> : vector<32x16xf32>
    %35 = tpu.matmul %34, %32, %cst_41 {dimension_numbers = #tpu.dot_dimension_numbers<[1], [0], [0], [1], [0, 0, 1, 1], [], []>} : vector<32x8xbf16>, vector<8x16xbf16>, vector<32x16xf32> -> vector<32x16xf32>
    %36 = arith.addf %30, %35 : vector<32x16xf32>
    %c0_42 = arith.constant 0 : index
    %c0_43 = arith.constant 0 : index
    %c0_44 = arith.constant 0 : index
    %c4_45 = arith.constant 4 : index
    %37 = vector.load %arg1[%c0_42, %c0_43, %c0_44, %c4_45] : memref<1x6x8x20xbf16, #tpu.memory_space<vmem>>, vector<1x1x8x16xbf16>
    %38 = vector.shape_cast %37 : vector<1x1x8x16xbf16> to vector<8x16xbf16>
    %c6 = arith.constant 6 : index
    %c0_46 = arith.constant 0 : index
    %c0_47 = arith.constant 0 : index
    %39 = vector.load %arg2[%c6, %c0_46, %c0_47] : memref<9x32x8xbf16, #tpu.memory_space<vmem>>, vector<1x32x8xbf16>
    %40 = vector.shape_cast %39 : vector<1x32x8xbf16> to vector<32x8xbf16>
    %cst_48 = arith.constant dense<0.000000e+00> : vector<32x16xf32>
    %41 = tpu.matmul %40, %38, %cst_48 {dimension_numbers = #tpu.dot_dimension_numbers<[1], [0], [0], [1], [0, 0, 1, 1], [], []>} : vector<32x8xbf16>, vector<8x16xbf16>, vector<32x16xf32> -> vector<32x16xf32>
    %42 = arith.addf %36, %41 : vector<32x16xf32>
    %c0_49 = arith.constant 0 : index
    %c1_50 = arith.constant 1 : index
    %c0_51 = arith.constant 0 : index
    %c4_52 = arith.constant 4 : index
    %43 = vector.load %arg1[%c0_49, %c1_50, %c0_51, %c4_52] : memref<1x6x8x20xbf16, #tpu.memory_space<vmem>>, vector<1x1x8x16xbf16>
    %44 = vector.shape_cast %43 : vector<1x1x8x16xbf16> to vector<8x16xbf16>
    %c7 = arith.constant 7 : index
    %c0_53 = arith.constant 0 : index
    %c0_54 = arith.constant 0 : index
    %45 = vector.load %arg2[%c7, %c0_53, %c0_54] : memref<9x32x8xbf16, #tpu.memory_space<vmem>>, vector<1x32x8xbf16>
    %46 = vector.shape_cast %45 : vector<1x32x8xbf16> to vector<32x8xbf16>
    %cst_55 = arith.constant dense<0.000000e+00> : vector<32x16xf32>
    %47 = tpu.matmul %46, %44, %cst_55 {dimension_numbers = #tpu.dot_dimension_numbers<[1], [0], [0], [1], [0, 0, 1, 1], [], []>} : vector<32x8xbf16>, vector<8x16xbf16>, vector<32x16xf32> -> vector<32x16xf32>
    %48 = arith.addf %42, %47 : vector<32x16xf32>
    %c0_56 = arith.constant 0 : index
    %c2_57 = arith.constant 2 : index
    %c0_58 = arith.constant 0 : index
    %c4_59 = arith.constant 4 : index
    %49 = vector.load %arg1[%c0_56, %c2_57, %c0_58, %c4_59] : memref<1x6x8x20xbf16, #tpu.memory_space<vmem>>, vector<1x1x8x16xbf16>
    %50 = vector.shape_cast %49 : vector<1x1x8x16xbf16> to vector<8x16xbf16>
    %c8 = arith.constant 8 : index
    %c0_60 = arith.constant 0 : index
    %c0_61 = arith.constant 0 : index
    %51 = vector.load %arg2[%c8, %c0_60, %c0_61] : memref<9x32x8xbf16, #tpu.memory_space<vmem>>, vector<1x32x8xbf16>
    %52 = vector.shape_cast %51 : vector<1x32x8xbf16> to vector<32x8xbf16>
    %cst_62 = arith.constant dense<0.000000e+00> : vector<32x16xf32>
    %53 = tpu.matmul %52, %50, %cst_62 {dimension_numbers = #tpu.dot_dimension_numbers<[1], [0], [0], [1], [0, 0, 1, 1], [], []>} : vector<32x8xbf16>, vector<8x16xbf16>, vector<32x16xf32> -> vector<32x16xf32>
    %54 = arith.addf %48, %53 : vector<32x16xf32>
    %55 = vector.extract_strided_slice %54 {offsets = [0, 0], sizes = [16, 16], strides = [1, 1]} : vector<32x16xf32> to vector<16x16xf32>
    %56 = vector.extract_strided_slice %54 {offsets = [16, 0], sizes = [16, 16], strides = [1, 1]} : vector<32x16xf32> to vector<16x16xf32>
    %c0_63 = arith.constant 0 : index
    %c0_64 = arith.constant 0 : index
    %57 = vector.load %arg4[%c0_63, %c0_64] : memref<16x16xf32, #tpu.memory_space<vmem>>, vector<16x16xf32>
    %c0_65 = arith.constant 0 : index
    %c0_66 = arith.constant 0 : index
    %58 = vector.load %arg6[%c0_65, %c0_66] : memref<16x7xf32, #tpu.memory_space<vmem>>, vector<16x1xf32>
    %c0_67 = arith.constant 0 : index
    %c1_68 = arith.constant 1 : index
    %59 = vector.load %arg6[%c0_67, %c1_68] : memref<16x7xf32, #tpu.memory_space<vmem>>, vector<16x1xf32>
    %c0_69 = arith.constant 0 : index
    %c2_70 = arith.constant 2 : index
    %60 = vector.load %arg6[%c0_69, %c2_70] : memref<16x7xf32, #tpu.memory_space<vmem>>, vector<16x1xf32>
    %c0_71 = arith.constant 0 : index
    %c3_72 = arith.constant 3 : index
    %61 = vector.load %arg6[%c0_71, %c3_72] : memref<16x7xf32, #tpu.memory_space<vmem>>, vector<16x1xf32>
    %c0_73 = arith.constant 0 : index
    %c4_74 = arith.constant 4 : index
    %62 = vector.load %arg6[%c0_73, %c4_74] : memref<16x7xf32, #tpu.memory_space<vmem>>, vector<16x1xf32>
    %c0_75 = arith.constant 0 : index
    %c5_76 = arith.constant 5 : index
    %63 = vector.load %arg6[%c0_75, %c5_76] : memref<16x7xf32, #tpu.memory_space<vmem>>, vector<16x1xf32>
    %c0_77 = arith.constant 0 : index
    %c6_78 = arith.constant 6 : index
    %64 = vector.load %arg6[%c0_77, %c6_78] : memref<16x7xf32, #tpu.memory_space<vmem>>, vector<16x1xf32>
    %cst_79 = arith.constant dense<0.000000e+00> : vector<16xf32>
    %65 = vector.multi_reduction <add>, %55, %cst_79 [1] : vector<16x16xf32> to vector<16xf32>
    %66 = vector.shape_cast %65 : vector<16xf32> to vector<16x1xf32>
    %67 = arith.mulf %55, %55 : vector<16x16xf32>
    %cst_80 = arith.constant dense<0.000000e+00> : vector<16xf32>
    %68 = vector.multi_reduction <add>, %67, %cst_80 [1] : vector<16x16xf32> to vector<16xf32>
    %69 = vector.shape_cast %68 : vector<16xf32> to vector<16x1xf32>
    %cst_81 = arith.constant 1.600000e+01 : f32
    %70 = vector.broadcast %cst_81 : f32 to vector<16x1xf32>
    %71 = arith.mulf %70, %58 : vector<16x1xf32>
    %72 = arith.addf %66, %71 : vector<16x1xf32>
    %cst_82 = arith.constant 2.000000e+00 : f32
    %73 = vector.broadcast %cst_82 : f32 to vector<16x1xf32>
    %74 = arith.mulf %73, %58 : vector<16x1xf32>
    %75 = arith.mulf %74, %66 : vector<16x1xf32>
    %76 = arith.addf %69, %75 : vector<16x1xf32>
    %77 = arith.mulf %58, %58 : vector<16x1xf32>
    %cst_83 = arith.constant 1.600000e+01 : f32
    %78 = vector.broadcast %cst_83 : f32 to vector<16x1xf32>
    %79 = arith.mulf %78, %77 : vector<16x1xf32>
    %80 = arith.addf %76, %79 : vector<16x1xf32>
    %81 = tpu.concatenate %72, %80 in 1 : vector<16x1xf32>, vector<16x1xf32> -> vector<16x2xf32>
    %cst_84 = arith.constant dense<0.000000e+00> : vector<16x2xf32>
    %82 = tpu.matmul %57, %81, %cst_84 {dimension_numbers = #tpu.dot_dimension_numbers<[1], [0], [0], [1], [0, 0, 1, 1], [], []>} : vector<16x16xf32>, vector<16x2xf32>, vector<16x2xf32> -> vector<16x2xf32>
    %83 = vector.extract_strided_slice %82 {offsets = [0, 0], sizes = [16, 1], strides = [1, 1]} : vector<16x2xf32> to vector<16x1xf32>
    %84 = vector.extract_strided_slice %82 {offsets = [0, 1], sizes = [16, 1], strides = [1, 1]} : vector<16x2xf32> to vector<16x1xf32>
    %85 = arith.mulf %83, %83 : vector<16x1xf32>
    %86 = arith.subf %84, %85 : vector<16x1xf32>
    %cst_85 = arith.constant 0.000000e+00 : f32
    %87 = vector.broadcast %cst_85 : f32 to vector<16x1xf32>
    %88 = arith.maximumf %86, %87 : vector<16x1xf32>
    %cst_86 = arith.constant 9.99999974E-6 : f32
    %89 = vector.broadcast %cst_86 : f32 to vector<16x1xf32>
    %90 = arith.addf %88, %89 : vector<16x1xf32>
    %91 = math.rsqrt %90 : vector<16x1xf32>
    %92 = arith.mulf %59, %91 : vector<16x1xf32>
    %93 = arith.subf %58, %83 : vector<16x1xf32>
    %94 = arith.mulf %93, %92 : vector<16x1xf32>
    %95 = arith.addf %60, %94 : vector<16x1xf32>
    %96 = vector.broadcast %92 : vector<16x1xf32> to vector<16x16xf32>
    %97 = arith.mulf %55, %96 : vector<16x16xf32>
    %98 = vector.broadcast %95 : vector<16x1xf32> to vector<16x16xf32>
    %99 = arith.addf %97, %98 : vector<16x16xf32>
    %100 = arith.negf %99 : vector<16x16xf32>
    %101 = math.exp %100 : vector<16x16xf32>
    %cst_87 = arith.constant 1.000000e+00 : f32
    %102 = vector.broadcast %cst_87 : f32 to vector<16x16xf32>
    %103 = arith.addf %102, %101 : vector<16x16xf32>
    %104 = arith.divf %102, %103 : vector<16x16xf32>
    %105 = arith.mulf %99, %104 : vector<16x16xf32>
    %106 = arith.truncf %105 : vector<16x16xf32> to vector<16x16xbf16>
    %107 = tpu.iota {dimensions = array<i32: 1>} : vector<1x16xi32>
    %c0_88 = arith.constant 0 : index
    %c0_89 = arith.constant 0 : index
    %108 = vector.load %arg5[%c0_88, %c0_89] : memref<1x16xi32, #tpu.memory_space<vmem>>, vector<1x16xi32>
    %cst_90 = arith.constant 0.000000e+00 : f32
    %109 = vector.broadcast %cst_90 : f32 to vector<16x16xf32>
    %110 = vector.extract_strided_slice %106 {offsets = [0, 11], sizes = [16, 5], strides = [1, 1]} : vector<16x16xbf16> to vector<16x5xbf16>
    %111 = vector.extract_strided_slice %106 {offsets = [0, 0], sizes = [16, 11], strides = [1, 1]} : vector<16x16xbf16> to vector<16x11xbf16>
    %112 = tpu.concatenate %110, %111 in 1 : vector<16x5xbf16>, vector<16x11xbf16> -> vector<16x16xbf16>
    %c4_i32 = arith.constant 4 : i32
    %113 = vector.broadcast %c4_i32 : i32 to vector<1x16xi32>
    %114 = arith.cmpi sge, %107, %113 : vector<1x16xi32>
    %c1_i32 = arith.constant 1 : i32
    %115 = vector.broadcast %c1_i32 : i32 to vector<1x16xi32>
    %116 = arith.cmpi sge, %108, %115 : vector<1x16xi32>
    %117 = arith.andi %114, %116 : vector<1x16xi1>
    %cst_91 = arith.constant 0.000000e+00 : bf16
    %118 = vector.broadcast %cst_91 : bf16 to vector<16x16xbf16>
    %119 = vector.shape_cast %117 : vector<1x16xi1> to vector<1x16xi1>
    %120 = vector.broadcast %119 : vector<1x16xi1> to vector<16x16xi1>
    %121 = arith.select %120, %112, %118 : vector<16x16xi1>, vector<16x16xbf16>
    %c0_92 = arith.constant 0 : index
    %c0_93 = arith.constant 0 : index
    %c0_94 = arith.constant 0 : index
    %122 = vector.load %arg3[%c0_92, %c0_93, %c0_94] : memref<9x16x16xbf16, #tpu.memory_space<vmem>>, vector<1x16x16xbf16>
    %123 = vector.shape_cast %122 : vector<1x16x16xbf16> to vector<16x16xbf16>
    %cst_95 = arith.constant dense<0.000000e+00> : vector<16x16xf32>
    %124 = tpu.matmul %123, %121, %cst_95 {dimension_numbers = #tpu.dot_dimension_numbers<[1], [0], [0], [1], [0, 0, 1, 1], [], []>} : vector<16x16xbf16>, vector<16x16xbf16>, vector<16x16xf32> -> vector<16x16xf32>
    %125 = arith.addf %109, %124 : vector<16x16xf32>
    %126 = vector.extract_strided_slice %106 {offsets = [0, 12], sizes = [16, 4], strides = [1, 1]} : vector<16x16xbf16> to vector<16x4xbf16>
    %127 = vector.extract_strided_slice %106 {offsets = [0, 0], sizes = [16, 12], strides = [1, 1]} : vector<16x16xbf16> to vector<16x12xbf16>
    %128 = tpu.concatenate %126, %127 in 1 : vector<16x4xbf16>, vector<16x12xbf16> -> vector<16x16xbf16>
    %c4_i32_96 = arith.constant 4 : i32
    %129 = vector.broadcast %c4_i32_96 : i32 to vector<1x16xi32>
    %130 = arith.cmpi sge, %107, %129 : vector<1x16xi32>
    %cst_97 = arith.constant 0.000000e+00 : bf16
    %131 = vector.broadcast %cst_97 : bf16 to vector<16x16xbf16>
    %132 = vector.shape_cast %130 : vector<1x16xi1> to vector<1x16xi1>
    %133 = vector.broadcast %132 : vector<1x16xi1> to vector<16x16xi1>
    %134 = arith.select %133, %128, %131 : vector<16x16xi1>, vector<16x16xbf16>
    %c1_98 = arith.constant 1 : index
    %c0_99 = arith.constant 0 : index
    %c0_100 = arith.constant 0 : index
    %135 = vector.load %arg3[%c1_98, %c0_99, %c0_100] : memref<9x16x16xbf16, #tpu.memory_space<vmem>>, vector<1x16x16xbf16>
    %136 = vector.shape_cast %135 : vector<1x16x16xbf16> to vector<16x16xbf16>
    %cst_101 = arith.constant dense<0.000000e+00> : vector<16x16xf32>
    %137 = tpu.matmul %136, %134, %cst_101 {dimension_numbers = #tpu.dot_dimension_numbers<[1], [0], [0], [1], [0, 0, 1, 1], [], []>} : vector<16x16xbf16>, vector<16x16xbf16>, vector<16x16xf32> -> vector<16x16xf32>
    %138 = arith.addf %125, %137 : vector<16x16xf32>
    %139 = vector.extract_strided_slice %106 {offsets = [0, 13], sizes = [16, 3], strides = [1, 1]} : vector<16x16xbf16> to vector<16x3xbf16>
    %140 = vector.extract_strided_slice %106 {offsets = [0, 0], sizes = [16, 13], strides = [1, 1]} : vector<16x16xbf16> to vector<16x13xbf16>
    %141 = tpu.concatenate %139, %140 in 1 : vector<16x3xbf16>, vector<16x13xbf16> -> vector<16x16xbf16>
    %c4_i32_102 = arith.constant 4 : i32
    %142 = vector.broadcast %c4_i32_102 : i32 to vector<1x16xi32>
    %143 = arith.cmpi sge, %107, %142 : vector<1x16xi32>
    %c2_i32 = arith.constant 2 : i32
    %144 = vector.broadcast %c2_i32 : i32 to vector<1x16xi32>
    %145 = arith.cmpi sle, %108, %144 : vector<1x16xi32>
    %146 = arith.andi %143, %145 : vector<1x16xi1>
    %cst_103 = arith.constant 0.000000e+00 : bf16
    %147 = vector.broadcast %cst_103 : bf16 to vector<16x16xbf16>
    %148 = vector.shape_cast %146 : vector<1x16xi1> to vector<1x16xi1>
    %149 = vector.broadcast %148 : vector<1x16xi1> to vector<16x16xi1>
    %150 = arith.select %149, %141, %147 : vector<16x16xi1>, vector<16x16xbf16>
    %c2_104 = arith.constant 2 : index
    %c0_105 = arith.constant 0 : index
    %c0_106 = arith.constant 0 : index
    %151 = vector.load %arg3[%c2_104, %c0_105, %c0_106] : memref<9x16x16xbf16, #tpu.memory_space<vmem>>, vector<1x16x16xbf16>
    %152 = vector.shape_cast %151 : vector<1x16x16xbf16> to vector<16x16xbf16>
    %cst_107 = arith.constant dense<0.000000e+00> : vector<16x16xf32>
    %153 = tpu.matmul %152, %150, %cst_107 {dimension_numbers = #tpu.dot_dimension_numbers<[1], [0], [0], [1], [0, 0, 1, 1], [], []>} : vector<16x16xbf16>, vector<16x16xbf16>, vector<16x16xf32> -> vector<16x16xf32>
    %154 = arith.addf %138, %153 : vector<16x16xf32>
    %155 = vector.extract_strided_slice %106 {offsets = [0, 15], sizes = [16, 1], strides = [1, 1]} : vector<16x16xbf16> to vector<16x1xbf16>
    %156 = vector.extract_strided_slice %106 {offsets = [0, 0], sizes = [16, 15], strides = [1, 1]} : vector<16x16xbf16> to vector<16x15xbf16>
    %157 = tpu.concatenate %155, %156 in 1 : vector<16x1xbf16>, vector<16x15xbf16> -> vector<16x16xbf16>
    %c1_i32_108 = arith.constant 1 : i32
    %158 = vector.broadcast %c1_i32_108 : i32 to vector<1x16xi32>
    %159 = arith.cmpi sge, %108, %158 : vector<1x16xi32>
    %cst_109 = arith.constant 0.000000e+00 : bf16
    %160 = vector.broadcast %cst_109 : bf16 to vector<16x16xbf16>
    %161 = vector.shape_cast %159 : vector<1x16xi1> to vector<1x16xi1>
    %162 = vector.broadcast %161 : vector<1x16xi1> to vector<16x16xi1>
    %163 = arith.select %162, %157, %160 : vector<16x16xi1>, vector<16x16xbf16>
    %c3_110 = arith.constant 3 : index
    %c0_111 = arith.constant 0 : index
    %c0_112 = arith.constant 0 : index
    %164 = vector.load %arg3[%c3_110, %c0_111, %c0_112] : memref<9x16x16xbf16, #tpu.memory_space<vmem>>, vector<1x16x16xbf16>
    %165 = vector.shape_cast %164 : vector<1x16x16xbf16> to vector<16x16xbf16>
    %cst_113 = arith.constant dense<0.000000e+00> : vector<16x16xf32>
    %166 = tpu.matmul %165, %163, %cst_113 {dimension_numbers = #tpu.dot_dimension_numbers<[1], [0], [0], [1], [0, 0, 1, 1], [], []>} : vector<16x16xbf16>, vector<16x16xbf16>, vector<16x16xf32> -> vector<16x16xf32>
    %167 = arith.addf %154, %166 : vector<16x16xf32>
    %c4_114 = arith.constant 4 : index
    %c0_115 = arith.constant 0 : index
    %c0_116 = arith.constant 0 : index
    %168 = vector.load %arg3[%c4_114, %c0_115, %c0_116] : memref<9x16x16xbf16, #tpu.memory_space<vmem>>, vector<1x16x16xbf16>
    %169 = vector.shape_cast %168 : vector<1x16x16xbf16> to vector<16x16xbf16>
    %cst_117 = arith.constant dense<0.000000e+00> : vector<16x16xf32>
    %170 = tpu.matmul %169, %106, %cst_117 {dimension_numbers = #tpu.dot_dimension_numbers<[1], [0], [0], [1], [0, 0, 1, 1], [], []>} : vector<16x16xbf16>, vector<16x16xbf16>, vector<16x16xf32> -> vector<16x16xf32>
    %171 = arith.addf %167, %170 : vector<16x16xf32>
    %172 = vector.extract_strided_slice %106 {offsets = [0, 1], sizes = [16, 15], strides = [1, 1]} : vector<16x16xbf16> to vector<16x15xbf16>
    %173 = vector.extract_strided_slice %106 {offsets = [0, 0], sizes = [16, 1], strides = [1, 1]} : vector<16x16xbf16> to vector<16x1xbf16>
    %174 = tpu.concatenate %172, %173 in 1 : vector<16x15xbf16>, vector<16x1xbf16> -> vector<16x16xbf16>
    %c2_i32_118 = arith.constant 2 : i32
    %175 = vector.broadcast %c2_i32_118 : i32 to vector<1x16xi32>
    %176 = arith.cmpi sle, %108, %175 : vector<1x16xi32>
    %cst_119 = arith.constant 0.000000e+00 : bf16
    %177 = vector.broadcast %cst_119 : bf16 to vector<16x16xbf16>
    %178 = vector.shape_cast %176 : vector<1x16xi1> to vector<1x16xi1>
    %179 = vector.broadcast %178 : vector<1x16xi1> to vector<16x16xi1>
    %180 = arith.select %179, %174, %177 : vector<16x16xi1>, vector<16x16xbf16>
    %c5_120 = arith.constant 5 : index
    %c0_121 = arith.constant 0 : index
    %c0_122 = arith.constant 0 : index
    %181 = vector.load %arg3[%c5_120, %c0_121, %c0_122] : memref<9x16x16xbf16, #tpu.memory_space<vmem>>, vector<1x16x16xbf16>
    %182 = vector.shape_cast %181 : vector<1x16x16xbf16> to vector<16x16xbf16>
    %cst_123 = arith.constant dense<0.000000e+00> : vector<16x16xf32>
    %183 = tpu.matmul %182, %180, %cst_123 {dimension_numbers = #tpu.dot_dimension_numbers<[1], [0], [0], [1], [0, 0, 1, 1], [], []>} : vector<16x16xbf16>, vector<16x16xbf16>, vector<16x16xf32> -> vector<16x16xf32>
    %184 = arith.addf %171, %183 : vector<16x16xf32>
    %185 = vector.extract_strided_slice %106 {offsets = [0, 3], sizes = [16, 13], strides = [1, 1]} : vector<16x16xbf16> to vector<16x13xbf16>
    %186 = vector.extract_strided_slice %106 {offsets = [0, 0], sizes = [16, 3], strides = [1, 1]} : vector<16x16xbf16> to vector<16x3xbf16>
    %187 = tpu.concatenate %185, %186 in 1 : vector<16x13xbf16>, vector<16x3xbf16> -> vector<16x16xbf16>
    %c12_i32 = arith.constant 12 : i32
    %188 = vector.broadcast %c12_i32 : i32 to vector<1x16xi32>
    %189 = arith.cmpi slt, %107, %188 : vector<1x16xi32>
    %c1_i32_124 = arith.constant 1 : i32
    %190 = vector.broadcast %c1_i32_124 : i32 to vector<1x16xi32>
    %191 = arith.cmpi sge, %108, %190 : vector<1x16xi32>
    %192 = arith.andi %189, %191 : vector<1x16xi1>
    %cst_125 = arith.constant 0.000000e+00 : bf16
    %193 = vector.broadcast %cst_125 : bf16 to vector<16x16xbf16>
    %194 = vector.shape_cast %192 : vector<1x16xi1> to vector<1x16xi1>
    %195 = vector.broadcast %194 : vector<1x16xi1> to vector<16x16xi1>
    %196 = arith.select %195, %187, %193 : vector<16x16xi1>, vector<16x16xbf16>
    %c6_126 = arith.constant 6 : index
    %c0_127 = arith.constant 0 : index
    %c0_128 = arith.constant 0 : index
    %197 = vector.load %arg3[%c6_126, %c0_127, %c0_128] : memref<9x16x16xbf16, #tpu.memory_space<vmem>>, vector<1x16x16xbf16>
    %198 = vector.shape_cast %197 : vector<1x16x16xbf16> to vector<16x16xbf16>
    %cst_129 = arith.constant dense<0.000000e+00> : vector<16x16xf32>
    %199 = tpu.matmul %198, %196, %cst_129 {dimension_numbers = #tpu.dot_dimension_numbers<[1], [0], [0], [1], [0, 0, 1, 1], [], []>} : vector<16x16xbf16>, vector<16x16xbf16>, vector<16x16xf32> -> vector<16x16xf32>
    %200 = arith.addf %184, %199 : vector<16x16xf32>
    %201 = vector.extract_strided_slice %106 {offsets = [0, 4], sizes = [16, 12], strides = [1, 1]} : vector<16x16xbf16> to vector<16x12xbf16>
    %202 = vector.extract_strided_slice %106 {offsets = [0, 0], sizes = [16, 4], strides = [1, 1]} : vector<16x16xbf16> to vector<16x4xbf16>
    %203 = tpu.concatenate %201, %202 in 1 : vector<16x12xbf16>, vector<16x4xbf16> -> vector<16x16xbf16>
    %c12_i32_130 = arith.constant 12 : i32
    %204 = vector.broadcast %c12_i32_130 : i32 to vector<1x16xi32>
    %205 = arith.cmpi slt, %107, %204 : vector<1x16xi32>
    %cst_131 = arith.constant 0.000000e+00 : bf16
    %206 = vector.broadcast %cst_131 : bf16 to vector<16x16xbf16>
    %207 = vector.shape_cast %205 : vector<1x16xi1> to vector<1x16xi1>
    %208 = vector.broadcast %207 : vector<1x16xi1> to vector<16x16xi1>
    %209 = arith.select %208, %203, %206 : vector<16x16xi1>, vector<16x16xbf16>
    %c7_132 = arith.constant 7 : index
    %c0_133 = arith.constant 0 : index
    %c0_134 = arith.constant 0 : index
    %210 = vector.load %arg3[%c7_132, %c0_133, %c0_134] : memref<9x16x16xbf16, #tpu.memory_space<vmem>>, vector<1x16x16xbf16>
    %211 = vector.shape_cast %210 : vector<1x16x16xbf16> to vector<16x16xbf16>
    %cst_135 = arith.constant dense<0.000000e+00> : vector<16x16xf32>
    %212 = tpu.matmul %211, %209, %cst_135 {dimension_numbers = #tpu.dot_dimension_numbers<[1], [0], [0], [1], [0, 0, 1, 1], [], []>} : vector<16x16xbf16>, vector<16x16xbf16>, vector<16x16xf32> -> vector<16x16xf32>
    %213 = arith.addf %200, %212 : vector<16x16xf32>
    %214 = vector.extract_strided_slice %106 {offsets = [0, 5], sizes = [16, 11], strides = [1, 1]} : vector<16x16xbf16> to vector<16x11xbf16>
    %215 = vector.extract_strided_slice %106 {offsets = [0, 0], sizes = [16, 5], strides = [1, 1]} : vector<16x16xbf16> to vector<16x5xbf16>
    %216 = tpu.concatenate %214, %215 in 1 : vector<16x11xbf16>, vector<16x5xbf16> -> vector<16x16xbf16>
    %c12_i32_136 = arith.constant 12 : i32
    %217 = vector.broadcast %c12_i32_136 : i32 to vector<1x16xi32>
    %218 = arith.cmpi slt, %107, %217 : vector<1x16xi32>
    %c2_i32_137 = arith.constant 2 : i32
    %219 = vector.broadcast %c2_i32_137 : i32 to vector<1x16xi32>
    %220 = arith.cmpi sle, %108, %219 : vector<1x16xi32>
    %221 = arith.andi %218, %220 : vector<1x16xi1>
    %cst_138 = arith.constant 0.000000e+00 : bf16
    %222 = vector.broadcast %cst_138 : bf16 to vector<16x16xbf16>
    %223 = vector.shape_cast %221 : vector<1x16xi1> to vector<1x16xi1>
    %224 = vector.broadcast %223 : vector<1x16xi1> to vector<16x16xi1>
    %225 = arith.select %224, %216, %222 : vector<16x16xi1>, vector<16x16xbf16>
    %c8_139 = arith.constant 8 : index
    %c0_140 = arith.constant 0 : index
    %c0_141 = arith.constant 0 : index
    %226 = vector.load %arg3[%c8_139, %c0_140, %c0_141] : memref<9x16x16xbf16, #tpu.memory_space<vmem>>, vector<1x16x16xbf16>
    %227 = vector.shape_cast %226 : vector<1x16x16xbf16> to vector<16x16xbf16>
    %cst_142 = arith.constant dense<0.000000e+00> : vector<16x16xf32>
    %228 = tpu.matmul %227, %225, %cst_142 {dimension_numbers = #tpu.dot_dimension_numbers<[1], [0], [0], [1], [0, 0, 1, 1], [], []>} : vector<16x16xbf16>, vector<16x16xbf16>, vector<16x16xf32> -> vector<16x16xf32>
    %229 = arith.addf %213, %228 : vector<16x16xf32>
    %cst_143 = arith.constant dense<0.000000e+00> : vector<16xf32>
    %230 = vector.multi_reduction <add>, %229, %cst_143 [1] : vector<16x16xf32> to vector<16xf32>
    %231 = vector.shape_cast %230 : vector<16xf32> to vector<16x1xf32>
    %232 = arith.mulf %229, %229 : vector<16x16xf32>
    %cst_144 = arith.constant dense<0.000000e+00> : vector<16xf32>
    %233 = vector.multi_reduction <add>, %232, %cst_144 [1] : vector<16x16xf32> to vector<16xf32>
    %234 = vector.shape_cast %233 : vector<16xf32> to vector<16x1xf32>
    %cst_145 = arith.constant 1.600000e+01 : f32
    %235 = vector.broadcast %cst_145 : f32 to vector<16x1xf32>
    %236 = arith.mulf %235, %61 : vector<16x1xf32>
    %237 = arith.addf %231, %236 : vector<16x1xf32>
    %cst_146 = arith.constant 2.000000e+00 : f32
    %238 = vector.broadcast %cst_146 : f32 to vector<16x1xf32>
    %239 = arith.mulf %238, %61 : vector<16x1xf32>
    %240 = arith.mulf %239, %231 : vector<16x1xf32>
    %241 = arith.addf %234, %240 : vector<16x1xf32>
    %242 = arith.mulf %61, %61 : vector<16x1xf32>
    %cst_147 = arith.constant 1.600000e+01 : f32
    %243 = vector.broadcast %cst_147 : f32 to vector<16x1xf32>
    %244 = arith.mulf %243, %242 : vector<16x1xf32>
    %245 = arith.addf %241, %244 : vector<16x1xf32>
    %246 = tpu.concatenate %237, %245 in 1 : vector<16x1xf32>, vector<16x1xf32> -> vector<16x2xf32>
    %cst_148 = arith.constant dense<0.000000e+00> : vector<16x2xf32>
    %247 = tpu.matmul %57, %246, %cst_148 {dimension_numbers = #tpu.dot_dimension_numbers<[1], [0], [0], [1], [0, 0, 1, 1], [], []>} : vector<16x16xf32>, vector<16x2xf32>, vector<16x2xf32> -> vector<16x2xf32>
    %248 = vector.extract_strided_slice %247 {offsets = [0, 0], sizes = [16, 1], strides = [1, 1]} : vector<16x2xf32> to vector<16x1xf32>
    %249 = vector.extract_strided_slice %247 {offsets = [0, 1], sizes = [16, 1], strides = [1, 1]} : vector<16x2xf32> to vector<16x1xf32>
    %250 = arith.mulf %248, %248 : vector<16x1xf32>
    %251 = arith.subf %249, %250 : vector<16x1xf32>
    %cst_149 = arith.constant 0.000000e+00 : f32
    %252 = vector.broadcast %cst_149 : f32 to vector<16x1xf32>
    %253 = arith.maximumf %251, %252 : vector<16x1xf32>
    %cst_150 = arith.constant 9.99999974E-6 : f32
    %254 = vector.broadcast %cst_150 : f32 to vector<16x1xf32>
    %255 = arith.addf %253, %254 : vector<16x1xf32>
    %256 = math.rsqrt %255 : vector<16x1xf32>
    %257 = arith.mulf %62, %256 : vector<16x1xf32>
    %258 = arith.subf %61, %248 : vector<16x1xf32>
    %259 = arith.mulf %258, %257 : vector<16x1xf32>
    %260 = arith.addf %63, %259 : vector<16x1xf32>
    %261 = vector.broadcast %257 : vector<16x1xf32> to vector<16x16xf32>
    %262 = arith.mulf %229, %261 : vector<16x16xf32>
    %263 = vector.broadcast %260 : vector<16x1xf32> to vector<16x16xf32>
    %264 = arith.addf %262, %263 : vector<16x16xf32>
    %265 = arith.negf %264 : vector<16x16xf32>
    %266 = math.exp %265 : vector<16x16xf32>
    %cst_151 = arith.constant 1.000000e+00 : f32
    %267 = vector.broadcast %cst_151 : f32 to vector<16x16xf32>
    %268 = arith.addf %267, %266 : vector<16x16xf32>
    %269 = arith.divf %267, %268 : vector<16x16xf32>
    %270 = arith.mulf %264, %269 : vector<16x16xf32>
    %271 = arith.addf %270, %56 : vector<16x16xf32>
    %272 = vector.broadcast %64 : vector<16x1xf32> to vector<16x16xf32>
    %273 = arith.addf %271, %272 : vector<16x16xf32>
    %274 = arith.truncf %273 : vector<16x16xf32> to vector<16x16xbf16>
    %c0_152 = arith.constant 0 : index
    %c0_153 = arith.constant 0 : index
    %c0_154 = arith.constant 0 : index
    %275 = vector.load %arg7[%c0_152, %c0_153, %c0_154] : memref<1x16x16xbf16, #tpu.memory_space<vmem>>, vector<1x16x16xbf16>
    %276 = vector.shape_cast %275 : vector<1x16x16xbf16> to vector<16x16xbf16>
    %277 = vector.shape_cast %274 : vector<16x16xbf16> to vector<1x16x16xbf16>
    tpu.vector_store %arg7[%c0_152, %c0_153, %c0_154], %277 {strides = array<i32>} : memref<1x16x16xbf16, #tpu.memory_space<vmem>>, vector<1x16x16xbf16>,
    return
  }
  func.func @transform_0(%arg0: i32) -> (i32, i32, i32, i32) {
    %c0_i32 = arith.constant 0 : i32
    %c0_i32_0 = arith.constant 0 : i32
    %c0_i32_1 = arith.constant 0 : i32
    %c0_i32_2 = arith.constant 0 : i32
    return %arg0, %c0_i32, %c0_i32_0, %c0_i32_1 : i32, i32, i32, i32
  }
  func.func @transform_1(%arg0: i32) -> (i32, i32, i32) {
    %c0_i32 = arith.constant 0 : i32
    %c0_i32_0 = arith.constant 0 : i32
    %c0_i32_1 = arith.constant 0 : i32
    %c0_i32_2 = arith.constant 0 : i32
    return %c0_i32, %c0_i32_0, %c0_i32_1 : i32, i32, i32
  }
  func.func @transform_2(%arg0: i32) -> (i32, i32, i32) {
    %c0_i32 = arith.constant 0 : i32
    %c0_i32_0 = arith.constant 0 : i32
    %c0_i32_1 = arith.constant 0 : i32
    %c0_i32_2 = arith.constant 0 : i32
    return %c0_i32, %c0_i32_0, %c0_i32_1 : i32, i32, i32
  }
  func.func @transform_3(%arg0: i32) -> (i32, i32) {
    %c0_i32 = arith.constant 0 : i32
    %c0_i32_0 = arith.constant 0 : i32
    %c0_i32_1 = arith.constant 0 : i32
    return %c0_i32, %c0_i32_0 : i32, i32
  }
  func.func @transform_4(%arg0: i32) -> (i32, i32) {
    %c0_i32 = arith.constant 0 : i32
    %c0_i32_0 = arith.constant 0 : i32
    %c0_i32_1 = arith.constant 0 : i32
    return %c0_i32, %c0_i32_0 : i32, i32
  }
  func.func @transform_5(%arg0: i32) -> (i32, i32) {
    %c0_i32 = arith.constant 0 : i32
    %c0_i32_0 = arith.constant 0 : i32
    %c0_i32_1 = arith.constant 0 : i32
    return %c0_i32, %c0_i32_0 : i32, i32
  }
  func.func @transform_6(%arg0: i32) -> (i32, i32, i32) {
    %c0_i32 = arith.constant 0 : i32
    %c0_i32_0 = arith.constant 0 : i32
    %c0_i32_1 = arith.constant 0 : i32
    return %arg0, %c0_i32, %c0_i32_0 : i32, i32, i32
  }
}

</mosaic_0001>

<llo_original>
// kernel: extractor_forward.2
$region0: #{extractor_forward.2}
  #allocation0 [shape = 'u32[]', space=smem, size = 0x4, offset = 0x4, fixed_abs, tag = 'smem constant byte address 0x4 - core index']
  #allocation1 [shape = 'u32[72,128]{1,0:T(1,128)}', space=vmem, size = 0x9000, scoped, tag = 'internal scratch']
  %s0 = inlined_call_operand.vmem [shape: bf16[2,6,4,72], index: 0, kind: input, shape index: {}]
  %s1 = inlined_call_operand.vmem [shape: bf16[9,16,4], index: 1, kind: input, shape index: {}]
  %s2 = inlined_call_operand.vmem [shape: bf16[9,8,8], index: 2, kind: input, shape index: {}]
  %s3 = inlined_call_operand.vmem [shape: f32[8,8], index: 3, kind: input, shape index: {}]
  %s4 = inlined_call_operand.vmem [shape: s32[1,64], index: 4, kind: input, shape index: {}]
  %s5 = inlined_call_operand.vmem [shape: f32[8,7], index: 5, kind: input, shape index: {}]
  %s6 = inlined_call_operand.vmem [shape: bf16[2,8,64], index: 6, kind: output, shape index: {}]
  %s7 = sld [smem:[#allocation0]]
  $region57: #{extractor_forward.2} parent=0
    _
  %s9 = ssub.s32 1, %s7
  %s10 = scalar_select 0, %s9, %s7
  loop: start=0, step=1, limit=4
  $region2: #{extractor_forward.2} parent=0 // loop_pre_header
    _
  $region3: #{extractor_forward.2} parent=0 // loop_header
    %s12 = sphi 0, %s16
    %p13 = scmp.ge.s32.totalorder %s12, 4
    %s22 = sphi 0, %s24
    %s25 = sphi 0, %s22
    %s26 = sphi 0, %s25
    %s42 = sphi 0, %s26
    %s46 = sphi 0, %s46
    %s48 = sphi 0, %s46
    %s49 = sphi 0, %s48
    %s63 = sphi 0, %s49
    %s67 = sphi 0, %s67
    %s69 = sphi 0, %s67
    %s70 = sphi 0, %s69
    %s84 = sphi 0, %s70
    %s88 = sphi 0, %s88
    %s90 = sphi 0, %s88
    %s91 = sphi 0, %s90
    %s105 = sphi 0, %s91
    %s109 = sphi 0, %s109
    %s111 = sphi 0, %s109
    %s112 = sphi 0, %s111
    %s126 = sphi 0, %s112
    %s130 = sphi 0, %s130
    %s132 = sphi 0, %s130
    %s133 = sphi 0, %s132
    %s147 = sphi 0, %s133
    %s153 = sphi 0, %s155
    %s156 = sphi 0, %s153
    %s157 = sphi 0, %s156
    %s173 = sphi 0, %s157
  $region4: #{extractor_forward.2} parent=0 // loop_header_branch
    %15 = sbr.rel (%p13) target = $region8
  $region5: #{extractor_forward.2} parent=0 // loop_body
    %s17 = ssub.s32 %s12, 1
    %s18 = ssub.s32 %s12, 2
    %s19 = sadd.s32 %s12, 1
    %s20 = ssub.s32 %s12, %s19
    %p21 = scmp.eq.s32.totalorder %s20, 0
    %s23 = sadd.s32 %s22, 1
    %s24 = scalar_select %p21, %s22, %s23
    %p27 = pneg %p21
    %p28 = scmp.eq.s32.totalorder %s12, 1
    %p29 = por %p27, %p28
    %p30 = scmp.ne.s32.totalorder %s22, %s25
    %p31 = scmp.eq.s32.totalorder %s12, 0
    %p32 = por %p30, %p31
    %p33 = scmp.ne.s32.totalorder %s22, %s25
    %p34 = scmp.eq.s32.totalorder %s17, 1
    %p35 = por %p33, %p34
    %p36 = scmp.ne.s32.totalorder %s25, %s26
    %p37 = scmp.eq.s32.totalorder %s17, 0
    %p38 = por %p36, %p37
    %p39 = scmp.ne.s32.totalorder %s25, %s26
    %p40 = scmp.eq.s32.totalorder %s18, 1
    %p41 = por %p39, %p40
    %p43 = scmp.ne.s32.totalorder %s26, %s42
    %p44 = scmp.eq.s32.totalorder %s18, 0
    %p45 = por %p43, %p44
    %s47 = sadd.s32 %s46, 1
    %p50 = scmp.eq.s32.totalorder %s12, 1
    %p51 = scmp.ne.s32.totalorder %s46, %s48
    %p52 = scmp.eq.s32.totalorder %s12, 0
    %p53 = por %p51, %p52
    %p54 = scmp.ne.s32.totalorder %s46, %s48
    %p55 = scmp.eq.s32.totalorder %s17, 1
    %p56 = por %p54, %p55
    %p57 = scmp.ne.s32.totalorder %s48, %s49
    %p58 = scmp.eq.s32.totalorder %s17, 0
    %p59 = por %p57, %p58
    %p60 = scmp.ne.s32.totalorder %s48, %s49
    %p61 = scmp.eq.s32.totalorder %s18, 1
    %p62 = por %p60, %p61
    %p64 = scmp.ne.s32.totalorder %s49, %s63
    %p65 = scmp.eq.s32.totalorder %s18, 0
    %p66 = por %p64, %p65
    %s68 = sadd.s32 %s67, 1
    %p71 = scmp.eq.s32.totalorder %s12, 1
    %p72 = scmp.ne.s32.totalorder %s67, %s69
    %p73 = scmp.eq.s32.totalorder %s12, 0
    %p74 = por %p72, %p73
    %p75 = scmp.ne.s32.totalorder %s67, %s69
    %p76 = scmp.eq.s32.totalorder %s17, 1
    %p77 = por %p75, %p76
    %p78 = scmp.ne.s32.totalorder %s69, %s70
    %p79 = scmp.eq.s32.totalorder %s17, 0
    %p80 = por %p78, %p79
    %p81 = scmp.ne.s32.totalorder %s69, %s70
    %p82 = scmp.eq.s32.totalorder %s18, 1
    %p83 = por %p81, %p82
    %p85 = scmp.ne.s32.totalorder %s70, %s84
    %p86 = scmp.eq.s32.totalorder %s18, 0
    %p87 = por %p85, %p86
    %s89 = sadd.s32 %s88, 1
    %p92 = scmp.eq.s32.totalorder %s12, 1
    %p93 = scmp.ne.s32.totalorder %s88, %s90
    %p94 = scmp.eq.s32.totalorder %s12, 0
    %p95 = por %p93, %p94
    %p96 = scmp.ne.s32.totalorder %s88, %s90
    %p97 = scmp.eq.s32.totalorder %s17, 1
    %p98 = por %p96, %p97
    %p99 = scmp.ne.s32.totalorder %s90, %s91
    %p100 = scmp.eq.s32.totalorder %s17, 0
    %p101 = por %p99, %p100
    %p102 = scmp.ne.s32.totalorder %s90, %s91
    %p103 = scmp.eq.s32.totalorder %s18, 1
    %p104 = por %p102, %p103
    %p106 = scmp.ne.s32.totalorder %s91, %s105
    %p107 = scmp.eq.s32.totalorder %s18, 0
    %p108 = por %p106, %p107
    %s110 = sadd.s32 %s109, 1
    %p113 = scmp.eq.s32.totalorder %s12, 1
    %p114 = scmp.ne.s32.totalorder %s109, %s111
    %p115 = scmp.eq.s32.totalorder %s12, 0
    %p116 = por %p114, %p115
    %p117 = scmp.ne.s32.totalorder %s109, %s111
    %p118 = scmp.eq.s32.totalorder %s17, 1
    %p119 = por %p117, %p118
    %p120 = scmp.ne.s32.totalorder %s111, %s112
    %p121 = scmp.eq.s32.totalorder %s17, 0
    %p122 = por %p120, %p121
    %p123 = scmp.ne.s32.totalorder %s111, %s112
    %p124 = scmp.eq.s32.totalorder %s18, 1
    %p125 = por %p123, %p124
    %p127 = scmp.ne.s32.totalorder %s112, %s126
    %p128 = scmp.eq.s32.totalorder %s18, 0
    %p129 = por %p127, %p128
    %s131 = sadd.s32 %s130, 1
    %p134 = scmp.eq.s32.totalorder %s12, 1
    %p135 = scmp.ne.s32.totalorder %s130, %s132
    %p136 = scmp.eq.s32.totalorder %s12, 0
    %p137 = por %p135, %p136
    %p138 = scmp.ne.s32.totalorder %s130, %s132
    %p139 = scmp.eq.s32.totalorder %s17, 1
    %p140 = por %p138, %p139
    %p141 = scmp.ne.s32.totalorder %s132, %s133
    %p142 = scmp.eq.s32.totalorder %s17, 0
    %p143 = por %p141, %p142
    %p144 = scmp.ne.s32.totalorder %s132, %s133
    %p145 = scmp.eq.s32.totalorder %s18, 1
    %p146 = por %p144, %p145
    %p148 = scmp.ne.s32.totalorder %s133, %s147
    %p149 = scmp.eq.s32.totalorder %s18, 0
    %p150 = por %p148, %p149
    %s151 = ssub.s32 %s12, %s19
    %p152 = scmp.eq.s32.totalorder %s151, 0
    %s154 = sadd.s32 %s153, 1
    %s155 = scalar_select %p152, %s153, %s154
    %p158 = pneg %p152
    %p159 = scmp.eq.s32.totalorder %s12, 1
    %p160 = por %p158, %p159
    %p161 = scmp.ne.s32.totalorder %s153, %s156
    %p162 = scmp.eq.s32.totalorder %s12, 0
    %p163 = por %p161, %p162
    %p164 = scmp.ne.s32.totalorder %s153, %s156
    %p165 = scmp.eq.s32.totalorder %s17, 1
    %p166 = por %p164, %p165
    %p167 = scmp.ne.s32.totalorder %s156, %s157
    %p168 = scmp.eq.s32.totalorder %s17, 0
    %p169 = por %p167, %p168
    %p170 = scmp.ne.s32.totalorder %s156, %s157
    %p171 = scmp.eq.s32.totalorder %s18, 1
    %p172 = por %p170, %p171
    %p174 = scmp.ne.s32.totalorder %s157, %s173
    %p175 = scmp.eq.s32.totalorder %s18, 0
    %p176 = por %p174, %p175
    %p177 = scmp.le.s32.totalorder 1, %s12
    %p178 = scmp.lt.s32.totalorder %s12, 3
    %p179 = pnand %p177, %p178
    %p180 = pneg %p179
    // Predicated region
    $region9: #{extractor_forward.2} parent=5 // pred_check
      _
    $region10: #{extractor_forward.2} parent=5 // pred_check_branch
      %182 = sbr.rel (%p179) target = $region12
    $region11: #{extractor_forward.2} parent=5 // pred_region
      %s183 = ssub.s32 %s12, 1
      // Predicated region
      $region13: #{extractor_forward.2} parent=11 // pred_check
        %p184 = pneg %p59
      $region14: #{extractor_forward.2} parent=11 // pred_check_branch
        %186 = sbr.rel (%p184) target = $region16
      $region15: #{extractor_forward.2} parent=11 // pred_region
        _
      $region16: #{extractor_forward.2} parent=11 // pred_fallthru
        _
      // Predicated region
      $region17: #{extractor_forward.2} parent=11 // pred_check
        %p187 = pneg %p80
      $region18: #{extractor_forward.2} parent=11 // pred_check_branch
        %189 = sbr.rel (%p187) target = $region20
      $region19: #{extractor_forward.2} parent=11 // pred_region
        _
      $region20: #{extractor_forward.2} parent=11 // pred_fallthru
        _
      // Predicated region
      $region21: #{extractor_forward.2} parent=11 // pred_check
        %p190 = pneg %p101
      $region22: #{extractor_forward.2} parent=11 // pred_check_branch
        %192 = sbr.rel (%p190) target = $region24
      $region23: #{extractor_forward.2} parent=11 // pred_region
        _
      $region24: #{extractor_forward.2} parent=11 // pred_fallthru
        _
      // Predicated region
      $region25: #{extractor_forward.2} parent=11 // pred_check
        %p193 = pneg %p122
      $region26: #{extractor_forward.2} parent=11 // pred_check_branch
        %195 = sbr.rel (%p193) target = $region28
      $region27: #{extractor_forward.2} parent=11 // pred_region
        _
      $region28: #{extractor_forward.2} parent=11 // pred_fallthru
        _
      // Predicated region
      $region29: #{extractor_forward.2} parent=11 // pred_check
        %p196 = pneg %p143
      $region30: #{extractor_forward.2} parent=11 // pred_check_branch
        %198 = sbr.rel (%p196) target = $region32
      $region31: #{extractor_forward.2} parent=11 // pred_region
        _
      $region32: #{extractor_forward.2} parent=11 // pred_fallthru
        _
    $region12: #{extractor_forward.2} parent=5 // pred_fallthru
      _
    %p199 = scmp.lt.s32.totalorder %s12, 2
    // Predicated region
    $region33: #{extractor_forward.2} parent=5 // pred_check
      %p200 = pneg %p199
    $region34: #{extractor_forward.2} parent=5 // pred_check_branch
      %202 = sbr.rel (%p200) target = $region36
    $region35: #{extractor_forward.2} parent=5 // pred_region
      // Predicated region
      $region37: #{extractor_forward.2} parent=35 // pred_check
        %p203 = pneg %p32
      $region38: #{extractor_forward.2} parent=35 // pred_check_branch
        %205 = sbr.rel (%p203) target = $region40
      $region39: #{extractor_forward.2} parent=35 // pred_region
        %p206 = scmp.lt.s32.totalorder %s12, 1
        %s207 = scalar_select %p206, %s12, 1
        %s208 = smul.addr %s207, 6
        %s209 = smul.addr %s208, 2
        %s210 = scalar_lea.vmem %s0, %s209
      $region40: #{extractor_forward.2} parent=35 // pred_fallthru
        _
    $region36: #{extractor_forward.2} parent=5 // pred_fallthru
      _
    %p211 = scmp.le.s32.totalorder 1, %s12
    %p212 = scmp.lt.s32.totalorder %s12, 3
    %p213 = pnand %p211, %p212
    %p214 = pneg %p213
    // Predicated region
    $region41: #{extractor_forward.2} parent=5 // pred_check
      _
    $region42: #{extractor_forward.2} parent=5 // pred_check_branch
      %216 = sbr.rel (%p213) target = $region44
    $region43: #{extractor_forward.2} parent=5 // pred_region
      %s217 = ssub.s32 %s12, 1
      %p218 = scmp.lt.s32.totalorder %s17, 1
      %s219 = scalar_select %p218, %s17, 1
      %s220 = smul.addr %s219, 6
      %s221 = smul.addr %s220, 2
      %s222 = scalar_lea.vmem %s0, %s221
      %p223 = pneg %p38
      %p224 = pneg %p35
      %p225 = pneg %p59
      %p226 = pneg %p56
      %p227 = pneg %p80
      %p228 = pneg %p77
      %p229 = pneg %p101
      %p230 = pneg %p98
      %p231 = pneg %p122
      %p232 = pneg %p119
      %p233 = pneg %p143
      %p234 = pneg %p140
      %p235 = pneg %p169
      %p236 = pneg %p166
      %p237 = scmp.lt.s32.totalorder %s17, 1
      %s238 = scalar_select %p237, %s17, 1
      %s239 = smul.addr %s238, 4
      %s240 = scalar_lea.vmem %s6, %s239
      %p241 = scmp.lt.s32.totalorder %s17, 1
      %s242 = scalar_select %p241, %s17, 1
      %s243 = smul.addr %s242, 6
      %s244 = smul.addr %s243, 2
      %s245 = scalar_lea.vmem %s0, %s244
      %p246 = scmp.lt.s32.totalorder %s17, 1
      %s247 = scalar_select %p246, %s17, 1
      %s248 = smul.addr %s247, 4
      %s249 = scalar_lea.vmem %s6, %s248
      %v251 = vld [vmem:[%s245] sm:$0x3]
      %v252 = vld [vmem:[%s1] sm:$0xf]
      %v253 = vld [vmem:[%s1 + $0x4] sm:$0xf]
      %s254 = scalar_lea.vmem %s245, 2
      %v255 = vld [vmem:[%s254] sm:$0x3]
      %s256 = scalar_lea.vmem %s1, 8
      %v257 = vld [vmem:[%s256] sm:$0xf]
      %v258 = vld [vmem:[%s256 + $0x4] sm:$0xf]
      %v261 = vunpack.c.l.b16 %v257
      %v262 = vunpack.c.l.b16 %v258
      %v263 = vpack.c.b16 %v262, %v261
      %vm264 = vcmask 31744
      %v266 = vsel %vm264, %v263, 0
      %vm268 = vcmask 1041408
      %v270 = vsel %vm268, %v255, 0
      %272 = vmatpush.bf16.msra.mxu0 0
      %273 = vmatpush.bf16.msra.mxu0 0
      %274 = vmatpush.bf16.msra.mxu0 0
      %275 = vmatpush.bf16.msra.mxu0 0
      %276 = vmatpush.bf16.msra.mxu0 0
      %277 = vmatpush.bf16.msra.mxu0 0
      %278 = vmatpush.bf16.msra.mxu0 0
      %279 = vmatpush.bf16.msra.mxu0 %v270
      %280 = vmatmul.bf16.gmra.mxu0 %v266
      %v281 = vpop.f32.mrf.mxu0
      %v282 = vadd.f32 0.0, %v281
      %v283 = vpop.f32.mrf.mxu0
      %v284 = vadd.f32 0.0, %v283
      %285 = vdwg.mxu0
      %v288 = vunpack.c.l.b16 %v252
      %v289 = vunpack.c.l.b16 %v253
      %v290 = vpack.c.b16 %v289, %v288
      %v292 = vsel %vm264, %v290, 0
      %v295 = vsel %vm268, %v251, 0
      %297 = vmatpush.bf16.msra.mxu0 0
      %298 = vmatpush.bf16.msra.mxu0 0
      %299 = vmatpush.bf16.msra.mxu0 0
      %300 = vmatpush.bf16.msra.mxu0 0
      %301 = vmatpush.bf16.msra.mxu0 0
      %302 = vmatpush.bf16.msra.mxu0 0
      %303 = vmatpush.bf16.msra.mxu0 0
      %304 = vmatpush.bf16.msra.mxu0 %v295
      %305 = vmatmul.bf16.gmra.mxu0 %v292
      %v306 = vpop.f32.mrf.mxu0
      %v307 = vadd.f32 %v282, %v306
      %v308 = vpop.f32.mrf.mxu0
      %v309 = vadd.f32 %v284, %v308
      %310 = vdwg.mxu0
      %s311 = scalar_lea.vmem %s245, 4
      %v312 = vld [vmem:[%s311] sm:$0x3]
      %s313 = scalar_lea.vmem %s1, 16
      %v314 = vld [vmem:[%s313] sm:$0xf]
      %v315 = vld [vmem:[%s313 + $0x4] sm:$0xf]
      %v318 = vunpack.c.l.b16 %v314
      %v319 = vunpack.c.l.b16 %v315
      %v320 = vpack.c.b16 %v319, %v318
      %v322 = vsel %vm264, %v320, 0
      %v325 = vsel %vm268, %v312, 0
      %327 = vmatpush.bf16.msra.mxu0 0
      %328 = vmatpush.bf16.msra.mxu0 0
      %329 = vmatpush.bf16.msra.mxu0 0
      %330 = vmatpush.bf16.msra.mxu0 0
      %331 = vmatpush.bf16.msra.mxu0 0
      %332 = vmatpush.bf16.msra.mxu0 0
      %333 = vmatpush.bf16.msra.mxu0 0
      %334 = vmatpush.bf16.msra.mxu0 %v325
      %335 = vmatmul.bf16.gmra.mxu0 %v322
      %v336 = vpop.f32.mrf.mxu0
      %v337 = vadd.f32 0.0, %v336
      %v338 = vpop.f32.mrf.mxu0
      %v339 = vadd.f32 0.0, %v338
      %340 = vdwg.mxu0
      %v341 = vadd.f32 %v307, %v337
      %v342 = vadd.f32 %v309, %v339
      %s343 = scalar_lea.vmem %s245, 6
      %v344 = vld [vmem:[%s343] sm:$0x3]
      %s345 = scalar_lea.vmem %s1, 24
      %v346 = vld [vmem:[%s345] sm:$0xf]
      %v347 = vld [vmem:[%s345 + $0x4] sm:$0xf]
      %v350 = vunpack.c.l.b16 %v346
      %v351 = vunpack.c.l.b16 %v347
      %v352 = vpack.c.b16 %v351, %v350
      %v354 = vsel %vm264, %v352, 0
      %v357 = vsel %vm268, %v344, 0
      %359 = vmatpush.bf16.msra.mxu0 0
      %360 = vmatpush.bf16.msra.mxu0 0
      %361 = vmatpush.bf16.msra.mxu0 0
      %362 = vmatpush.bf16.msra.mxu0 0
      %363 = vmatpush.bf16.msra.mxu0 0
      %364 = vmatpush.bf16.msra.mxu0 0
      %365 = vmatpush.bf16.msra.mxu0 0
      %366 = vmatpush.bf16.msra.mxu0 %v357
      %367 = vmatmul.bf16.gmra.mxu0 %v354
      %v368 = vpop.f32.mrf.mxu0
      %v369 = vadd.f32 0.0, %v368
      %v370 = vpop.f32.mrf.mxu0
      %v371 = vadd.f32 0.0, %v370
      %372 = vdwg.mxu0
      %v373 = vadd.f32 %v341, %v369
      %v374 = vadd.f32 %v342, %v371
      %s375 = scalar_lea.vmem %s245, 8
      %v376 = vld [vmem:[%s375] sm:$0x3]
      %s377 = scalar_lea.vmem %s1, 32
      %v378 = vld [vmem:[%s377] sm:$0xf]
      %v379 = vld [vmem:[%s377 + $0x4] sm:$0xf]
      %v382 = vunpack.c.l.b16 %v378
      %v383 = vunpack.c.l.b16 %v379
      %v384 = vpack.c.b16 %v383, %v382
      %v386 = vsel %vm264, %v384, 0
      %v389 = vsel %vm268, %v376, 0
      %391 = vmatpush.bf16.msra.mxu0 0
      %392 = vmatpush.bf16.msra.mxu0 0
      %393 = vmatpush.bf16.msra.mxu0 0
      %394 = vmatpush.bf16.msra.mxu0 0
      %395 = vmatpush.bf16.msra.mxu0 0
      %396 = vmatpush.bf16.msra.mxu0 0
      %397 = vmatpush.bf16.msra.mxu0 0
      %398 = vmatpush.bf16.msra.mxu0 %v389
      %399 = vmatmul.bf16.gmra.mxu0 %v386
      %v400 = vpop.f32.mrf.mxu0
      %v401 = vadd.f32 0.0, %v400
      %v402 = vpop.f32.mrf.mxu0
      %v403 = vadd.f32 0.0, %v402
      %404 = vdwg.mxu0
      %v405 = vadd.f32 %v373, %v401
      %v406 = vadd.f32 %v374, %v403
      %s407 = scalar_lea.vmem %s245, 10
      %v408 = vld [vmem:[%s407] sm:$0x3]
      %s409 = scalar_lea.vmem %s1, 40
      %v410 = vld [vmem:[%s409] sm:$0xf]
      %v411 = vld [vmem:[%s409 + $0x4] sm:$0xf]
      %v414 = vunpack.c.l.b16 %v410
      %v415 = vunpack.c.l.b16 %v411
      %v416 = vpack.c.b16 %v415, %v414
      %v418 = vsel %vm264, %v416, 0
      %v421 = vsel %vm268, %v408, 0
      %423 = vmatpush.bf16.msra.mxu0 0
      %424 = vmatpush.bf16.msra.mxu0 0
      %425 = vmatpush.bf16.msra.mxu0 0
      %426 = vmatpush.bf16.msra.mxu0 0
      %427 = vmatpush.bf16.msra.mxu0 0
      %428 = vmatpush.bf16.msra.mxu0 0
      %429 = vmatpush.bf16.msra.mxu0 0
      %430 = vmatpush.bf16.msra.mxu0 %v421
      %431 = vmatmul.bf16.gmra.mxu0 %v418
      %v432 = vpop.f32.mrf.mxu0
      %v433 = vadd.f32 0.0, %v432
      %v434 = vpop.f32.mrf.mxu0
      %v435 = vadd.f32 0.0, %v434
      %436 = vdwg.mxu0
      %v437 = vadd.f32 %v405, %v433
      %v438 = vadd.f32 %v406, %v435
      %s439 = scalar_lea.vmem %s1, 48
      %v440 = vld [vmem:[%s439] sm:$0xf]
      %v441 = vld [vmem:[%s439 + $0x4] sm:$0xf]
      %v444 = vunpack.c.l.b16 %v440
      %v445 = vunpack.c.l.b16 %v441
      %v446 = vpack.c.b16 %v445, %v444
      %447 = vst [vmem:[#allocation1] ss:$4 sm:$0xff] %v251
      %v448 = vld.sshfl [vmem:[#allocation1] sm:$0xff pattern:$0x73625140]
      %450 = vrot.lane.b32.xlu0 %v448, 120
      %v451 = vpop.permute.xlu0 %450
      %v453 = vsel %vm264, %v446, 0
      %v456 = vsel %vm268, %v451, 0
      %458 = vmatpush.bf16.msra.mxu0 0
      %459 = vmatpush.bf16.msra.mxu0 0
      %460 = vmatpush.bf16.msra.mxu0 0
      %461 = vmatpush.bf16.msra.mxu0 0
      %462 = vmatpush.bf16.msra.mxu0 0
      %463 = vmatpush.bf16.msra.mxu0 0
      %464 = vmatpush.bf16.msra.mxu0 0
      %465 = vmatpush.bf16.msra.mxu0 %v456
      %466 = vmatmul.bf16.gmra.mxu0 %v453
      %v467 = vpop.f32.mrf.mxu0
      %v468 = vadd.f32 0.0, %v467
      %v469 = vpop.f32.mrf.mxu0
      %v470 = vadd.f32 0.0, %v469
      %471 = vdwg.mxu0
      %v472 = vadd.f32 %v437, %v468
      %v473 = vadd.f32 %v438, %v470
      %v474 = vld [vmem:[%s254] sm:$0x3]
      %s475 = scalar_lea.vmem %s1, 56
      %v476 = vld [vmem:[%s475] sm:$0xf]
      %v477 = vld [vmem:[%s475 + $0x4] sm:$0xf]
      %v480 = vunpack.c.l.b16 %v476
      %v481 = vunpack.c.l.b16 %v477
      %v482 = vpack.c.b16 %v481, %v480
      %484 = vst [vmem:[#allocation1] ss:$4 sm:$0xff] %v474
      %v485 = vld.sshfl [vmem:[#allocation1] sm:$0xff pattern:$0x73625140]
      %487 = vrot.lane.b32.xlu0 %v485, 120
      %v488 = vpop.permute.xlu0 %487
      %v490 = vsel %vm264, %v482, 0
      %v493 = vsel %vm268, %v488, 0
      %495 = vmatpush.bf16.msra.mxu0 0
      %496 = vmatpush.bf16.msra.mxu0 0
      %497 = vmatpush.bf16.msra.mxu0 0
      %498 = vmatpush.bf16.msra.mxu0 0
      %499 = vmatpush.bf16.msra.mxu0 0
      %500 = vmatpush.bf16.msra.mxu0 0
      %501 = vmatpush.bf16.msra.mxu0 0
      %502 = vmatpush.bf16.msra.mxu0 %v493
      %503 = vmatmul.bf16.gmra.mxu0 %v490
      %v504 = vpop.f32.mrf.mxu0
      %v505 = vadd.f32 0.0, %v504
      %v506 = vpop.f32.mrf.mxu0
      %v507 = vadd.f32 0.0, %v506
      %508 = vdwg.mxu0
      %v509 = vadd.f32 %v472, %v505
      %v510 = vadd.f32 %v473, %v507
      %v511 = vld [vmem:[%s311] sm:$0x3]
      %s512 = scalar_lea.vmem %s1, 64
      %v513 = vld [vmem:[%s512] sm:$0xf]
      %v514 = vld [vmem:[%s512 + $0x4] sm:$0xf]
      %v517 = vunpack.c.l.b16 %v513
      %v518 = vunpack.c.l.b16 %v514
      %v519 = vpack.c.b16 %v518, %v517
      %521 = vst [vmem:[#allocation1] ss:$4 sm:$0xff] %v511
      %v522 = vld.sshfl [vmem:[#allocation1] sm:$0xff pattern:$0x73625140]
      %524 = vrot.lane.b32.xlu0 %v522, 120
      %v525 = vpop.permute.xlu0 %524
      %v527 = vsel %vm264, %v519, 0
      %v530 = vsel %vm268, %v525, 0
      %532 = vmatpush.bf16.msra.mxu0 0
      %533 = vmatpush.bf16.msra.mxu0 0
      %534 = vmatpush.bf16.msra.mxu0 0
      %535 = vmatpush.bf16.msra.mxu0 0
      %536 = vmatpush.bf16.msra.mxu0 0
      %537 = vmatpush.bf16.msra.mxu0 0
      %538 = vmatpush.bf16.msra.mxu0 0
      %539 = vmatpush.bf16.msra.mxu0 %v530
      %540 = vmatmul.bf16.gmra.mxu0 %v527
      %v541 = vpop.f32.mrf.mxu0
      %v542 = vadd.f32 0.0, %v541
      %v543 = vpop.f32.mrf.mxu0
      %v544 = vadd.f32 0.0, %v543
      %545 = vdwg.mxu0
      %v546 = vadd.f32 %v509, %v542
      %v547 = vadd.f32 %v510, %v544
      %v548 = vld [vmem:[%s3] sm:$0xff]
      %v549 = vld [vmem:[%s5] sm:$0xff]
      %vm550 = vcmask 523264
      %v551 = vsel %vm550, %v546, 0.0
      %552 = vadd.xlane.f32.xlu0 %v551
      %v553 = vpop.xlane.xlu0 %552
      %v554 = vmul.f32 %v546, %v546
      %v555 = vsel %vm550, %v554, 0.0
      %556 = vadd.xlane.f32.xlu0 %v555
      %v557 = vpop.xlane.xlu0 %556
      %v558 = vmul.f32 %v549, 64.0
      %v559 = vadd.f32 %v553, %v558
      %v560 = vmul.f32 %v549, 2.0
      %v561 = vmul.f32 %v560, %v553
      %v562 = vadd.f32 %v557, %v561
      %v563 = vmul.f32 %v549, %v549
      %v564 = vmul.f32 %v563, 64.0
      %v565 = vadd.f32 %v562, %v564
      %567 = vrot.lane.b32.xlu0 %v565, 1
      %v568 = vpop.permute.xlu0 %567
      %vm570 = vcmask 7168
      %v571 = vsel %vm570, %v559, %v568
      %vm572 = vcmask 64512
      %v574 = vsel %vm572, %v548, 0
      %576 = vmatpush.msra.mxu0 0.0
      %577 = vmatpush.msra.mxu0 0.0
      %578 = vmatpush.msra.mxu0 0.0
      %579 = vmatpush.msra.mxu0 0.0
      %580 = vmatpush.msra.mxu0 0.0
      %581 = vmatpush.msra.mxu0 0.0
      %582 = vmatpush.msra.mxu0 0.0
      %583 = vmatpush.msra.mxu0 0.0
      %584 = vmatpush.msra.mxu0 0.0
      %585 = vmatpush.msra.mxu0 0.0
      %586 = vmatpush.msra.mxu0 0.0
      %587 = vmatpush.msra.mxu0 0.0
      %588 = vmatpush.msra.mxu0 0.0
      %589 = vmatpush.msra.mxu0 0.0
      %590 = vmatpush.msra.mxu0 0.0
      %591 = vmatpush.msra.mxu0 %v571
      %592 = vmatmul.f32.gmra.mxu0 %v574
      %v593 = vpop.f32.mrf.mxu0
      %v594 = vadd.f32 0.0, %v593
      %595 = vdwg.mxu0
      %v596 = vmul.f32 %v594, %v594
      %598 = vrot.lane.b32.xlu0 %v596, 1
      %v599 = vpop.permute.xlu0 %598
      %v601 = vsub.f32 %v594, %v599
      %v602 = vmax.f32 %v601, 0.0
      %v603 = vadd.f32 %v602, 1e-05
      %v604 = vrsqrt.pop %v603
      %v605 = vmul.f32 %v604, %v603
      %v606 = vmul.f32 %v605, %v604
      %v607 = vmul.f32 0.5, %v606
      %v608 = vsub.f32 1.5, %v607
      %v609 = vmul.f32 %v604, %v608
      %vm610 = vweird.f32 %v603
      %vm611 = vweird.f32 %v604
      %vm612 = vmor %vm610, %vm611
      %v613 = vsel %vm612, %v604, %v609
      %v614 = vmul.f32 %v549, %v613
      %v615 = vsub.f32 %v549, %v594
      %617 = vrot.lane.b32.xlu0 %v614, 127
      %v618 = vpop.permute.xlu0 %617
      %v620 = vmul.f32 %v615, %v618
      %622 = vrot.lane.b32.xlu0 %v620, 2
      %v623 = vpop.permute.xlu0 %622
      %v625 = vadd.f32 %v549, %v623
      %626 = vset.pattern.permute.xlu0 1
      %627 = vperm.xlu0 %626, %v614
      %v628 = vpop.permute.xlu0 %627
      %v630 = vmul.f32 %v546, %v628
      %632 = vset.pattern.permute.xlu0 2
      %633 = vperm.xlu0 %632, %v625
      %v634 = vpop.permute.xlu0 %633
      %v636 = vadd.f32 %v630, %v634
      %v637 = vxor.u32 %v636, 2147483648
      %v638 = vmul.f32 %v637, 1.442695
      %v639 = vpow.pop %v638
      %v640 = vadd.f32 %v639, 1.0
      %v641 = vrcp.pop %v640
      %v642 = vmul.f32 %v640, %v641
      %v643 = vsub.f32 1.0, %v642
      %v644 = vmul.f32 %v641, %v643
      %v645 = vadd.f32 %v641, %v644
      %vm646 = vweird.f32 %v640
      %vm647 = vweird.f32 %v641
      %vm648 = vmor %vm646, %vm647
      %v649 = vsel %vm648, %v641, %v645
      %v650 = vand.u32 2147483647, %v640
      %vm651 = vcmp.eq.f32.partialorder %v650, 8.507059e+37
      %v652 = vand.u32 %v640, 2147483648
      %v653 = vor.u32 1.1754944e-38, %v652
      %v654 = vsel %vm651, %v653, %v649
      %v655 = vmul.f32 1.0, %v654
      %v656 = vmul.f32 %v636, %v655
      %v657 = vpack.c.bf16 %v656, %v656
      %v658 = vlaneseq
      %v659 = vand.u32 %v658, 127
      %v660 = vld [vmem:[%s4] sm:$0x1]
      %v662 = vunpack.c.l.b16 %v657
      %v663 = vpack.c.b16 %v662, %v662
      %664 = vrot.lane.b32.xlu0 %v663, 73
      %v665 = vpop.permute.xlu0 %664
      %666 = vrot.lane.b32.xlu0 %v663, 9
      %v667 = vpop.permute.xlu0 %666
      %vm668 = vcmask 72704
      %v671 = vsel %vm668, %v665, %v667
      %vm673 = vcmp.ge.s32.totalorder %v659, 8
      %vm674 = vcmp.ge.s32.totalorder %v660, 1
      %vm675 = vmand %vm673, %vm674
      %v676 = vsel %vm675, 1, 0
      %v677 = vperm.slane %v676, 0
      %vm678 = vcmp.eq.s32.totalorder %v677, 1
      %vm679 = vmpackc.low %vm678, %vm678
      %v680 = vsel %vm679, %v671, 0
      %v681 = vld [vmem:[%s2] sm:$0xf]
      %682 = vrot.lane.b32.xlu0 %v663, 72
      %v683 = vpop.permute.xlu0 %682
      %684 = vrot.lane.b32.xlu0 %v663, 8
      %v685 = vpop.permute.xlu0 %684
      %v688 = vsel %vm572, %v683, %v685
      %v690 = vsel %vm673, 1, 0
      %vm691 = vcmp.eq.s32.totalorder %v690, 1
      %vm692 = vmpackc.low %vm691, %vm691
      %v693 = vsel %vm692, %v688, 0
      %s694 = scalar_lea.vmem %s2, 4
      %v695 = vld [vmem:[%s694] sm:$0xf]
      %v697 = vsel %vm572, %v695, 0
      %vm699 = vcmask 1043456
      %v701 = vsel %vm699, %v693, 0
      %703 = vmatpush.bf16.msra.mxu0 0
      %704 = vmatpush.bf16.msra.mxu0 0
      %705 = vmatpush.bf16.msra.mxu0 0
      %706 = vmatpush.bf16.msra.mxu0 0
      %707 = vmatpush.bf16.msra.mxu0 0
      %708 = vmatpush.bf16.msra.mxu0 0
      %709 = vmatpush.bf16.msra.mxu0 0
      %710 = vmatpush.bf16.msra.mxu0 %v701
      %711 = vmatmul.bf16.gmra.mxu0 %v697
      %v712 = vpop.f32.mrf.mxu0
      %v713 = vadd.f32 0.0, %v712
      %v714 = vpop.f32.mrf.mxu0
      %715 = vdwg.mxu0
      %v717 = vsel %vm572, %v681, 0
      %v720 = vsel %vm699, %v680, 0
      %722 = vmatpush.bf16.msra.mxu0 0
      %723 = vmatpush.bf16.msra.mxu0 0
      %724 = vmatpush.bf16.msra.mxu0 0
      %725 = vmatpush.bf16.msra.mxu0 0
      %726 = vmatpush.bf16.msra.mxu0 0
      %727 = vmatpush.bf16.msra.mxu0 0
      %728 = vmatpush.bf16.msra.mxu0 0
      %729 = vmatpush.bf16.msra.mxu0 %v720
      %730 = vmatmul.bf16.gmra.mxu0 %v717
      %v731 = vpop.f32.mrf.mxu0
      %v732 = vadd.f32 %v713, %v731
      %v733 = vpop.f32.mrf.mxu0
      %734 = vdwg.mxu0
      %735 = vrot.lane.b32.xlu0 %v663, 71
      %v736 = vpop.permute.xlu0 %735
      %737 = vrot.lane.b32.xlu0 %v663, 7
      %v738 = vpop.permute.xlu0 %737
      %vm739 = vcmask 56320
      %v742 = vsel %vm739, %v736, %v738
      %vm744 = vcmp.le.s32.totalorder %v660, 6
      %vm745 = vmand %vm673, %vm744
      %v746 = vsel %vm745, 1, 0
      %v747 = vperm.slane %v746, 0
      %vm748 = vcmp.eq.s32.totalorder %v747, 1
      %vm749 = vmpackc.low %vm748, %vm748
      %v750 = vsel %vm749, %v742, 0
      %s751 = scalar_lea.vmem %s2, 8
      %v752 = vld [vmem:[%s751] sm:$0xf]
      %v754 = vsel %vm572, %v752, 0
      %v757 = vsel %vm699, %v750, 0
      %759 = vmatpush.bf16.msra.mxu0 0
      %760 = vmatpush.bf16.msra.mxu0 0
      %761 = vmatpush.bf16.msra.mxu0 0
      %762 = vmatpush.bf16.msra.mxu0 0
      %763 = vmatpush.bf16.msra.mxu0 0
      %764 = vmatpush.bf16.msra.mxu0 0
      %765 = vmatpush.bf16.msra.mxu0 0
      %766 = vmatpush.bf16.msra.mxu0 %v757
      %767 = vmatmul.bf16.gmra.mxu0 %v754
      %v768 = vpop.f32.mrf.mxu0
      %v769 = vadd.f32 0.0, %v768
      %v770 = vpop.f32.mrf.mxu0
      %771 = vdwg.mxu0
      %v772 = vadd.f32 %v732, %v769
      %773 = vrot.lane.b32.xlu0 %v663, 65
      %v774 = vpop.permute.xlu0 %773
      %775 = vrot.lane.b32.xlu0 %v663, 1
      %v776 = vpop.permute.xlu0 %775
      %v779 = vsel %vm570, %v774, %v776
      %v781 = vsel %vm674, 1, 0
      %v782 = vperm.slane %v781, 0
      %vm783 = vcmp.eq.s32.totalorder %v782, 1
      %vm784 = vmpackc.low %vm783, %vm783
      %v785 = vsel %vm784, %v779, 0
      %s786 = scalar_lea.vmem %s2, 12
      %v787 = vld [vmem:[%s786] sm:$0xf]
      %v789 = vsel %vm572, %v787, 0
      %v792 = vsel %vm699, %v785, 0
      %794 = vmatpush.bf16.msra.mxu0 0
      %795 = vmatpush.bf16.msra.mxu0 0
      %796 = vmatpush.bf16.msra.mxu0 0
      %797 = vmatpush.bf16.msra.mxu0 0
      %798 = vmatpush.bf16.msra.mxu0 0
      %799 = vmatpush.bf16.msra.mxu0 0
      %800 = vmatpush.bf16.msra.mxu0 0
      %801 = vmatpush.bf16.msra.mxu0 %v792
      %802 = vmatmul.bf16.gmra.mxu0 %v789
      %v803 = vpop.f32.mrf.mxu0
      %v804 = vadd.f32 0.0, %v803
      %v805 = vpop.f32.mrf.mxu0
      %806 = vdwg.mxu0
      %v807 = vadd.f32 %v772, %v804
      %s808 = scalar_lea.vmem %s2, 16
      %v809 = vld [vmem:[%s808] sm:$0xf]
      %v811 = vsel %vm572, %v809, 0
      %v814 = vsel %vm699, %v657, 0
      %816 = vmatpush.bf16.msra.mxu0 0
      %817 = vmatpush.bf16.msra.mxu0 0
      %818 = vmatpush.bf16.msra.mxu0 0
      %819 = vmatpush.bf16.msra.mxu0 0
      %820 = vmatpush.bf16.msra.mxu0 0
      %821 = vmatpush.bf16.msra.mxu0 0
      %822 = vmatpush.bf16.msra.mxu0 0
      %823 = vmatpush.bf16.msra.mxu0 %v814
      %824 = vmatmul.bf16.gmra.mxu0 %v811
      %v825 = vpop.f32.mrf.mxu0
      %v826 = vadd.f32 0.0, %v825
      %v827 = vpop.f32.mrf.mxu0
      %828 = vdwg.mxu0
      %v829 = vadd.f32 %v807, %v826
      %830 = vrot.lane.b32.xlu0 %v663, 127
      %v831 = vpop.permute.xlu0 %830
      %832 = vrot.lane.b32.xlu0 %v663, 63
      %v833 = vpop.permute.xlu0 %832
      %vm834 = vcmask 515072
      %v837 = vsel %vm834, %v831, %v833
      %v839 = vsel %vm744, 1, 0
      %v840 = vperm.slane %v839, 0
      %vm841 = vcmp.eq.s32.totalorder %v840, 1
      %vm842 = vmpackc.low %vm841, %vm841
      %v843 = vsel %vm842, %v837, 0
      %s844 = scalar_lea.vmem %s2, 20
      %v845 = vld [vmem:[%s844] sm:$0xf]
      %v847 = vsel %vm572, %v845, 0
      %v850 = vsel %vm699, %v843, 0
      %852 = vmatpush.bf16.msra.mxu0 0
      %853 = vmatpush.bf16.msra.mxu0 0
      %854 = vmatpush.bf16.msra.mxu0 0
      %855 = vmatpush.bf16.msra.mxu0 0
      %856 = vmatpush.bf16.msra.mxu0 0
      %857 = vmatpush.bf16.msra.mxu0 0
      %858 = vmatpush.bf16.msra.mxu0 0
      %859 = vmatpush.bf16.msra.mxu0 %v850
      %860 = vmatmul.bf16.gmra.mxu0 %v847
      %v861 = vpop.f32.mrf.mxu0
      %v862 = vadd.f32 0.0, %v861
      %v863 = vpop.f32.mrf.mxu0
      %864 = vdwg.mxu0
      %v865 = vadd.f32 %v829, %v862
      %866 = vrot.lane.b32.xlu0 %v663, 121
      %v867 = vpop.permute.xlu0 %866
      %868 = vrot.lane.b32.xlu0 %v663, 57
      %v869 = vpop.permute.xlu0 %868
      %vm870 = vcmask 465920
      %v873 = vsel %vm870, %v867, %v869
      %vm875 = vcmp.lt.s32.totalorder %v659, 56
      %vm876 = vmand %vm875, %vm674
      %v877 = vsel %vm876, 1, 0
      %v878 = vperm.slane %v877, 0
      %vm879 = vcmp.eq.s32.totalorder %v878, 1
      %vm880 = vmpackc.low %vm879, %vm879
      %v881 = vsel %vm880, %v873, 0
      %s882 = scalar_lea.vmem %s2, 24
      %v883 = vld [vmem:[%s882] sm:$0xf]
      %v885 = vsel %vm572, %v883, 0
      %v888 = vsel %vm699, %v881, 0
      %890 = vmatpush.bf16.msra.mxu0 0
      %891 = vmatpush.bf16.msra.mxu0 0
      %892 = vmatpush.bf16.msra.mxu0 0
      %893 = vmatpush.bf16.msra.mxu0 0
      %894 = vmatpush.bf16.msra.mxu0 0
      %895 = vmatpush.bf16.msra.mxu0 0
      %896 = vmatpush.bf16.msra.mxu0 0
      %897 = vmatpush.bf16.msra.mxu0 %v888
      %898 = vmatmul.bf16.gmra.mxu0 %v885
      %v899 = vpop.f32.mrf.mxu0
      %v900 = vadd.f32 0.0, %v899
      %v901 = vpop.f32.mrf.mxu0
      %902 = vdwg.mxu0
      %v903 = vadd.f32 %v865, %v900
      %904 = vrot.lane.b32.xlu0 %v663, 120
      %v905 = vpop.permute.xlu0 %904
      %906 = vrot.lane.b32.xlu0 %v663, 56
      %v907 = vpop.permute.xlu0 %906
      %vm908 = vcmask 457728
      %v911 = vsel %vm908, %v905, %v907
      %v913 = vsel %vm875, 1, 0
      %vm914 = vcmp.eq.s32.totalorder %v913, 1
      %vm915 = vmpackc.low %vm914, %vm914
      %v916 = vsel %vm915, %v911, 0
      %s917 = scalar_lea.vmem %s2, 28
      %v918 = vld [vmem:[%s917] sm:$0xf]
      %v920 = vsel %vm572, %v918, 0
      %v923 = vsel %vm699, %v916, 0
      %925 = vmatpush.bf16.msra.mxu0 0
      %926 = vmatpush.bf16.msra.mxu0 0
      %927 = vmatpush.bf16.msra.mxu0 0
      %928 = vmatpush.bf16.msra.mxu0 0
      %929 = vmatpush.bf16.msra.mxu0 0
      %930 = vmatpush.bf16.msra.mxu0 0
      %931 = vmatpush.bf16.msra.mxu0 0
      %932 = vmatpush.bf16.msra.mxu0 %v923
      %933 = vmatmul.bf16.gmra.mxu0 %v920
      %v934 = vpop.f32.mrf.mxu0
      %v935 = vadd.f32 0.0, %v934
      %v936 = vpop.f32.mrf.mxu0
      %937 = vdwg.mxu0
      %v938 = vadd.f32 %v903, %v935
      %939 = vrot.lane.b32.xlu0 %v663, 119
      %v940 = vpop.permute.xlu0 %939
      %941 = vrot.lane.b32.xlu0 %v663, 55
      %v942 = vpop.permute.xlu0 %941
      %vm943 = vcmask 449536
      %v946 = vsel %vm943, %v940, %v942
      %vm948 = vmand %vm875, %vm744
      %v949 = vsel %vm948, 1, 0
      %v950 = vperm.slane %v949, 0
      %vm951 = vcmp.eq.s32.totalorder %v950, 1
      %vm952 = vmpackc.low %vm951, %vm951
      %v953 = vsel %vm952, %v946, 0
      %s954 = scalar_lea.vmem %s2, 32
      %v955 = vld [vmem:[%s954] sm:$0xf]
      %v957 = vsel %vm572, %v955, 0
      %v960 = vsel %vm699, %v953, 0
      %962 = vmatpush.bf16.msra.mxu0 0
      %963 = vmatpush.bf16.msra.mxu0 0
      %964 = vmatpush.bf16.msra.mxu0 0
      %965 = vmatpush.bf16.msra.mxu0 0
      %966 = vmatpush.bf16.msra.mxu0 0
      %967 = vmatpush.bf16.msra.mxu0 0
      %968 = vmatpush.bf16.msra.mxu0 0
      %969 = vmatpush.bf16.msra.mxu0 %v960
      %970 = vmatmul.bf16.gmra.mxu0 %v957
      %v971 = vpop.f32.mrf.mxu0
      %v972 = vadd.f32 0.0, %v971
      %v973 = vpop.f32.mrf.mxu0
      %974 = vdwg.mxu0
      %v975 = vadd.f32 %v938, %v972
      %v976 = vsel %vm550, %v975, 0.0
      %977 = vadd.xlane.f32.xlu0 %v976
      %v978 = vpop.xlane.xlu0 %977
      %v979 = vmul.f32 %v975, %v975
      %v980 = vsel %vm550, %v979, 0.0
      %981 = vadd.xlane.f32.xlu0 %v980
      %v982 = vpop.xlane.xlu0 %981
      %v983 = vadd.f32 %v978, %v558
      %v984 = vmul.f32 %v560, %v978
      %v985 = vadd.f32 %v982, %v984
      %v986 = vadd.f32 %v985, %v564
      %988 = vrot.lane.b32.xlu0 %v983, 125
      %v989 = vpop.permute.xlu0 %988
      %992 = vrot.lane.b32.xlu0 %v986, 126
      %v993 = vpop.permute.xlu0 %992
      %v995 = vsel %vm570, %v989, %v993
      %996 = vmatpush.msra.mxu0 0.0
      %997 = vmatpush.msra.mxu0 0.0
      %998 = vmatpush.msra.mxu0 0.0
      %999 = vmatpush.msra.mxu0 0.0
      %1000 = vmatpush.msra.mxu0 0.0
      %1001 = vmatpush.msra.mxu0 0.0
      %1002 = vmatpush.msra.mxu0 0.0
      %1003 = vmatpush.msra.mxu0 0.0
      %1004 = vmatpush.msra.mxu0 0.0
      %1005 = vmatpush.msra.mxu0 0.0
      %1006 = vmatpush.msra.mxu0 0.0
      %1007 = vmatpush.msra.mxu0 0.0
      %1008 = vmatpush.msra.mxu0 0.0
      %1009 = vmatpush.msra.mxu0 0.0
      %1010 = vmatpush.msra.mxu0 0.0
      %1011 = vmatpush.msra.mxu0 %v995
      %1012 = vmatmul.f32.gmra.mxu0 %v574
      %v1013 = vpop.f32.mrf.mxu0
      %v1014 = vadd.f32 0.0, %v1013
      %1015 = vdwg.mxu0
      %v1016 = vmul.f32 %v1014, %v1014
      %1018 = vrot.lane.b32.xlu0 %v1016, 1
      %v1019 = vpop.permute.xlu0 %1018
      %v1021 = vsub.f32 %v1014, %v1019
      %v1022 = vmax.f32 %v1021, 0.0
      %v1023 = vadd.f32 %v1022, 1e-05
      %v1024 = vrsqrt.pop %v1023
      %v1025 = vmul.f32 %v1024, %v1023
      %v1026 = vmul.f32 %v1025, %v1024
      %v1027 = vmul.f32 0.5, %v1026
      %v1028 = vsub.f32 1.5, %v1027
      %v1029 = vmul.f32 %v1024, %v1028
      %vm1030 = vweird.f32 %v1023
      %vm1031 = vweird.f32 %v1024
      %vm1032 = vmor %vm1030, %vm1031
      %v1033 = vsel %vm1032, %v1024, %v1029
      %1035 = vrot.lane.b32.xlu0 %v1033, 3
      %v1036 = vpop.permute.xlu0 %1035
      %v1038 = vmul.f32 %v549, %v1036
      %1040 = vrot.lane.b32.xlu0 %v1014, 3
      %v1041 = vpop.permute.xlu0 %1040
      %v1043 = vsub.f32 %v549, %v1041
      %1045 = vrot.lane.b32.xlu0 %v1038, 127
      %v1046 = vpop.permute.xlu0 %1045
      %v1048 = vmul.f32 %v1043, %v1046
      %1050 = vrot.lane.b32.xlu0 %v1048, 2
      %v1051 = vpop.permute.xlu0 %1050
      %v1053 = vadd.f32 %v549, %v1051
      %1054 = vset.pattern.permute.xlu0 4
      %1055 = vperm.xlu0 %1054, %v1038
      %v1056 = vpop.permute.xlu0 %1055
      %v1058 = vmul.f32 %v975, %v1056
      %1060 = vset.pattern.permute.xlu0 5
      %1061 = vperm.xlu0 %1060, %v1053
      %v1062 = vpop.permute.xlu0 %1061
      %v1064 = vadd.f32 %v1058, %v1062
      %v1065 = vxor.u32 %v1064, 2147483648
      %v1066 = vmul.f32 %v1065, 1.442695
      %v1067 = vpow.pop %v1066
      %v1068 = vadd.f32 %v1067, 1.0
      %v1069 = vrcp.pop %v1068
      %v1070 = vmul.f32 %v1068, %v1069
      %v1071 = vsub.f32 1.0, %v1070
      %v1072 = vmul.f32 %v1069, %v1071
      %v1073 = vadd.f32 %v1069, %v1072
      %vm1074 = vweird.f32 %v1068
      %vm1075 = vweird.f32 %v1069
      %vm1076 = vmor %vm1074, %vm1075
      %v1077 = vsel %vm1076, %v1069, %v1073
      %v1078 = vand.u32 2147483647, %v1068
      %vm1079 = vcmp.eq.f32.partialorder %v1078, 8.507059e+37
      %v1080 = vand.u32 %v1068, 2147483648
      %v1081 = vor.u32 1.1754944e-38, %v1080
      %v1082 = vsel %vm1079, %v1081, %v1077
      %v1083 = vmul.f32 1.0, %v1082
      %v1084 = vmul.f32 %v1064, %v1083
      %v1085 = vadd.f32 %v1084, %v547
      %1087 = vset.pattern.permute.xlu0 6
      %1088 = vperm.xlu0 %1087, %v549
      %v1089 = vpop.permute.xlu0 %1088
      %v1091 = vadd.f32 %v1085, %v1089
      %v1092 = vpack.c.bf16 %v1091, %v1091
      %vm1093 = vcmask 519168
      %1094 = vst.msk [vmem:[%s249] sm:$0xf] %vm1093, %v1092
      %p1095 = scmp.lt.s32.totalorder %s17, 1
      %s1096 = scalar_select %p1095, %s17, 1
      %s1097 = smul.addr %s1096, 4
      %s1098 = scalar_lea.vmem %s6, %s1097
      // Predicated region
      $region45: #{extractor_forward.2} parent=43 // pred_check
        %p1099 = pneg %p166
      $region46: #{extractor_forward.2} parent=43 // pred_check_branch
        %1101 = sbr.rel (%p1099) target = $region48
      $region47: #{extractor_forward.2} parent=43 // pred_region
        _
      $region48: #{extractor_forward.2} parent=43 // pred_fallthru
        _
    $region44: #{extractor_forward.2} parent=5 // pred_fallthru
      _
    %p1102 = scmp.le.s32.totalorder 2, %s12
    // Predicated region
    $region49: #{extractor_forward.2} parent=5 // pred_check
      %p1103 = pneg %p1102
    $region50: #{extractor_forward.2} parent=5 // pred_check_branch
      %1105 = sbr.rel (%p1103) target = $region52
    $region51: #{extractor_forward.2} parent=5 // pred_region
      %s1106 = ssub.s32 %s12, 2
      // Predicated region
      $region53: #{extractor_forward.2} parent=51 // pred_check
        %p1107 = pneg %p172
      $region54: #{extractor_forward.2} parent=51 // pred_check_branch
        %1109 = sbr.rel (%p1107) target = $region56
      $region55: #{extractor_forward.2} parent=51 // pred_region
        %p1110 = scmp.lt.s32.totalorder %s18, 1
        %s1111 = scalar_select %p1110, %s18, 1
        %s1112 = smul.addr %s1111, 4
        %s1113 = scalar_lea.vmem %s6, %s1112
      $region56: #{extractor_forward.2} parent=51 // pred_fallthru
        _
    $region52: #{extractor_forward.2} parent=5 // pred_fallthru
      _
  $region6: #{extractor_forward.2} parent=0 // loop_footer
    %s16 = sadd.s32 1, %s12
  $region7: #{extractor_forward.2} parent=0 // loop_footer_branch
    %11 = sbr.rel target = $region3
  $region8: #{extractor_forward.2} parent=0 // loop_exit
    _

// kernel: extractor_forward.3
$region0: #{extractor_forward.3}
  #allocation0 [shape = 'u32[]', space=smem, size = 0x4, offset = 0x4, fixed_abs, tag = 'smem constant byte address 0x4 - core index']
  #allocation1 [shape = 'u32[72,128]{1,0:T(1,128)}', space=vmem, size = 0x9000, scoped, tag = 'internal scratch']
  %s0 = inlined_call_operand.vmem [shape: bf16[2,6,8,20], index: 0, kind: input, shape index: {}]
  %s1 = inlined_call_operand.vmem [shape: bf16[9,32,8], index: 1, kind: input, shape index: {}]
  %s2 = inlined_call_operand.vmem [shape: bf16[9,16,16], index: 2, kind: input, shape index: {}]
  %s3 = inlined_call_operand.vmem [shape: f32[16,16], index: 3, kind: input, shape index: {}]
  %s4 = inlined_call_operand.vmem [shape: s32[1,16], index: 4, kind: input, shape index: {}]
  %s5 = inlined_call_operand.vmem [shape: f32[16,7], index: 5, kind: input, shape index: {}]
  %s6 = inlined_call_operand.vmem [shape: bf16[2,16,16], index: 6, kind: output, shape index: {}]
  %s7 = sld [smem:[#allocation0]]
  $region57: #{extractor_forward.3} parent=0
    _
  %s9 = ssub.s32 1, %s7
  %s10 = scalar_select 0, %s9, %s7
  loop: start=0, step=1, limit=4
  $region2: #{extractor_forward.3} parent=0 // loop_pre_header
    _
  $region3: #{extractor_forward.3} parent=0 // loop_header
    %s12 = sphi 0, %s16
    %p13 = scmp.ge.s32.totalorder %s12, 4
    %s22 = sphi 0, %s24
    %s25 = sphi 0, %s22
    %s26 = sphi 0, %s25
    %s42 = sphi 0, %s26
    %s46 = sphi 0, %s46
    %s48 = sphi 0, %s46
    %s49 = sphi 0, %s48
    %s63 = sphi 0, %s49
    %s67 = sphi 0, %s67
    %s69 = sphi 0, %s67
    %s70 = sphi 0, %s69
    %s84 = sphi 0, %s70
    %s88 = sphi 0, %s88
    %s90 = sphi 0, %s88
    %s91 = sphi 0, %s90
    %s105 = sphi 0, %s91
    %s109 = sphi 0, %s109
    %s111 = sphi 0, %s109
    %s112 = sphi 0, %s111
    %s126 = sphi 0, %s112
    %s130 = sphi 0, %s130
    %s132 = sphi 0, %s130
    %s133 = sphi 0, %s132
    %s147 = sphi 0, %s133
    %s153 = sphi 0, %s155
    %s156 = sphi 0, %s153
    %s157 = sphi 0, %s156
    %s173 = sphi 0, %s157
  $region4: #{extractor_forward.3} parent=0 // loop_header_branch
    %15 = sbr.rel (%p13) target = $region8
  $region5: #{extractor_forward.3} parent=0 // loop_body
    %s17 = ssub.s32 %s12, 1
    %s18 = ssub.s32 %s12, 2
    %s19 = sadd.s32 %s12, 1
    %s20 = ssub.s32 %s12, %s19
    %p21 = scmp.eq.s32.totalorder %s20, 0
    %s23 = sadd.s32 %s22, 1
    %s24 = scalar_select %p21, %s22, %s23
    %p27 = pneg %p21
    %p28 = scmp.eq.s32.totalorder %s12, 1
    %p29 = por %p27, %p28
    %p30 = scmp.ne.s32.totalorder %s22, %s25
    %p31 = scmp.eq.s32.totalorder %s12, 0
    %p32 = por %p30, %p31
    %p33 = scmp.ne.s32.totalorder %s22, %s25
    %p34 = scmp.eq.s32.totalorder %s17, 1
    %p35 = por %p33, %p34
    %p36 = scmp.ne.s32.totalorder %s25, %s26
    %p37 = scmp.eq.s32.totalorder %s17, 0
    %p38 = por %p36, %p37
    %p39 = scmp.ne.s32.totalorder %s25, %s26
    %p40 = scmp.eq.s32.totalorder %s18, 1
    %p41 = por %p39, %p40
    %p43 = scmp.ne.s32.totalorder %s26, %s42
    %p44 = scmp.eq.s32.totalorder %s18, 0
    %p45 = por %p43, %p44
    %s47 = sadd.s32 %s46, 1
    %p50 = scmp.eq.s32.totalorder %s12, 1
    %p51 = scmp.ne.s32.totalorder %s46, %s48
    %p52 = scmp.eq.s32.totalorder %s12, 0
    %p53 = por %p51, %p52
    %p54 = scmp.ne.s32.totalorder %s46, %s48
    %p55 = scmp.eq.s32.totalorder %s17, 1
    %p56 = por %p54, %p55
    %p57 = scmp.ne.s32.totalorder %s48, %s49
    %p58 = scmp.eq.s32.totalorder %s17, 0
    %p59 = por %p57, %p58
    %p60 = scmp.ne.s32.totalorder %s48, %s49
    %p61 = scmp.eq.s32.totalorder %s18, 1
    %p62 = por %p60, %p61
    %p64 = scmp.ne.s32.totalorder %s49, %s63
    %p65 = scmp.eq.s32.totalorder %s18, 0
    %p66 = por %p64, %p65
    %s68 = sadd.s32 %s67, 1
    %p71 = scmp.eq.s32.totalorder %s12, 1
    %p72 = scmp.ne.s32.totalorder %s67, %s69
    %p73 = scmp.eq.s32.totalorder %s12, 0
    %p74 = por %p72, %p73
    %p75 = scmp.ne.s32.totalorder %s67, %s69
    %p76 = scmp.eq.s32.totalorder %s17, 1
    %p77 = por %p75, %p76
    %p78 = scmp.ne.s32.totalorder %s69, %s70
    %p79 = scmp.eq.s32.totalorder %s17, 0
    %p80 = por %p78, %p79
    %p81 = scmp.ne.s32.totalorder %s69, %s70
    %p82 = scmp.eq.s32.totalorder %s18, 1
    %p83 = por %p81, %p82
    %p85 = scmp.ne.s32.totalorder %s70, %s84
    %p86 = scmp.eq.s32.totalorder %s18, 0
    %p87 = por %p85, %p86
    %s89 = sadd.s32 %s88, 1
    %p92 = scmp.eq.s32.totalorder %s12, 1
    %p93 = scmp.ne.s32.totalorder %s88, %s90
    %p94 = scmp.eq.s32.totalorder %s12, 0
    %p95 = por %p93, %p94
    %p96 = scmp.ne.s32.totalorder %s88, %s90
    %p97 = scmp.eq.s32.totalorder %s17, 1
    %p98 = por %p96, %p97
    %p99 = scmp.ne.s32.totalorder %s90, %s91
    %p100 = scmp.eq.s32.totalorder %s17, 0
    %p101 = por %p99, %p100
    %p102 = scmp.ne.s32.totalorder %s90, %s91
    %p103 = scmp.eq.s32.totalorder %s18, 1
    %p104 = por %p102, %p103
    %p106 = scmp.ne.s32.totalorder %s91, %s105
    %p107 = scmp.eq.s32.totalorder %s18, 0
    %p108 = por %p106, %p107
    %s110 = sadd.s32 %s109, 1
    %p113 = scmp.eq.s32.totalorder %s12, 1
    %p114 = scmp.ne.s32.totalorder %s109, %s111
    %p115 = scmp.eq.s32.totalorder %s12, 0
    %p116 = por %p114, %p115
    %p117 = scmp.ne.s32.totalorder %s109, %s111
    %p118 = scmp.eq.s32.totalorder %s17, 1
    %p119 = por %p117, %p118
    %p120 = scmp.ne.s32.totalorder %s111, %s112
    %p121 = scmp.eq.s32.totalorder %s17, 0
    %p122 = por %p120, %p121
    %p123 = scmp.ne.s32.totalorder %s111, %s112
    %p124 = scmp.eq.s32.totalorder %s18, 1
    %p125 = por %p123, %p124
    %p127 = scmp.ne.s32.totalorder %s112, %s126
    %p128 = scmp.eq.s32.totalorder %s18, 0
    %p129 = por %p127, %p128
    %s131 = sadd.s32 %s130, 1
    %p134 = scmp.eq.s32.totalorder %s12, 1
    %p135 = scmp.ne.s32.totalorder %s130, %s132
    %p136 = scmp.eq.s32.totalorder %s12, 0
    %p137 = por %p135, %p136
    %p138 = scmp.ne.s32.totalorder %s130, %s132
    %p139 = scmp.eq.s32.totalorder %s17, 1
    %p140 = por %p138, %p139
    %p141 = scmp.ne.s32.totalorder %s132, %s133
    %p142 = scmp.eq.s32.totalorder %s17, 0
    %p143 = por %p141, %p142
    %p144 = scmp.ne.s32.totalorder %s132, %s133
    %p145 = scmp.eq.s32.totalorder %s18, 1
    %p146 = por %p144, %p145
    %p148 = scmp.ne.s32.totalorder %s133, %s147
    %p149 = scmp.eq.s32.totalorder %s18, 0
    %p150 = por %p148, %p149
    %s151 = ssub.s32 %s12, %s19
    %p152 = scmp.eq.s32.totalorder %s151, 0
    %s154 = sadd.s32 %s153, 1
    %s155 = scalar_select %p152, %s153, %s154
    %p158 = pneg %p152
    %p159 = scmp.eq.s32.totalorder %s12, 1
    %p160 = por %p158, %p159
    %p161 = scmp.ne.s32.totalorder %s153, %s156
    %p162 = scmp.eq.s32.totalorder %s12, 0
    %p163 = por %p161, %p162
    %p164 = scmp.ne.s32.totalorder %s153, %s156
    %p165 = scmp.eq.s32.totalorder %s17, 1
    %p166 = por %p164, %p165
    %p167 = scmp.ne.s32.totalorder %s156, %s157
    %p168 = scmp.eq.s32.totalorder %s17, 0
    %p169 = por %p167, %p168
    %p170 = scmp.ne.s32.totalorder %s156, %s157
    %p171 = scmp.eq.s32.totalorder %s18, 1
    %p172 = por %p170, %p171
    %p174 = scmp.ne.s32.totalorder %s157, %s173
    %p175 = scmp.eq.s32.totalorder %s18, 0
    %p176 = por %p174, %p175
    %p177 = scmp.le.s32.totalorder 1, %s12
    %p178 = scmp.lt.s32.totalorder %s12, 3
    %p179 = pnand %p177, %p178
    %p180 = pneg %p179
    // Predicated region
    $region9: #{extractor_forward.3} parent=5 // pred_check
      _
    $region10: #{extractor_forward.3} parent=5 // pred_check_branch
      %182 = sbr.rel (%p179) target = $region12
    $region11: #{extractor_forward.3} parent=5 // pred_region
      %s183 = ssub.s32 %s12, 1
      // Predicated region
      $region13: #{extractor_forward.3} parent=11 // pred_check
        %p184 = pneg %p59
      $region14: #{extractor_forward.3} parent=11 // pred_check_branch
        %186 = sbr.rel (%p184) target = $region16
      $region15: #{extractor_forward.3} parent=11 // pred_region
        _
      $region16: #{extractor_forward.3} parent=11 // pred_fallthru
        _
      // Predicated region
      $region17: #{extractor_forward.3} parent=11 // pred_check
        %p187 = pneg %p80
      $region18: #{extractor_forward.3} parent=11 // pred_check_branch
        %189 = sbr.rel (%p187) target = $region20
      $region19: #{extractor_forward.3} parent=11 // pred_region
        _
      $region20: #{extractor_forward.3} parent=11 // pred_fallthru
        _
      // Predicated region
      $region21: #{extractor_forward.3} parent=11 // pred_check
        %p190 = pneg %p101
      $region22: #{extractor_forward.3} parent=11 // pred_check_branch
        %192 = sbr.rel (%p190) target = $region24
      $region23: #{extractor_forward.3} parent=11 // pred_region
        _
      $region24: #{extractor_forward.3} parent=11 // pred_fallthru
        _
      // Predicated region
      $region25: #{extractor_forward.3} parent=11 // pred_check
        %p193 = pneg %p122
      $region26: #{extractor_forward.3} parent=11 // pred_check_branch
        %195 = sbr.rel (%p193) target = $region28
      $region27: #{extractor_forward.3} parent=11 // pred_region
        _
      $region28: #{extractor_forward.3} parent=11 // pred_fallthru
        _
      // Predicated region
      $region29: #{extractor_forward.3} parent=11 // pred_check
        %p196 = pneg %p143
      $region30: #{extractor_forward.3} parent=11 // pred_check_branch
        %198 = sbr.rel (%p196) target = $region32
      $region31: #{extractor_forward.3} parent=11 // pred_region
        _
      $region32: #{extractor_forward.3} parent=11 // pred_fallthru
        _
    $region12: #{extractor_forward.3} parent=5 // pred_fallthru
      _
    %p199 = scmp.lt.s32.totalorder %s12, 2
    // Predicated region
    $region33: #{extractor_forward.3} parent=5 // pred_check
      %p200 = pneg %p199
    $region34: #{extractor_forward.3} parent=5 // pred_check_branch
      %202 = sbr.rel (%p200) target = $region36
    $region35: #{extractor_forward.3} parent=5 // pred_region
      // Predicated region
      $region37: #{extractor_forward.3} parent=35 // pred_check
        %p203 = pneg %p32
      $region38: #{extractor_forward.3} parent=35 // pred_check_branch
        %205 = sbr.rel (%p203) target = $region40
      $region39: #{extractor_forward.3} parent=35 // pred_region
        %p206 = scmp.lt.s32.totalorder %s12, 1
        %s207 = scalar_select %p206, %s12, 1
        %s208 = smul.addr %s207, 6
        %s209 = smul.addr %s208, 4
        %s210 = scalar_lea.vmem %s0, %s209
      $region40: #{extractor_forward.3} parent=35 // pred_fallthru
        _
    $region36: #{extractor_forward.3} parent=5 // pred_fallthru
      _
    %p211 = scmp.le.s32.totalorder 1, %s12
    %p212 = scmp.lt.s32.totalorder %s12, 3
    %p213 = pnand %p211, %p212
    %p214 = pneg %p213
    // Predicated region
    $region41: #{extractor_forward.3} parent=5 // pred_check
      _
    $region42: #{extractor_forward.3} parent=5 // pred_check_branch
      %216 = sbr.rel (%p213) target = $region44
    $region43: #{extractor_forward.3} parent=5 // pred_region
      %s217 = ssub.s32 %s12, 1
      %p218 = scmp.lt.s32.totalorder %s17, 1
      %s219 = scalar_select %p218, %s17, 1
      %s220 = smul.addr %s219, 6
      %s221 = smul.addr %s220, 4
      %s222 = scalar_lea.vmem %s0, %s221
      %p223 = pneg %p38
      %p224 = pneg %p35
      %p225 = pneg %p59
      %p226 = pneg %p56
      %p227 = pneg %p80
      %p228 = pneg %p77
      %p229 = pneg %p101
      %p230 = pneg %p98
      %p231 = pneg %p122
      %p232 = pneg %p119
      %p233 = pneg %p143
      %p234 = pneg %p140
      %p235 = pneg %p169
      %p236 = pneg %p166
      %p237 = scmp.lt.s32.totalorder %s17, 1
      %s238 = scalar_select %p237, %s17, 1
      %s239 = smul.addr %s238, 2
      %s240 = smul.addr %s239, 4
      %s241 = scalar_lea.vmem %s6, %s240
      %p242 = scmp.lt.s32.totalorder %s17, 1
      %s243 = scalar_select %p242, %s17, 1
      %s244 = smul.addr %s243, 6
      %s245 = smul.addr %s244, 4
      %s246 = scalar_lea.vmem %s0, %s245
      %p247 = scmp.lt.s32.totalorder %s17, 1
      %s248 = scalar_select %p247, %s17, 1
      %s249 = smul.addr %s248, 2
      %s250 = smul.addr %s249, 4
      %s251 = scalar_lea.vmem %s6, %s250
      %v255 = vld [vmem:[%s246] sm:$0xf]
      %v256 = vld [vmem:[%s1] sm:$0xf]
      %v257 = vld [vmem:[%s1 + $0x4] sm:$0xf]
      %v258 = vld [vmem:[%s1 + $0x8] sm:$0xf]
      %v259 = vld [vmem:[%s1 + $0xc] sm:$0xf]
      %s260 = scalar_lea.vmem %s246, 4
      %v261 = vld [vmem:[%s260] sm:$0xf]
      %s262 = scalar_lea.vmem %s1, 16
      %v263 = vld [vmem:[%s262] sm:$0xf]
      %v264 = vld [vmem:[%s262 + $0x4] sm:$0xf]
      %v265 = vld [vmem:[%s262 + $0x8] sm:$0xf]
      %v266 = vld [vmem:[%s262 + $0xc] sm:$0xf]
      %v271 = vunpack.c.l.b16 %v263
      %v272 = vunpack.c.l.b16 %v264
      %v273 = vunpack.c.l.b16 %v265
      %v274 = vunpack.c.l.b16 %v266
      %v275 = vpack.c.b16 %v272, %v271
      %v276 = vpack.c.b16 %v274, %v273
      %vm277 = vcmask 64512
      %v279 = vsel %vm277, %v275, 0
      %v282 = vsel %vm277, %v276, 0
      %vm284 = vcmask 1043456
      %v286 = vsel %vm284, %v261, 0
      %288 = vmatpush.bf16.msra.mxu0 0
      %289 = vmatpush.bf16.msra.mxu0 0
      %290 = vmatpush.bf16.msra.mxu0 0
      %291 = vmatpush.bf16.msra.mxu0 0
      %292 = vmatpush.bf16.msra.mxu0 0
      %293 = vmatpush.bf16.msra.mxu0 0
      %294 = vmatpush.bf16.msra.mxu0 0
      %295 = vmatpush.bf16.msra.mxu0 %v286
      %296 = vmatmul.bf16.gmra.mxu0 %v279
      %v297 = vpop.f32.mrf.mxu0
      %v298 = vadd.f32 0.0, %v297
      %v299 = vpop.f32.mrf.mxu0
      %v300 = vadd.f32 0.0, %v299
      %301 = vmatmul.bf16.gmra.mxu0 %v282
      %v302 = vpop.f32.mrf.mxu0
      %v303 = vadd.f32 0.0, %v302
      %v304 = vpop.f32.mrf.mxu0
      %v305 = vadd.f32 0.0, %v304
      %306 = vdwg.mxu0
      %v311 = vunpack.c.l.b16 %v256
      %v312 = vunpack.c.l.b16 %v257
      %v313 = vunpack.c.l.b16 %v258
      %v314 = vunpack.c.l.b16 %v259
      %v315 = vpack.c.b16 %v312, %v311
      %v316 = vpack.c.b16 %v314, %v313
      %v318 = vsel %vm277, %v315, 0
      %v321 = vsel %vm277, %v316, 0
      %v324 = vsel %vm284, %v255, 0
      %326 = vmatpush.bf16.msra.mxu0 0
      %327 = vmatpush.bf16.msra.mxu0 0
      %328 = vmatpush.bf16.msra.mxu0 0
      %329 = vmatpush.bf16.msra.mxu0 0
      %330 = vmatpush.bf16.msra.mxu0 0
      %331 = vmatpush.bf16.msra.mxu0 0
      %332 = vmatpush.bf16.msra.mxu0 0
      %333 = vmatpush.bf16.msra.mxu0 %v324
      %334 = vmatmul.bf16.gmra.mxu0 %v318
      %v335 = vpop.f32.mrf.mxu0
      %v336 = vadd.f32 %v298, %v335
      %v337 = vpop.f32.mrf.mxu0
      %v338 = vadd.f32 %v300, %v337
      %339 = vmatmul.bf16.gmra.mxu0 %v321
      %v340 = vpop.f32.mrf.mxu0
      %v341 = vadd.f32 %v303, %v340
      %v342 = vpop.f32.mrf.mxu0
      %v343 = vadd.f32 %v305, %v342
      %344 = vdwg.mxu0
      %s345 = scalar_lea.vmem %s246, 8
      %v346 = vld [vmem:[%s345] sm:$0xf]
      %s347 = scalar_lea.vmem %s1, 32
      %v348 = vld [vmem:[%s347] sm:$0xf]
      %v349 = vld [vmem:[%s347 + $0x4] sm:$0xf]
      %v350 = vld [vmem:[%s347 + $0x8] sm:$0xf]
      %v351 = vld [vmem:[%s347 + $0xc] sm:$0xf]
      %v356 = vunpack.c.l.b16 %v348
      %v357 = vunpack.c.l.b16 %v349
      %v358 = vunpack.c.l.b16 %v350
      %v359 = vunpack.c.l.b16 %v351
      %v360 = vpack.c.b16 %v357, %v356
      %v361 = vpack.c.b16 %v359, %v358
      %v363 = vsel %vm277, %v360, 0
      %v366 = vsel %vm277, %v361, 0
      %v369 = vsel %vm284, %v346, 0
      %371 = vmatpush.bf16.msra.mxu0 0
      %372 = vmatpush.bf16.msra.mxu0 0
      %373 = vmatpush.bf16.msra.mxu0 0
      %374 = vmatpush.bf16.msra.mxu0 0
      %375 = vmatpush.bf16.msra.mxu0 0
      %376 = vmatpush.bf16.msra.mxu0 0
      %377 = vmatpush.bf16.msra.mxu0 0
      %378 = vmatpush.bf16.msra.mxu0 %v369
      %379 = vmatmul.bf16.gmra.mxu0 %v363
      %v380 = vpop.f32.mrf.mxu0
      %v381 = vadd.f32 0.0, %v380
      %v382 = vpop.f32.mrf.mxu0
      %v383 = vadd.f32 0.0, %v382
      %384 = vmatmul.bf16.gmra.mxu0 %v366
      %v385 = vpop.f32.mrf.mxu0
      %v386 = vadd.f32 0.0, %v385
      %v387 = vpop.f32.mrf.mxu0
      %v388 = vadd.f32 0.0, %v387
      %389 = vdwg.mxu0
      %v390 = vadd.f32 %v336, %v381
      %v391 = vadd.f32 %v338, %v383
      %v392 = vadd.f32 %v341, %v386
      %v393 = vadd.f32 %v343, %v388
      %s394 = scalar_lea.vmem %s246, 12
      %v395 = vld [vmem:[%s394] sm:$0xf]
      %s396 = scalar_lea.vmem %s1, 48
      %v397 = vld [vmem:[%s396] sm:$0xf]
      %v398 = vld [vmem:[%s396 + $0x4] sm:$0xf]
      %v399 = vld [vmem:[%s396 + $0x8] sm:$0xf]
      %v400 = vld [vmem:[%s396 + $0xc] sm:$0xf]
      %v405 = vunpack.c.l.b16 %v397
      %v406 = vunpack.c.l.b16 %v398
      %v407 = vunpack.c.l.b16 %v399
      %v408 = vunpack.c.l.b16 %v400
      %v409 = vpack.c.b16 %v406, %v405
      %v410 = vpack.c.b16 %v408, %v407
      %v412 = vsel %vm277, %v409, 0
      %v415 = vsel %vm277, %v410, 0
      %v418 = vsel %vm284, %v395, 0
      %420 = vmatpush.bf16.msra.mxu0 0
      %421 = vmatpush.bf16.msra.mxu0 0
      %422 = vmatpush.bf16.msra.mxu0 0
      %423 = vmatpush.bf16.msra.mxu0 0
      %424 = vmatpush.bf16.msra.mxu0 0
      %425 = vmatpush.bf16.msra.mxu0 0
      %426 = vmatpush.bf16.msra.mxu0 0
      %427 = vmatpush.bf16.msra.mxu0 %v418
      %428 = vmatmul.bf16.gmra.mxu0 %v412
      %v429 = vpop.f32.mrf.mxu0
      %v430 = vadd.f32 0.0, %v429
      %v431 = vpop.f32.mrf.mxu0
      %v432 = vadd.f32 0.0, %v431
      %433 = vmatmul.bf16.gmra.mxu0 %v415
      %v434 = vpop.f32.mrf.mxu0
      %v435 = vadd.f32 0.0, %v434
      %v436 = vpop.f32.mrf.mxu0
      %v437 = vadd.f32 0.0, %v436
      %438 = vdwg.mxu0
      %v439 = vadd.f32 %v390, %v430
      %v440 = vadd.f32 %v391, %v432
      %v441 = vadd.f32 %v392, %v435
      %v442 = vadd.f32 %v393, %v437
      %s443 = scalar_lea.vmem %s246, 16
      %v444 = vld [vmem:[%s443] sm:$0xf]
      %s445 = scalar_lea.vmem %s1, 64
      %v446 = vld [vmem:[%s445] sm:$0xf]
      %v447 = vld [vmem:[%s445 + $0x4] sm:$0xf]
      %v448 = vld [vmem:[%s445 + $0x8] sm:$0xf]
      %v449 = vld [vmem:[%s445 + $0xc] sm:$0xf]
      %v454 = vunpack.c.l.b16 %v446
      %v455 = vunpack.c.l.b16 %v447
      %v456 = vunpack.c.l.b16 %v448
      %v457 = vunpack.c.l.b16 %v449
      %v458 = vpack.c.b16 %v455, %v454
      %v459 = vpack.c.b16 %v457, %v456
      %v461 = vsel %vm277, %v458, 0
      %v464 = vsel %vm277, %v459, 0
      %v467 = vsel %vm284, %v444, 0
      %469 = vmatpush.bf16.msra.mxu0 0
      %470 = vmatpush.bf16.msra.mxu0 0
      %471 = vmatpush.bf16.msra.mxu0 0
      %472 = vmatpush.bf16.msra.mxu0 0
      %473 = vmatpush.bf16.msra.mxu0 0
      %474 = vmatpush.bf16.msra.mxu0 0
      %475 = vmatpush.bf16.msra.mxu0 0
      %476 = vmatpush.bf16.msra.mxu0 %v467
      %477 = vmatmul.bf16.gmra.mxu0 %v461
      %v478 = vpop.f32.mrf.mxu0
      %v479 = vadd.f32 0.0, %v478
      %v480 = vpop.f32.mrf.mxu0
      %v481 = vadd.f32 0.0, %v480
      %482 = vmatmul.bf16.gmra.mxu0 %v464
      %v483 = vpop.f32.mrf.mxu0
      %v484 = vadd.f32 0.0, %v483
      %v485 = vpop.f32.mrf.mxu0
      %v486 = vadd.f32 0.0, %v485
      %487 = vdwg.mxu0
      %v488 = vadd.f32 %v439, %v479
      %v489 = vadd.f32 %v440, %v481
      %v490 = vadd.f32 %v441, %v484
      %v491 = vadd.f32 %v442, %v486
      %s492 = scalar_lea.vmem %s246, 20
      %v493 = vld [vmem:[%s492] sm:$0xf]
      %s494 = scalar_lea.vmem %s1, 80
      %v495 = vld [vmem:[%s494] sm:$0xf]
      %v496 = vld [vmem:[%s494 + $0x4] sm:$0xf]
      %v497 = vld [vmem:[%s494 + $0x8] sm:$0xf]
      %v498 = vld [vmem:[%s494 + $0xc] sm:$0xf]
      %v503 = vunpack.c.l.b16 %v495
      %v504 = vunpack.c.l.b16 %v496
      %v505 = vunpack.c.l.b16 %v497
      %v506 = vunpack.c.l.b16 %v498
      %v507 = vpack.c.b16 %v504, %v503
      %v508 = vpack.c.b16 %v506, %v505
      %v510 = vsel %vm277, %v507, 0
      %v513 = vsel %vm277, %v508, 0
      %v516 = vsel %vm284, %v493, 0
      %518 = vmatpush.bf16.msra.mxu0 0
      %519 = vmatpush.bf16.msra.mxu0 0
      %520 = vmatpush.bf16.msra.mxu0 0
      %521 = vmatpush.bf16.msra.mxu0 0
      %522 = vmatpush.bf16.msra.mxu0 0
      %523 = vmatpush.bf16.msra.mxu0 0
      %524 = vmatpush.bf16.msra.mxu0 0
      %525 = vmatpush.bf16.msra.mxu0 %v516
      %526 = vmatmul.bf16.gmra.mxu0 %v510
      %v527 = vpop.f32.mrf.mxu0
      %v528 = vadd.f32 0.0, %v527
      %v529 = vpop.f32.mrf.mxu0
      %v530 = vadd.f32 0.0, %v529
      %531 = vmatmul.bf16.gmra.mxu0 %v513
      %v532 = vpop.f32.mrf.mxu0
      %v533 = vadd.f32 0.0, %v532
      %v534 = vpop.f32.mrf.mxu0
      %v535 = vadd.f32 0.0, %v534
      %536 = vdwg.mxu0
      %v537 = vadd.f32 %v488, %v528
      %v538 = vadd.f32 %v489, %v530
      %v539 = vadd.f32 %v490, %v533
      %v540 = vadd.f32 %v491, %v535
      %s541 = scalar_lea.vmem %s1, 96
      %v542 = vld [vmem:[%s541] sm:$0xf]
      %v543 = vld [vmem:[%s541 + $0x4] sm:$0xf]
      %v544 = vld [vmem:[%s541 + $0x8] sm:$0xf]
      %v545 = vld [vmem:[%s541 + $0xc] sm:$0xf]
      %v550 = vunpack.c.l.b16 %v542
      %v551 = vunpack.c.l.b16 %v543
      %v552 = vunpack.c.l.b16 %v544
      %v553 = vunpack.c.l.b16 %v545
      %v554 = vpack.c.b16 %v551, %v550
      %v555 = vpack.c.b16 %v553, %v552
      %v557 = vunpack.c.l.b16 %v255
      %v558 = vpack.c.b16 %v557, %v557
      %559 = vrot.lane.b32.xlu0 %v558, 124
      %v560 = vpop.permute.xlu0 %559
      %v562 = vsel %vm277, %v554, 0
      %v565 = vsel %vm277, %v555, 0
      %v568 = vsel %vm284, %v560, 0
      %570 = vmatpush.bf16.msra.mxu0 0
      %571 = vmatpush.bf16.msra.mxu0 0
      %572 = vmatpush.bf16.msra.mxu0 0
      %573 = vmatpush.bf16.msra.mxu0 0
      %574 = vmatpush.bf16.msra.mxu0 0
      %575 = vmatpush.bf16.msra.mxu0 0
      %576 = vmatpush.bf16.msra.mxu0 0
      %577 = vmatpush.bf16.msra.mxu0 %v568
      %578 = vmatmul.bf16.gmra.mxu0 %v562
      %v579 = vpop.f32.mrf.mxu0
      %v580 = vadd.f32 0.0, %v579
      %v581 = vpop.f32.mrf.mxu0
      %v582 = vadd.f32 0.0, %v581
      %583 = vmatmul.bf16.gmra.mxu0 %v565
      %v584 = vpop.f32.mrf.mxu0
      %v585 = vadd.f32 0.0, %v584
      %v586 = vpop.f32.mrf.mxu0
      %v587 = vadd.f32 0.0, %v586
      %588 = vdwg.mxu0
      %v589 = vadd.f32 %v537, %v580
      %v590 = vadd.f32 %v538, %v582
      %v591 = vadd.f32 %v539, %v585
      %v592 = vadd.f32 %v540, %v587
      %s593 = scalar_lea.vmem %s1, 112
      %v594 = vld [vmem:[%s593] sm:$0xf]
      %v595 = vld [vmem:[%s593 + $0x4] sm:$0xf]
      %v596 = vld [vmem:[%s593 + $0x8] sm:$0xf]
      %v597 = vld [vmem:[%s593 + $0xc] sm:$0xf]
      %v602 = vunpack.c.l.b16 %v594
      %v603 = vunpack.c.l.b16 %v595
      %v604 = vunpack.c.l.b16 %v596
      %v605 = vunpack.c.l.b16 %v597
      %v606 = vpack.c.b16 %v603, %v602
      %v607 = vpack.c.b16 %v605, %v604
      %v609 = vunpack.c.l.b16 %v261
      %v610 = vpack.c.b16 %v609, %v609
      %611 = vrot.lane.b32.xlu0 %v610, 124
      %v612 = vpop.permute.xlu0 %611
      %v614 = vsel %vm277, %v606, 0
      %v617 = vsel %vm277, %v607, 0
      %v620 = vsel %vm284, %v612, 0
      %622 = vmatpush.bf16.msra.mxu0 0
      %623 = vmatpush.bf16.msra.mxu0 0
      %624 = vmatpush.bf16.msra.mxu0 0
      %625 = vmatpush.bf16.msra.mxu0 0
      %626 = vmatpush.bf16.msra.mxu0 0
      %627 = vmatpush.bf16.msra.mxu0 0
      %628 = vmatpush.bf16.msra.mxu0 0
      %629 = vmatpush.bf16.msra.mxu0 %v620
      %630 = vmatmul.bf16.gmra.mxu0 %v614
      %v631 = vpop.f32.mrf.mxu0
      %v632 = vadd.f32 0.0, %v631
      %v633 = vpop.f32.mrf.mxu0
      %v634 = vadd.f32 0.0, %v633
      %635 = vmatmul.bf16.gmra.mxu0 %v617
      %v636 = vpop.f32.mrf.mxu0
      %v637 = vadd.f32 0.0, %v636
      %v638 = vpop.f32.mrf.mxu0
      %v639 = vadd.f32 0.0, %v638
      %640 = vdwg.mxu0
      %v641 = vadd.f32 %v589, %v632
      %v642 = vadd.f32 %v590, %v634
      %v643 = vadd.f32 %v591, %v637
      %v644 = vadd.f32 %v592, %v639
      %s645 = scalar_lea.vmem %s1, 128
      %v646 = vld [vmem:[%s645] sm:$0xf]
      %v647 = vld [vmem:[%s645 + $0x4] sm:$0xf]
      %v648 = vld [vmem:[%s645 + $0x8] sm:$0xf]
      %v649 = vld [vmem:[%s645 + $0xc] sm:$0xf]
      %v654 = vunpack.c.l.b16 %v646
      %v655 = vunpack.c.l.b16 %v647
      %v656 = vunpack.c.l.b16 %v648
      %v657 = vunpack.c.l.b16 %v649
      %v658 = vpack.c.b16 %v655, %v654
      %v659 = vpack.c.b16 %v657, %v656
      %v661 = vunpack.c.l.b16 %v346
      %v662 = vpack.c.b16 %v661, %v661
      %663 = vrot.lane.b32.xlu0 %v662, 124
      %v664 = vpop.permute.xlu0 %663
      %v666 = vsel %vm277, %v658, 0
      %v669 = vsel %vm277, %v659, 0
      %v672 = vsel %vm284, %v664, 0
      %674 = vmatpush.bf16.msra.mxu0 0
      %675 = vmatpush.bf16.msra.mxu0 0
      %676 = vmatpush.bf16.msra.mxu0 0
      %677 = vmatpush.bf16.msra.mxu0 0
      %678 = vmatpush.bf16.msra.mxu0 0
      %679 = vmatpush.bf16.msra.mxu0 0
      %680 = vmatpush.bf16.msra.mxu0 0
      %681 = vmatpush.bf16.msra.mxu0 %v672
      %682 = vmatmul.bf16.gmra.mxu0 %v666
      %v683 = vpop.f32.mrf.mxu0
      %v684 = vadd.f32 0.0, %v683
      %v685 = vpop.f32.mrf.mxu0
      %v686 = vadd.f32 0.0, %v685
      %687 = vmatmul.bf16.gmra.mxu0 %v669
      %v688 = vpop.f32.mrf.mxu0
      %v689 = vadd.f32 0.0, %v688
      %v690 = vpop.f32.mrf.mxu0
      %v691 = vadd.f32 0.0, %v690
      %692 = vdwg.mxu0
      %v693 = vadd.f32 %v641, %v684
      %v694 = vadd.f32 %v642, %v686
      %v695 = vadd.f32 %v643, %v689
      %v696 = vadd.f32 %v644, %v691
      %v697 = vld [vmem:[%s3] sm:$0xff]
      %v698 = vld [vmem:[%s3 + $0x8] sm:$0xff]
      %v699 = vld [vmem:[%s5] sm:$0xff]
      %v700 = vld [vmem:[%s5 + $0x8] sm:$0xff]
      %vm701 = vcmask 130048
      %v702 = vsel %vm701, %v693, 0.0
      %703 = vadd.xlane.f32.xlu0 %v702
      %v704 = vpop.xlane.xlu0 %703
      %v705 = vsel %vm701, %v694, 0.0
      %706 = vadd.xlane.f32.xlu0 %v705
      %v707 = vpop.xlane.xlu0 %706
      %v708 = vmul.f32 %v693, %v693
      %v709 = vmul.f32 %v694, %v694
      %v710 = vsel %vm701, %v708, 0.0
      %711 = vadd.xlane.f32.xlu0 %v710
      %v712 = vpop.xlane.xlu0 %711
      %v713 = vsel %vm701, %v709, 0.0
      %714 = vadd.xlane.f32.xlu0 %v713
      %v715 = vpop.xlane.xlu0 %714
      %v716 = vmul.f32 %v699, 16.0
      %v717 = vmul.f32 %v700, 16.0
      %v718 = vadd.f32 %v704, %v716
      %v719 = vadd.f32 %v707, %v717
      %v720 = vmul.f32 %v699, 2.0
      %v721 = vmul.f32 %v700, 2.0
      %v722 = vmul.f32 %v720, %v704
      %v723 = vmul.f32 %v721, %v707
      %v724 = vadd.f32 %v712, %v722
      %v725 = vadd.f32 %v715, %v723
      %v726 = vmul.f32 %v699, %v699
      %v727 = vmul.f32 %v700, %v700
      %v728 = vmul.f32 %v726, 16.0
      %v729 = vmul.f32 %v727, 16.0
      %v730 = vadd.f32 %v724, %v728
      %v731 = vadd.f32 %v725, %v729
      %734 = vrot.lane.b32.xlu0 %v730, 1
      %v735 = vpop.permute.xlu0 %734
      %736 = vrot.lane.b32.xlu0 %v731, 1
      %v737 = vpop.permute.xlu0 %736
      %vm740 = vcmask 7168
      %v741 = vsel %vm740, %v718, %v735
      %v742 = vsel %vm740, %v719, %v737
      %v744 = vsel %vm701, %v697, 0
      %v747 = vsel %vm701, %v698, 0
      %749 = vmatpush.msra.mxu0 0.0
      %750 = vmatpush.msra.mxu0 0.0
      %751 = vmatpush.msra.mxu0 0.0
      %752 = vmatpush.msra.mxu0 0.0
      %753 = vmatpush.msra.mxu0 0.0
      %754 = vmatpush.msra.mxu0 0.0
      %755 = vmatpush.msra.mxu0 0.0
      %756 = vmatpush.msra.mxu0 0.0
      %757 = vmatpush.msra.mxu0 0.0
      %758 = vmatpush.msra.mxu0 0.0
      %759 = vmatpush.msra.mxu0 0.0
      %760 = vmatpush.msra.mxu0 0.0
      %761 = vmatpush.msra.mxu0 0.0
      %762 = vmatpush.msra.mxu0 0.0
      %763 = vmatpush.msra.mxu0 %v742
      %764 = vmatpush.msra.mxu0 %v741
      %765 = vmatmul.f32.gmra.mxu0 %v744
      %v766 = vpop.f32.mrf.mxu0
      %v767 = vadd.f32 0.0, %v766
      %768 = vmatmul.f32.gmra.mxu0 %v747
      %v769 = vpop.f32.mrf.mxu0
      %v770 = vadd.f32 0.0, %v769
      %771 = vdwg.mxu0
      %v772 = vmul.f32 %v767, %v767
      %v773 = vmul.f32 %v770, %v770
      %776 = vrot.lane.b32.xlu0 %v772, 1
      %v777 = vpop.permute.xlu0 %776
      %778 = vrot.lane.b32.xlu0 %v773, 1
      %v779 = vpop.permute.xlu0 %778
      %v782 = vsub.f32 %v767, %v777
      %v783 = vsub.f32 %v770, %v779
      %v784 = vmax.f32 %v782, 0.0
      %v785 = vmax.f32 %v783, 0.0
      %v786 = vadd.f32 %v784, 1e-05
      %v787 = vadd.f32 %v785, 1e-05
      %v788 = vrsqrt.pop %v786
      %v789 = vmul.f32 %v788, %v786
      %v790 = vmul.f32 %v789, %v788
      %v791 = vmul.f32 0.5, %v790
      %v792 = vsub.f32 1.5, %v791
      %v793 = vmul.f32 %v788, %v792
      %vm794 = vweird.f32 %v786
      %vm795 = vweird.f32 %v788
      %vm796 = vmor %vm794, %vm795
      %v797 = vsel %vm796, %v788, %v793
      %v798 = vrsqrt.pop %v787
      %v799 = vmul.f32 %v798, %v787
      %v800 = vmul.f32 %v799, %v798
      %v801 = vmul.f32 0.5, %v800
      %v802 = vsub.f32 1.5, %v801
      %v803 = vmul.f32 %v798, %v802
      %vm804 = vweird.f32 %v787
      %vm805 = vweird.f32 %v798
      %vm806 = vmor %vm804, %vm805
      %v807 = vsel %vm806, %v798, %v803
      %v808 = vmul.f32 %v699, %v797
      %v809 = vmul.f32 %v700, %v807
      %v810 = vsub.f32 %v699, %v767
      %v811 = vsub.f32 %v700, %v770
      %814 = vrot.lane.b32.xlu0 %v808, 127
      %v815 = vpop.permute.xlu0 %814
      %816 = vrot.lane.b32.xlu0 %v809, 127
      %v817 = vpop.permute.xlu0 %816
      %v820 = vmul.f32 %v810, %v815
      %v821 = vmul.f32 %v811, %v817
      %824 = vrot.lane.b32.xlu0 %v820, 2
      %v825 = vpop.permute.xlu0 %824
      %826 = vrot.lane.b32.xlu0 %v821, 2
      %v827 = vpop.permute.xlu0 %826
      %v830 = vadd.f32 %v699, %v825
      %v831 = vadd.f32 %v700, %v827
      %832 = vset.pattern.permute.xlu0 1
      %833 = vperm.xlu0 %832, %v808
      %v834 = vpop.permute.xlu0 %833
      %836 = vset.pattern.permute.xlu0 1
      %837 = vperm.xlu0 %836, %v809
      %v838 = vpop.permute.xlu0 %837
      %v840 = vmul.f32 %v693, %v834
      %v841 = vmul.f32 %v694, %v838
      %843 = vset.pattern.permute.xlu0 2
      %844 = vperm.xlu0 %843, %v830
      %v845 = vpop.permute.xlu0 %844
      %848 = vset.pattern.permute.xlu0 2
      %849 = vperm.xlu0 %848, %v831
      %v850 = vpop.permute.xlu0 %849
      %v852 = vadd.f32 %v840, %v845
      %v853 = vadd.f32 %v841, %v850
      %v854 = vxor.u32 %v852, 2147483648
      %v855 = vxor.u32 %v853, 2147483648
      %v856 = vmul.f32 %v854, 1.442695
      %v857 = vpow.pop %v856
      %v858 = vmul.f32 %v855, 1.442695
      %v859 = vpow.pop %v858
      %v860 = vadd.f32 %v857, 1.0
      %v861 = vadd.f32 %v859, 1.0
      %v862 = vrcp.pop %v860
      %v863 = vmul.f32 %v860, %v862
      %v864 = vsub.f32 1.0, %v863
      %v865 = vmul.f32 %v862, %v864
      %v866 = vadd.f32 %v862, %v865
      %vm867 = vweird.f32 %v860
      %vm868 = vweird.f32 %v862
      %vm869 = vmor %vm867, %vm868
      %v870 = vsel %vm869, %v862, %v866
      %v871 = vand.u32 2147483647, %v860
      %vm872 = vcmp.eq.f32.partialorder %v871, 8.507059e+37
      %v873 = vand.u32 %v860, 2147483648
      %v874 = vor.u32 1.1754944e-38, %v873
      %v875 = vsel %vm872, %v874, %v870
      %v876 = vmul.f32 1.0, %v875
      %v877 = vrcp.pop %v861
      %v878 = vmul.f32 %v861, %v877
      %v879 = vsub.f32 1.0, %v878
      %v880 = vmul.f32 %v877, %v879
      %v881 = vadd.f32 %v877, %v880
      %vm882 = vweird.f32 %v861
      %vm883 = vweird.f32 %v877
      %vm884 = vmor %vm882, %vm883
      %v885 = vsel %vm884, %v877, %v881
      %v886 = vand.u32 2147483647, %v861
      %vm887 = vcmp.eq.f32.partialorder %v886, 8.507059e+37
      %v888 = vand.u32 %v861, 2147483648
      %v889 = vor.u32 1.1754944e-38, %v888
      %v890 = vsel %vm887, %v889, %v885
      %v891 = vmul.f32 1.0, %v890
      %v892 = vmul.f32 %v852, %v876
      %v893 = vmul.f32 %v853, %v891
      %v894 = vpack.c.bf16 %v892, %v892
      %v895 = vpack.c.bf16 %v893, %v893
      %v896 = vlaneseq
      %v897 = vand.u32 %v896, 127
      %v898 = vld [vmem:[%s4] sm:$0x1]
      %v901 = vunpack.c.l.b16 %v894
      %v902 = vunpack.c.l.b16 %v895
      %v903 = vpack.c.b16 %v902, %v901
      %904 = vrot.lane.b32.xlu0 %v903, 117
      %v905 = vpop.permute.xlu0 %904
      %906 = vrot.lane.b32.xlu0 %v903, 5
      %v907 = vpop.permute.xlu0 %906
      %vm908 = vcmask 39936
      %v911 = vsel %vm908, %v905, %v907
      %vm913 = vcmp.ge.s32.totalorder %v897, 4
      %vm914 = vcmp.ge.s32.totalorder %v898, 1
      %vm915 = vmand %vm913, %vm914
      %v916 = vsel %vm915, 1, 0
      %v917 = vperm.slane %v916, 0
      %vm918 = vcmp.eq.s32.totalorder %v917, 1
      %vm919 = vmpackc.low %vm918, %vm918
      %v920 = vsel %vm919, 65537, 0
      %v921 = vperm.slane %v920, 0
      %v922 = vunpack.c.l.b16 %v921
      %v923 = vunpack.c.h.b16 %v921
      %v924 = vunpack.c.l.b16 0
      %v925 = vunpack.c.h.b16 0
      %vm926 = vcmp.ne.s32.totalorder %v922, %v924
      %vm927 = vcmp.ne.s32.totalorder %v923, %v925
      %vm928 = vmpackc.low %vm927, %vm926
      %v929 = vsel %vm928, %v911, 0
      %v930 = vld [vmem:[%s2] sm:$0xf]
      %v931 = vld [vmem:[%s2 + $0x4] sm:$0xf]
      %932 = vrot.lane.b32.xlu0 %v903, 116
      %v933 = vpop.permute.xlu0 %932
      %934 = vrot.lane.b32.xlu0 %v903, 4
      %v935 = vpop.permute.xlu0 %934
      %vm936 = vcmask 31744
      %v939 = vsel %vm936, %v933, %v935
      %v941 = vsel %vm913, 1, 0
      %vm942 = vcmp.eq.s32.totalorder %v941, 1
      %vm943 = vmpackc.low %vm942, %vm942
      %v944 = vsel %vm943, 65537, 0
      %v945 = vperm.slane %v944, 0
      %v946 = vunpack.c.l.b16 %v945
      %v947 = vunpack.c.h.b16 %v945
      %v948 = vunpack.c.l.b16 0
      %v949 = vunpack.c.h.b16 0
      %vm950 = vcmp.ne.s32.totalorder %v946, %v948
      %vm951 = vcmp.ne.s32.totalorder %v947, %v949
      %vm952 = vmpackc.low %vm951, %vm950
      %v953 = vsel %vm952, %v939, 0
      %s954 = scalar_lea.vmem %s2, 8
      %v955 = vld [vmem:[%s954] sm:$0xf]
      %v956 = vld [vmem:[%s954 + $0x4] sm:$0xf]
      %v959 = vunpack.c.l.b16 %v955
      %v960 = vunpack.c.l.b16 %v956
      %v961 = vpack.c.b16 %v960, %v959
      %v963 = vsel %vm701, %v961, 0
      %965 = vmatpush.bf16.msra.mxu0 0
      %966 = vmatpush.bf16.msra.mxu0 0
      %967 = vmatpush.bf16.msra.mxu0 0
      %968 = vmatpush.bf16.msra.mxu0 0
      %969 = vmatpush.bf16.msra.mxu0 0
      %970 = vmatpush.bf16.msra.mxu0 0
      %971 = vmatpush.bf16.msra.mxu0 0
      %972 = vmatpush.bf16.msra.mxu0 %v953
      %973 = vmatmul.bf16.gmra.mxu0 %v963
      %v974 = vpop.f32.mrf.mxu0
      %v975 = vadd.f32 0.0, %v974
      %v976 = vpop.f32.mrf.mxu0
      %v977 = vadd.f32 0.0, %v976
      %978 = vdwg.mxu0
      %v981 = vunpack.c.l.b16 %v930
      %v982 = vunpack.c.l.b16 %v931
      %v983 = vpack.c.b16 %v982, %v981
      %v985 = vsel %vm701, %v983, 0
      %987 = vmatpush.bf16.msra.mxu0 0
      %988 = vmatpush.bf16.msra.mxu0 0
      %989 = vmatpush.bf16.msra.mxu0 0
      %990 = vmatpush.bf16.msra.mxu0 0
      %991 = vmatpush.bf16.msra.mxu0 0
      %992 = vmatpush.bf16.msra.mxu0 0
      %993 = vmatpush.bf16.msra.mxu0 0
      %994 = vmatpush.bf16.msra.mxu0 %v929
      %995 = vmatmul.bf16.gmra.mxu0 %v985
      %v996 = vpop.f32.mrf.mxu0
      %v997 = vadd.f32 %v975, %v996
      %v998 = vpop.f32.mrf.mxu0
      %v999 = vadd.f32 %v977, %v998
      %1000 = vdwg.mxu0
      %1001 = vrot.lane.b32.xlu0 %v903, 115
      %v1002 = vpop.permute.xlu0 %1001
      %1003 = vrot.lane.b32.xlu0 %v903, 3
      %v1004 = vpop.permute.xlu0 %1003
      %vm1005 = vcmask 23552
      %v1008 = vsel %vm1005, %v1002, %v1004
      %vm1010 = vcmp.le.s32.totalorder %v898, 2
      %vm1011 = vmand %vm913, %vm1010
      %v1012 = vsel %vm1011, 1, 0
      %v1013 = vperm.slane %v1012, 0
      %vm1014 = vcmp.eq.s32.totalorder %v1013, 1
      %vm1015 = vmpackc.low %vm1014, %vm1014
      %v1016 = vsel %vm1015, 65537, 0
      %v1017 = vperm.slane %v1016, 0
      %v1018 = vunpack.c.l.b16 %v1017
      %v1019 = vunpack.c.h.b16 %v1017
      %v1020 = vunpack.c.l.b16 0
      %v1021 = vunpack.c.h.b16 0
      %vm1022 = vcmp.ne.s32.totalorder %v1018, %v1020
      %vm1023 = vcmp.ne.s32.totalorder %v1019, %v1021
      %vm1024 = vmpackc.low %vm1023, %vm1022
      %v1025 = vsel %vm1024, %v1008, 0
      %s1026 = scalar_lea.vmem %s2, 16
      %v1027 = vld [vmem:[%s1026] sm:$0xf]
      %v1028 = vld [vmem:[%s1026 + $0x4] sm:$0xf]
      %v1031 = vunpack.c.l.b16 %v1027
      %v1032 = vunpack.c.l.b16 %v1028
      %v1033 = vpack.c.b16 %v1032, %v1031
      %v1035 = vsel %vm701, %v1033, 0
      %1037 = vmatpush.bf16.msra.mxu0 0
      %1038 = vmatpush.bf16.msra.mxu0 0
      %1039 = vmatpush.bf16.msra.mxu0 0
      %1040 = vmatpush.bf16.msra.mxu0 0
      %1041 = vmatpush.bf16.msra.mxu0 0
      %1042 = vmatpush.bf16.msra.mxu0 0
      %1043 = vmatpush.bf16.msra.mxu0 0
      %1044 = vmatpush.bf16.msra.mxu0 %v1025
      %1045 = vmatmul.bf16.gmra.mxu0 %v1035
      %v1046 = vpop.f32.mrf.mxu0
      %v1047 = vadd.f32 0.0, %v1046
      %v1048 = vpop.f32.mrf.mxu0
      %v1049 = vadd.f32 0.0, %v1048
      %1050 = vdwg.mxu0
      %v1051 = vadd.f32 %v997, %v1047
      %v1052 = vadd.f32 %v999, %v1049
      %1053 = vrot.lane.b32.xlu0 %v903, 113
      %v1054 = vpop.permute.xlu0 %1053
      %1055 = vrot.lane.b32.xlu0 %v903, 1
      %v1056 = vpop.permute.xlu0 %1055
      %v1059 = vsel %vm740, %v1054, %v1056
      %v1061 = vsel %vm914, 1, 0
      %v1062 = vperm.slane %v1061, 0
      %vm1063 = vcmp.eq.s32.totalorder %v1062, 1
      %vm1064 = vmpackc.low %vm1063, %vm1063
      %v1065 = vsel %vm1064, 65537, 0
      %v1066 = vperm.slane %v1065, 0
      %v1067 = vunpack.c.l.b16 %v1066
      %v1068 = vunpack.c.h.b16 %v1066
      %v1069 = vunpack.c.l.b16 0
      %v1070 = vunpack.c.h.b16 0
      %vm1071 = vcmp.ne.s32.totalorder %v1067, %v1069
      %vm1072 = vcmp.ne.s32.totalorder %v1068, %v1070
      %vm1073 = vmpackc.low %vm1072, %vm1071
      %v1074 = vsel %vm1073, %v1059, 0
      %s1075 = scalar_lea.vmem %s2, 24
      %v1076 = vld [vmem:[%s1075] sm:$0xf]
      %v1077 = vld [vmem:[%s1075 + $0x4] sm:$0xf]
      %v1080 = vunpack.c.l.b16 %v1076
      %v1081 = vunpack.c.l.b16 %v1077
      %v1082 = vpack.c.b16 %v1081, %v1080
      %v1084 = vsel %vm701, %v1082, 0
      %1086 = vmatpush.bf16.msra.mxu0 0
      %1087 = vmatpush.bf16.msra.mxu0 0
      %1088 = vmatpush.bf16.msra.mxu0 0
      %1089 = vmatpush.bf16.msra.mxu0 0
      %1090 = vmatpush.bf16.msra.mxu0 0
      %1091 = vmatpush.bf16.msra.mxu0 0
      %1092 = vmatpush.bf16.msra.mxu0 0
      %1093 = vmatpush.bf16.msra.mxu0 %v1074
      %1094 = vmatmul.bf16.gmra.mxu0 %v1084
      %v1095 = vpop.f32.mrf.mxu0
      %v1096 = vadd.f32 0.0, %v1095
      %v1097 = vpop.f32.mrf.mxu0
      %v1098 = vadd.f32 0.0, %v1097
      %1099 = vdwg.mxu0
      %v1100 = vadd.f32 %v1051, %v1096
      %v1101 = vadd.f32 %v1052, %v1098
      %s1102 = scalar_lea.vmem %s2, 32
      %v1103 = vld [vmem:[%s1102] sm:$0xf]
      %v1104 = vld [vmem:[%s1102 + $0x4] sm:$0xf]
      %v1107 = vunpack.c.l.b16 %v1103
      %v1108 = vunpack.c.l.b16 %v1104
      %v1109 = vpack.c.b16 %v1108, %v1107
      %v1112 = vsel %vm701, %v1109, 0
      %1114 = vmatpush.bf16.msra.mxu0 0
      %1115 = vmatpush.bf16.msra.mxu0 0
      %1116 = vmatpush.bf16.msra.mxu0 0
      %1117 = vmatpush.bf16.msra.mxu0 0
      %1118 = vmatpush.bf16.msra.mxu0 0
      %1119 = vmatpush.bf16.msra.mxu0 0
      %1120 = vmatpush.bf16.msra.mxu0 0
      %1121 = vmatpush.bf16.msra.mxu0 %v903
      %1122 = vmatmul.bf16.gmra.mxu0 %v1112
      %v1123 = vpop.f32.mrf.mxu0
      %v1124 = vadd.f32 0.0, %v1123
      %v1125 = vpop.f32.mrf.mxu0
      %v1126 = vadd.f32 0.0, %v1125
      %1127 = vdwg.mxu0
      %v1128 = vadd.f32 %v1100, %v1124
      %v1129 = vadd.f32 %v1101, %v1126
      %1130 = vrot.lane.b32.xlu0 %v903, 127
      %v1131 = vpop.permute.xlu0 %1130
      %1132 = vrot.lane.b32.xlu0 %v903, 15
      %v1133 = vpop.permute.xlu0 %1132
      %vm1134 = vcmask 121856
      %v1137 = vsel %vm1134, %v1131, %v1133
      %v1139 = vsel %vm1010, 1, 0
      %v1140 = vperm.slane %v1139, 0
      %vm1141 = vcmp.eq.s32.totalorder %v1140, 1
      %vm1142 = vmpackc.low %vm1141, %vm1141
      %v1143 = vsel %vm1142, 65537, 0
      %v1144 = vperm.slane %v1143, 0
      %v1145 = vunpack.c.l.b16 %v1144
      %v1146 = vunpack.c.h.b16 %v1144
      %v1147 = vunpack.c.l.b16 0
      %v1148 = vunpack.c.h.b16 0
      %vm1149 = vcmp.ne.s32.totalorder %v1145, %v1147
      %vm1150 = vcmp.ne.s32.totalorder %v1146, %v1148
      %vm1151 = vmpackc.low %vm1150, %vm1149
      %v1152 = vsel %vm1151, %v1137, 0
      %s1153 = scalar_lea.vmem %s2, 40
      %v1154 = vld [vmem:[%s1153] sm:$0xf]
      %v1155 = vld [vmem:[%s1153 + $0x4] sm:$0xf]
      %v1158 = vunpack.c.l.b16 %v1154
      %v1159 = vunpack.c.l.b16 %v1155
      %v1160 = vpack.c.b16 %v1159, %v1158
      %v1162 = vsel %vm701, %v1160, 0
      %1164 = vmatpush.bf16.msra.mxu0 0
      %1165 = vmatpush.bf16.msra.mxu0 0
      %1166 = vmatpush.bf16.msra.mxu0 0
      %1167 = vmatpush.bf16.msra.mxu0 0
      %1168 = vmatpush.bf16.msra.mxu0 0
      %1169 = vmatpush.bf16.msra.mxu0 0
      %1170 = vmatpush.bf16.msra.mxu0 0
      %1171 = vmatpush.bf16.msra.mxu0 %v1152
      %1172 = vmatmul.bf16.gmra.mxu0 %v1162
      %v1173 = vpop.f32.mrf.mxu0
      %v1174 = vadd.f32 0.0, %v1173
      %v1175 = vpop.f32.mrf.mxu0
      %v1176 = vadd.f32 0.0, %v1175
      %1177 = vdwg.mxu0
      %v1178 = vadd.f32 %v1128, %v1174
      %v1179 = vadd.f32 %v1129, %v1176
      %1180 = vrot.lane.b32.xlu0 %v903, 125
      %v1181 = vpop.permute.xlu0 %1180
      %1182 = vrot.lane.b32.xlu0 %v903, 13
      %v1183 = vpop.permute.xlu0 %1182
      %vm1184 = vcmask 105472
      %v1187 = vsel %vm1184, %v1181, %v1183
      %vm1189 = vcmp.lt.s32.totalorder %v897, 12
      %vm1190 = vmand %vm1189, %vm914
      %v1191 = vsel %vm1190, 1, 0
      %v1192 = vperm.slane %v1191, 0
      %vm1193 = vcmp.eq.s32.totalorder %v1192, 1
      %vm1194 = vmpackc.low %vm1193, %vm1193
      %v1195 = vsel %vm1194, 65537, 0
      %v1196 = vperm.slane %v1195, 0
      %v1197 = vunpack.c.l.b16 %v1196
      %v1198 = vunpack.c.h.b16 %v1196
      %v1199 = vunpack.c.l.b16 0
      %v1200 = vunpack.c.h.b16 0
      %vm1201 = vcmp.ne.s32.totalorder %v1197, %v1199
      %vm1202 = vcmp.ne.s32.totalorder %v1198, %v1200
      %vm1203 = vmpackc.low %vm1202, %vm1201
      %v1204 = vsel %vm1203, %v1187, 0
      %s1205 = scalar_lea.vmem %s2, 48
      %v1206 = vld [vmem:[%s1205] sm:$0xf]
      %v1207 = vld [vmem:[%s1205 + $0x4] sm:$0xf]
      %v1210 = vunpack.c.l.b16 %v1206
      %v1211 = vunpack.c.l.b16 %v1207
      %v1212 = vpack.c.b16 %v1211, %v1210
      %v1214 = vsel %vm701, %v1212, 0
      %1216 = vmatpush.bf16.msra.mxu0 0
      %1217 = vmatpush.bf16.msra.mxu0 0
      %1218 = vmatpush.bf16.msra.mxu0 0
      %1219 = vmatpush.bf16.msra.mxu0 0
      %1220 = vmatpush.bf16.msra.mxu0 0
      %1221 = vmatpush.bf16.msra.mxu0 0
      %1222 = vmatpush.bf16.msra.mxu0 0
      %1223 = vmatpush.bf16.msra.mxu0 %v1204
      %1224 = vmatmul.bf16.gmra.mxu0 %v1214
      %v1225 = vpop.f32.mrf.mxu0
      %v1226 = vadd.f32 0.0, %v1225
      %v1227 = vpop.f32.mrf.mxu0
      %v1228 = vadd.f32 0.0, %v1227
      %1229 = vdwg.mxu0
      %v1230 = vadd.f32 %v1178, %v1226
      %v1231 = vadd.f32 %v1179, %v1228
      %1232 = vrot.lane.b32.xlu0 %v903, 124
      %v1233 = vpop.permute.xlu0 %1232
      %1234 = vrot.lane.b32.xlu0 %v903, 12
      %v1235 = vpop.permute.xlu0 %1234
      %vm1236 = vcmask 97280
      %v1239 = vsel %vm1236, %v1233, %v1235
      %v1241 = vsel %vm1189, 1, 0
      %vm1242 = vcmp.eq.s32.totalorder %v1241, 1
      %vm1243 = vmpackc.low %vm1242, %vm1242
      %v1244 = vsel %vm1243, 65537, 0
      %v1245 = vperm.slane %v1244, 0
      %v1246 = vunpack.c.l.b16 %v1245
      %v1247 = vunpack.c.h.b16 %v1245
      %v1248 = vunpack.c.l.b16 0
      %v1249 = vunpack.c.h.b16 0
      %vm1250 = vcmp.ne.s32.totalorder %v1246, %v1248
      %vm1251 = vcmp.ne.s32.totalorder %v1247, %v1249
      %vm1252 = vmpackc.low %vm1251, %vm1250
      %v1253 = vsel %vm1252, %v1239, 0
      %s1254 = scalar_lea.vmem %s2, 56
      %v1255 = vld [vmem:[%s1254] sm:$0xf]
      %v1256 = vld [vmem:[%s1254 + $0x4] sm:$0xf]
      %v1259 = vunpack.c.l.b16 %v1255
      %v1260 = vunpack.c.l.b16 %v1256
      %v1261 = vpack.c.b16 %v1260, %v1259
      %v1263 = vsel %vm701, %v1261, 0
      %1265 = vmatpush.bf16.msra.mxu0 0
      %1266 = vmatpush.bf16.msra.mxu0 0
      %1267 = vmatpush.bf16.msra.mxu0 0
      %1268 = vmatpush.bf16.msra.mxu0 0
      %1269 = vmatpush.bf16.msra.mxu0 0
      %1270 = vmatpush.bf16.msra.mxu0 0
      %1271 = vmatpush.bf16.msra.mxu0 0
      %1272 = vmatpush.bf16.msra.mxu0 %v1253
      %1273 = vmatmul.bf16.gmra.mxu0 %v1263
      %v1274 = vpop.f32.mrf.mxu0
      %v1275 = vadd.f32 0.0, %v1274
      %v1276 = vpop.f32.mrf.mxu0
      %v1277 = vadd.f32 0.0, %v1276
      %1278 = vdwg.mxu0
      %v1279 = vadd.f32 %v1230, %v1275
      %v1280 = vadd.f32 %v1231, %v1277
      %1281 = vrot.lane.b32.xlu0 %v903, 123
      %v1282 = vpop.permute.xlu0 %1281
      %1283 = vrot.lane.b32.xlu0 %v903, 11
      %v1284 = vpop.permute.xlu0 %1283
      %vm1285 = vcmask 89088
      %v1288 = vsel %vm1285, %v1282, %v1284
      %vm1290 = vmand %vm1189, %vm1010
      %v1291 = vsel %vm1290, 1, 0
      %v1292 = vperm.slane %v1291, 0
      %vm1293 = vcmp.eq.s32.totalorder %v1292, 1
      %vm1294 = vmpackc.low %vm1293, %vm1293
      %v1295 = vsel %vm1294, 65537, 0
      %v1296 = vperm.slane %v1295, 0
      %v1297 = vunpack.c.l.b16 %v1296
      %v1298 = vunpack.c.h.b16 %v1296
      %v1299 = vunpack.c.l.b16 0
      %v1300 = vunpack.c.h.b16 0
      %vm1301 = vcmp.ne.s32.totalorder %v1297, %v1299
      %vm1302 = vcmp.ne.s32.totalorder %v1298, %v1300
      %vm1303 = vmpackc.low %vm1302, %vm1301
      %v1304 = vsel %vm1303, %v1288, 0
      %s1305 = scalar_lea.vmem %s2, 64
      %v1306 = vld [vmem:[%s1305] sm:$0xf]
      %v1307 = vld [vmem:[%s1305 + $0x4] sm:$0xf]
      %v1310 = vunpack.c.l.b16 %v1306
      %v1311 = vunpack.c.l.b16 %v1307
      %v1312 = vpack.c.b16 %v1311, %v1310
      %v1314 = vsel %vm701, %v1312, 0
      %1316 = vmatpush.bf16.msra.mxu0 0
      %1317 = vmatpush.bf16.msra.mxu0 0
      %1318 = vmatpush.bf16.msra.mxu0 0
      %1319 = vmatpush.bf16.msra.mxu0 0
      %1320 = vmatpush.bf16.msra.mxu0 0
      %1321 = vmatpush.bf16.msra.mxu0 0
      %1322 = vmatpush.bf16.msra.mxu0 0
      %1323 = vmatpush.bf16.msra.mxu0 %v1304
      %1324 = vmatmul.bf16.gmra.mxu0 %v1314
      %v1325 = vpop.f32.mrf.mxu0
      %v1326 = vadd.f32 0.0, %v1325
      %v1327 = vpop.f32.mrf.mxu0
      %v1328 = vadd.f32 0.0, %v1327
      %1329 = vdwg.mxu0
      %v1330 = vadd.f32 %v1279, %v1326
      %v1331 = vadd.f32 %v1280, %v1328
      %v1332 = vsel %vm701, %v1330, 0.0
      %1333 = vadd.xlane.f32.xlu0 %v1332
      %v1334 = vpop.xlane.xlu0 %1333
      %v1335 = vsel %vm701, %v1331, 0.0
      %1336 = vadd.xlane.f32.xlu0 %v1335
      %v1337 = vpop.xlane.xlu0 %1336
      %v1338 = vmul.f32 %v1330, %v1330
      %v1339 = vmul.f32 %v1331, %v1331
      %v1340 = vsel %vm701, %v1338, 0.0
      %1341 = vadd.xlane.f32.xlu0 %v1340
      %v1342 = vpop.xlane.xlu0 %1341
      %v1343 = vsel %vm701, %v1339, 0.0
      %1344 = vadd.xlane.f32.xlu0 %v1343
      %v1345 = vpop.xlane.xlu0 %1344
      %v1346 = vadd.f32 %v1334, %v716
      %v1347 = vadd.f32 %v1337, %v717
      %v1348 = vmul.f32 %v720, %v1334
      %v1349 = vmul.f32 %v721, %v1337
      %v1350 = vadd.f32 %v1342, %v1348
      %v1351 = vadd.f32 %v1345, %v1349
      %v1352 = vadd.f32 %v1350, %v728
      %v1353 = vadd.f32 %v1351, %v729
      %1356 = vrot.lane.b32.xlu0 %v1346, 125
      %v1357 = vpop.permute.xlu0 %1356
      %1358 = vrot.lane.b32.xlu0 %v1347, 125
      %v1359 = vpop.permute.xlu0 %1358
      %1364 = vrot.lane.b32.xlu0 %v1352, 126
      %v1365 = vpop.permute.xlu0 %1364
      %1366 = vrot.lane.b32.xlu0 %v1353, 126
      %v1367 = vpop.permute.xlu0 %1366
      %v1370 = vsel %vm740, %v1357, %v1365
      %v1371 = vsel %vm740, %v1359, %v1367
      %1372 = vmatpush.msra.mxu0 0.0
      %1373 = vmatpush.msra.mxu0 0.0
      %1374 = vmatpush.msra.mxu0 0.0
      %1375 = vmatpush.msra.mxu0 0.0
      %1376 = vmatpush.msra.mxu0 0.0
      %1377 = vmatpush.msra.mxu0 0.0
      %1378 = vmatpush.msra.mxu0 0.0
      %1379 = vmatpush.msra.mxu0 0.0
      %1380 = vmatpush.msra.mxu0 0.0
      %1381 = vmatpush.msra.mxu0 0.0
      %1382 = vmatpush.msra.mxu0 0.0
      %1383 = vmatpush.msra.mxu0 0.0
      %1384 = vmatpush.msra.mxu0 0.0
      %1385 = vmatpush.msra.mxu0 0.0
      %1386 = vmatpush.msra.mxu0 %v1371
      %1387 = vmatpush.msra.mxu0 %v1370
      %1388 = vmatmul.f32.gmra.mxu0 %v744
      %v1389 = vpop.f32.mrf.mxu0
      %v1390 = vadd.f32 0.0, %v1389
      %1391 = vmatmul.f32.gmra.mxu0 %v747
      %v1392 = vpop.f32.mrf.mxu0
      %v1393 = vadd.f32 0.0, %v1392
      %1394 = vdwg.mxu0
      %v1395 = vmul.f32 %v1390, %v1390
      %v1396 = vmul.f32 %v1393, %v1393
      %1399 = vrot.lane.b32.xlu0 %v1395, 1
      %v1400 = vpop.permute.xlu0 %1399
      %1401 = vrot.lane.b32.xlu0 %v1396, 1
      %v1402 = vpop.permute.xlu0 %1401
      %v1405 = vsub.f32 %v1390, %v1400
      %v1406 = vsub.f32 %v1393, %v1402
      %v1407 = vmax.f32 %v1405, 0.0
      %v1408 = vmax.f32 %v1406, 0.0
      %v1409 = vadd.f32 %v1407, 1e-05
      %v1410 = vadd.f32 %v1408, 1e-05
      %v1411 = vrsqrt.pop %v1409
      %v1412 = vmul.f32 %v1411, %v1409
      %v1413 = vmul.f32 %v1412, %v1411
      %v1414 = vmul.f32 0.5, %v1413
      %v1415 = vsub.f32 1.5, %v1414
      %v1416 = vmul.f32 %v1411, %v1415
      %vm1417 = vweird.f32 %v1409
      %vm1418 = vweird.f32 %v1411
      %vm1419 = vmor %vm1417, %vm1418
      %v1420 = vsel %vm1419, %v1411, %v1416
      %v1421 = vrsqrt.pop %v1410
      %v1422 = vmul.f32 %v1421, %v1410
      %v1423 = vmul.f32 %v1422, %v1421
      %v1424 = vmul.f32 0.5, %v1423
      %v1425 = vsub.f32 1.5, %v1424
      %v1426 = vmul.f32 %v1421, %v1425
      %vm1427 = vweird.f32 %v1410
      %vm1428 = vweird.f32 %v1421
      %vm1429 = vmor %vm1427, %vm1428
      %v1430 = vsel %vm1429, %v1421, %v1426
      %1433 = vrot.lane.b32.xlu0 %v1420, 3
      %v1434 = vpop.permute.xlu0 %1433
      %1435 = vrot.lane.b32.xlu0 %v1430, 3
      %v1436 = vpop.permute.xlu0 %1435
      %v1439 = vmul.f32 %v699, %v1434
      %v1440 = vmul.f32 %v700, %v1436
      %1443 = vrot.lane.b32.xlu0 %v1390, 3
      %v1444 = vpop.permute.xlu0 %1443
      %1445 = vrot.lane.b32.xlu0 %v1393, 3
      %v1446 = vpop.permute.xlu0 %1445
      %v1449 = vsub.f32 %v699, %v1444
      %v1450 = vsub.f32 %v700, %v1446
      %1453 = vrot.lane.b32.xlu0 %v1439, 127
      %v1454 = vpop.permute.xlu0 %1453
      %1455 = vrot.lane.b32.xlu0 %v1440, 127
      %v1456 = vpop.permute.xlu0 %1455
      %v1459 = vmul.f32 %v1449, %v1454
      %v1460 = vmul.f32 %v1450, %v1456
      %1463 = vrot.lane.b32.xlu0 %v1459, 2
      %v1464 = vpop.permute.xlu0 %1463
      %1465 = vrot.lane.b32.xlu0 %v1460, 2
      %v1466 = vpop.permute.xlu0 %1465
      %v1469 = vadd.f32 %v699, %v1464
      %v1470 = vadd.f32 %v700, %v1466
      %1471 = vset.pattern.permute.xlu0 4
      %1472 = vperm.xlu0 %1471, %v1439
      %v1473 = vpop.permute.xlu0 %1472
      %1475 = vset.pattern.permute.xlu0 4
      %1476 = vperm.xlu0 %1475, %v1440
      %v1477 = vpop.permute.xlu0 %1476
      %v1479 = vmul.f32 %v1330, %v1473
      %v1480 = vmul.f32 %v1331, %v1477
      %1482 = vset.pattern.permute.xlu0 5
      %1483 = vperm.xlu0 %1482, %v1469
      %v1484 = vpop.permute.xlu0 %1483
      %1487 = vset.pattern.permute.xlu0 5
      %1488 = vperm.xlu0 %1487, %v1470
      %v1489 = vpop.permute.xlu0 %1488
      %v1491 = vadd.f32 %v1479, %v1484
      %v1492 = vadd.f32 %v1480, %v1489
      %v1493 = vxor.u32 %v1491, 2147483648
      %v1494 = vxor.u32 %v1492, 2147483648
      %v1495 = vmul.f32 %v1493, 1.442695
      %v1496 = vpow.pop %v1495
      %v1497 = vmul.f32 %v1494, 1.442695
      %v1498 = vpow.pop %v1497
      %v1499 = vadd.f32 %v1496, 1.0
      %v1500 = vadd.f32 %v1498, 1.0
      %v1501 = vrcp.pop %v1499
      %v1502 = vmul.f32 %v1499, %v1501
      %v1503 = vsub.f32 1.0, %v1502
      %v1504 = vmul.f32 %v1501, %v1503
      %v1505 = vadd.f32 %v1501, %v1504
      %vm1506 = vweird.f32 %v1499
      %vm1507 = vweird.f32 %v1501
      %vm1508 = vmor %vm1506, %vm1507
      %v1509 = vsel %vm1508, %v1501, %v1505
      %v1510 = vand.u32 2147483647, %v1499
      %vm1511 = vcmp.eq.f32.partialorder %v1510, 8.507059e+37
      %v1512 = vand.u32 %v1499, 2147483648
      %v1513 = vor.u32 1.1754944e-38, %v1512
      %v1514 = vsel %vm1511, %v1513, %v1509
      %v1515 = vmul.f32 1.0, %v1514
      %v1516 = vrcp.pop %v1500
      %v1517 = vmul.f32 %v1500, %v1516
      %v1518 = vsub.f32 1.0, %v1517
      %v1519 = vmul.f32 %v1516, %v1518
      %v1520 = vadd.f32 %v1516, %v1519
      %vm1521 = vweird.f32 %v1500
      %vm1522 = vweird.f32 %v1516
      %vm1523 = vmor %vm1521, %vm1522
      %v1524 = vsel %vm1523, %v1516, %v1520
      %v1525 = vand.u32 2147483647, %v1500
      %vm1526 = vcmp.eq.f32.partialorder %v1525, 8.507059e+37
      %v1527 = vand.u32 %v1500, 2147483648
      %v1528 = vor.u32 1.1754944e-38, %v1527
      %v1529 = vsel %vm1526, %v1528, %v1524
      %v1530 = vmul.f32 1.0, %v1529
      %v1531 = vmul.f32 %v1491, %v1515
      %v1532 = vmul.f32 %v1492, %v1530
      %v1533 = vadd.f32 %v1531, %v695
      %v1534 = vadd.f32 %v1532, %v696
      %1536 = vset.pattern.permute.xlu0 6
      %1537 = vperm.xlu0 %1536, %v699
      %v1538 = vpop.permute.xlu0 %1537
      %1541 = vset.pattern.permute.xlu0 6
      %1542 = vperm.xlu0 %1541, %v700
      %v1543 = vpop.permute.xlu0 %1542
      %v1545 = vadd.f32 %v1533, %v1538
      %v1546 = vadd.f32 %v1534, %v1543
      %v1547 = vpack.c.bf16 %v1545, %v1545
      %v1548 = vpack.c.bf16 %v1546, %v1546
      %vm1549 = vcmask 125952
      %1550 = vst.msk [vmem:[%s251] sm:$0xf] %vm1549, %v1547
      %1551 = vst.msk [vmem:[%s251 + $0x4] sm:$0xf] %vm1549, %v1548
      %p1552 = scmp.lt.s32.totalorder %s17, 1
      %s1553 = scalar_select %p1552, %s17, 1
      %s1554 = smul.addr %s1553, 2
      %s1555 = smul.addr %s1554, 4
      %s1556 = scalar_lea.vmem %s6, %s1555
      // Predicated region
      $region45: #{extractor_forward.3} parent=43 // pred_check
        %p1557 = pneg %p166
      $region46: #{extractor_forward.3} parent=43 // pred_check_branch
        %1559 = sbr.rel (%p1557) target = $region48
      $region47: #{extractor_forward.3} parent=43 // pred_region
        _
      $region48: #{extractor_forward.3} parent=43 // pred_fallthru
        _
    $region44: #{extractor_forward.3} parent=5 // pred_fallthru
      _
    %p1560 = scmp.le.s32.totalorder 2, %s12
    // Predicated region
    $region49: #{extractor_forward.3} parent=5 // pred_check
      %p1561 = pneg %p1560
    $region50: #{extractor_forward.3} parent=5 // pred_check_branch
      %1563 = sbr.rel (%p1561) target = $region52
    $region51: #{extractor_forward.3} parent=5 // pred_region
      %s1564 = ssub.s32 %s12, 2
      // Predicated region
      $region53: #{extractor_forward.3} parent=51 // pred_check
        %p1565 = pneg %p172
      $region54: #{extractor_forward.3} parent=51 // pred_check_branch
        %1567 = sbr.rel (%p1565) target = $region56
      $region55: #{extractor_forward.3} parent=51 // pred_region
        %p1568 = scmp.lt.s32.totalorder %s18, 1
        %s1569 = scalar_select %p1568, %s18, 1
        %s1570 = smul.addr %s1569, 2
        %s1571 = smul.addr %s1570, 4
        %s1572 = scalar_lea.vmem %s6, %s1571
      $region56: #{extractor_forward.3} parent=51 // pred_fallthru
        _
    $region52: #{extractor_forward.3} parent=5 // pred_fallthru
      _
  $region6: #{extractor_forward.3} parent=0 // loop_footer
    %s16 = sadd.s32 1, %s12
  $region7: #{extractor_forward.3} parent=0 // loop_footer_branch
    %11 = sbr.rel target = $region3
  $region8: #{extractor_forward.3} parent=0 // loop_exit
    _

</llo_original>
